<compile_context>
chip_gen: v7x
topology: tpu7x:2x2x1
jax: 0.10.0
libtpu: 0.0.40
codegen_flags: <defaults>
</compile_context>

<pallas_src>
import math
from functools import partial

import jax
import jax.numpy as jnp
from jax import lax
from jax.experimental import pallas as pl
from jax.experimental.pallas import tpu as pltpu


def _round_up(x, m):
    return ((x + m - 1) // m) * m


def _on_v7x():
    """v7x has 2 TensorCores per chip -> request a real core split for the
    direction axis there; other generations (1 TC) keep plain PARALLEL."""
    try:
        kind = jax.devices()[0].device_kind.lower()
    except Exception:
        kind = ""
    return "v7" in kind


def _bidir_lstm_kernel(tmax_ref, x_ref, len_ref, wih_ref, whh_ref, b_ref,
                       out_ref, hc_ref, xp_ref, h_ref, c_ref):
    """Grid = (direction, time-chunk). program_id(0): 0=fwd, 1=bwd.

    tmax_ref: (1,)            int32 SMEM  max(valid length)   [scalar prefetch]
    x_ref   : (Tt, Bp, E)     bf16  time-major embedded input chunk
    len_ref : (Bp, 1)         int32 valid lengths (0 for padded batch rows)
    wih_ref : (E, 4*Hp)       bf16  this direction's input->gate weights (i,f,o,g)
    whh_ref : (Hp, 4*Hp)      bf16  this direction's hidden->gate weights
    b_ref   : (1, 4*Hp)       f32   folded bias (b_ih + b_hh)
    out_ref : (Tt, Bp, Hp)    bf16  per-direction hidden outputs (0 at padded steps)
    hc_ref  : (2, Bp, Hp)     f32   [h_final, c_final] (revisited block, per dir)
    xp_ref  : (Tt, Bp, 4*Hp)  f32   scratch: this chunk's input projection
    h_ref   : (Bp, Hp)        f32   scratch: carried hidden state
    c_ref   : (Bp, Hp)        f32   scratch: carried cell state
    """
    Tt, Bp, E = x_ref.shape
    Hp = whh_ref.shape[0]
    d = pl.program_id(0)
    k = pl.program_id(1)
    nk = pl.num_programs(1)

    # global time offset of this chunk (backward walks chunks last -> first)
    blk = (1 - d) * k + d * (nk - 1 - k)
    t_base = blk * Tt
    tmax = tmax_ref[0]

    @pl.when(k == 0)
    def _init():
        h_ref[...] = jnp.zeros(h_ref.shape, h_ref.dtype)
        c_ref[...] = jnp.zeros(c_ref.shape, c_ref.dtype)

    active = t_base < tmax  # chunk contains at least one step < max(lengths)

    @pl.when(active)
    def _compute():
        # ---- per-chunk input projection: one MXU matmul for the whole chunk ----
        x2d = x_ref[...].reshape(Tt * Bp, E)                                # bf16
        xp = jnp.dot(x2d, wih_ref[...], preferred_element_type=jnp.float32)
        xp = xp + b_ref[...]                                                # folded bias
        xp_ref[...] = xp.reshape(Tt, Bp, 4 * Hp)

        whh = whh_ref[...]                                                  # (Hp, 4Hp) bf16
        # hoisted mask operand (no per-step broadcast_in_dim)
        lens_bh = jnp.broadcast_to(len_ref[...], (Bp, Hp))                  # int32

        def make_step(reverse):
            def step(s, carry):
                h, c = carry
                t = (Tt - 1 - s) if reverse else s        # static direction -> affine index
                gates = xp_ref[t] + jnp.dot(h.astype(jnp.bfloat16), whh,
                                            preferred_element_type=jnp.float32)
                # gate layout (i, f, o, g): one contiguous sigmoid slab + one tanh slab
                sig = jax.nn.sigmoid(gates[:, : 3 * Hp])
                i_g = sig[:, 0 * Hp: 1 * Hp]
                f_g = sig[:, 1 * Hp: 2 * Hp]
                o_g = sig[:, 2 * Hp: 3 * Hp]
                g_g = jnp.tanh(gates[:, 3 * Hp:])
                c_new = f_g * c + i_g * g_g
                h_new = o_g * jnp.tanh(c_new)
                # packed-sequence semantics: only advance state while t < len[b];
                # padded positions emit 0 (pad_packed_sequence behaviour).
                valid = (t_base + t) < lens_bh
                h = jnp.where(valid, h_new, h)
                c = jnp.where(valid, c_new, c)
                out_ref[t] = jnp.where(valid, h_new, 0.0).astype(out_ref.dtype)
                return h, c
            return step

        unroll = True if Tt <= 32 else 4

        def run(reverse):
            h, c = lax.fori_loop(0, Tt, make_step(reverse),
                                 (h_ref[...], c_ref[...]), unroll=unroll)
            h_ref[...] = h
            c_ref[...] = c

        @pl.when(d == 0)
        def _fwd():
            run(False)

        @pl.when(d == 1)
        def _bwd():
            run(True)

    @pl.when(jnp.logical_not(active))
    def _skip():
        # chunk entirely past max(lengths): output is zero, state unchanged
        out_ref[...] = jnp.zeros(out_ref.shape, out_ref.dtype)

    # small copy each chunk; the hc block index is constant across k, so only the
    # value present at the direction's last chunk is written back to HBM.
    hc_ref[0] = h_ref[...]
    hc_ref[1] = c_ref[...]


def bidir_lstm_pallas(x_tbe, lengths, params, *, time_chunk=64):
    """x_tbe: (T, B, E) float, lengths: (B,) int.

    Returns:
      out: (2, Tpad, Bp, Hp) bf16  per-direction hidden sequences (zero padded)
      hc : (2, 2, Bp, Hp)    f32   [direction, (h,c), batch, hidden]
    """
    T, B, E = x_tbe.shape
    Hp = params["whh"].shape[1]
    Bp = max(8, _round_up(B, 8))
    Tt = min(time_chunk, T)
    Tpad = _round_up(T, Tt)
    nk = Tpad // Tt

    # pad batch to a sublane multiple (len 0 for padded rows) and time to a chunk
    # multiple (masked out by the length check).
    x_p = jnp.zeros((Tpad, Bp, E), jnp.bfloat16).at[:T, :B, :].set(
        x_tbe.astype(jnp.bfloat16))
    lens_p = jnp.zeros((Bp, 1), jnp.int32).at[:B, 0].set(lengths.astype(jnp.int32))
    tmax = jnp.max(lengths).astype(jnp.int32).reshape(1)       # scalar prefetch (SMEM)

    def blk(d, k):
        return (1 - d) * k + d * (nk - 1 - k)

    grid_spec = pltpu.PrefetchScalarGridSpec(
        num_scalar_prefetch=1,                                  # tmax
        grid=(2, nk),                                           # (direction, time-chunk)
        in_specs=[
            pl.BlockSpec((Tt, Bp, E), lambda d, k, tm: (blk(d, k), 0, 0)),   # x chunk
            pl.BlockSpec((Bp, 1), lambda d, k, tm: (0, 0)),                  # lengths
            pl.BlockSpec((None, E, 4 * Hp), lambda d, k, tm: (d, 0, 0)),     # wih[d]
            pl.BlockSpec((None, Hp, 4 * Hp), lambda d, k, tm: (d, 0, 0)),    # whh[d]
            pl.BlockSpec((None, 1, 4 * Hp), lambda d, k, tm: (d, 0, 0)),     # b[d]
        ],
        out_specs=(
            pl.BlockSpec((None, Tt, Bp, Hp), lambda d, k, tm: (d, blk(d, k), 0, 0)),
            pl.BlockSpec((None, 2, Bp, Hp), lambda d, k, tm: (d, 0, 0, 0)),
        ),
        scratch_shapes=[
            pltpu.VMEM((Tt, Bp, 4 * Hp), jnp.float32),   # per-chunk input projection
            pltpu.VMEM((Bp, Hp), jnp.float32),           # carried h
            pltpu.VMEM((Bp, Hp), jnp.float32),           # carried c
        ],
    )

    # generation-aware VMEM budget: size from the (chunked) working set, with
    # headroom, capped at 48 MiB so it is safe on v7x's 64 MiB as well.
    vmem_need = (
        2 * Tt * Bp * E * 2                 # x blocks (double buffered, bf16)
        + 2 * Tt * Bp * Hp * 2              # out blocks (double buffered, bf16)
        + 2 * (E * 4 * Hp * 2 + Hp * 4 * Hp * 2 + 4 * Hp * 4)   # weights + bias
        + 2 * (2 * Bp * Hp * 4)             # hc blocks
        + Tt * Bp * 4 * Hp * 4              # xp scratch (f32)
        + 2 * Bp * Hp * 4                   # h/c scratch
        + 2 * Bp * 4                        # lengths
    )
    vmem_limit = int(min(max(2 * vmem_need, 16 * 1024 * 1024), 48 * 1024 * 1024))

    dir_sem = pltpu.CORE_PARALLEL if _on_v7x() else pltpu.PARALLEL

    out, hc = pl.pallas_call(
        _bidir_lstm_kernel,
        out_shape=(
            jax.ShapeDtypeStruct((2, Tpad, Bp, Hp), jnp.bfloat16),
            jax.ShapeDtypeStruct((2, 2, Bp, Hp), jnp.float32),
        ),
        grid_spec=grid_spec,
        compiler_params=pltpu.CompilerParams(
            dimension_semantics=(dir_sem, pltpu.ARBITRARY),
            vmem_limit_bytes=vmem_limit,
        ),
    )(tmax, x_p, lens_p, params["wih"], params["whh"], params["b"])
    return out, hc


def init_params(key, vocab_size, embed_size, hidden_size):
    """Deterministic init. Embedding ~ N(0,1); LSTM weights ~ U(-1/sqrt(H), 1/sqrt(H))
    (PyTorch defaults). Weights are stored pre-transposed as (in_dim, 4*Hp) with
    gate columns ordered (i, f, o, g) and zero-padded from H to Hp=round_up(H,128);
    biases are folded (b_ih + b_hh). Loading a PyTorch state_dict would require
    permuting its (i, f, g, o) gate blocks into this layout."""
    H, E = hidden_size, embed_size
    Hp = _round_up(H, 128)
    bound = 1.0 / math.sqrt(H)
    ks = jax.random.split(key, 9)

    def uni(k, shape):
        return jax.random.uniform(k, shape, jnp.float32, -bound, bound)

    def pad_gates(w, in_dim, in_dim_p):
        # w: (in_dim, 4, H) -> zero-padded (in_dim_p, 4, Hp) -> (in_dim_p, 4*Hp)
        wp = jnp.zeros((in_dim_p, 4, Hp), jnp.float32)
        wp = wp.at[:in_dim, :, :H].set(w)
        return wp.reshape(in_dim_p, 4 * Hp)

    def make_dir(k_ih, k_hh, k_b1, k_b2):
        wih = pad_gates(uni(k_ih, (E, 4, H)), E, E).astype(jnp.bfloat16)
        whh = pad_gates(uni(k_hh, (H, 4, H)), H, Hp).astype(jnp.bfloat16)
        b = uni(k_b1, (4, H)) + uni(k_b2, (4, H))         # folded b_ih + b_hh
        b_p = jnp.zeros((1, 4, Hp), jnp.float32).at[0, :, :H].set(b)
        return wih, whh, b_p.reshape(1, 4 * Hp)

    wih_f, whh_f, b_f = make_dir(ks[1], ks[2], ks[3], ks[4])
    wih_b, whh_b, b_b = make_dir(ks[5], ks[6], ks[7], ks[8])

    return {
        "embedding": jax.random.normal(ks[0], (vocab_size, E), jnp.float32),
        "wih": jnp.stack([wih_f, wih_b], axis=0),   # (2, E, 4Hp) bf16
        "whh": jnp.stack([whh_f, whh_b], axis=0),   # (2, Hp, 4Hp) bf16
        "b":   jnp.stack([b_f, b_b], axis=0),       # (2, 1, 4Hp) f32
        "hidden_size": H,
    }


@partial(jax.jit, static_argnames=("hidden_size",))
def _sent_encoder_forward(weights, input_var, input_len, hidden_size):
    B, T = input_var.shape
    H = hidden_size

    embed = weights["embedding"][input_var]                   # (B, T, E) gather (glue)
    # TODO(synk): nn.Dropout(p=0.5) implemented as identity (eval mode); training-mode stochastic dropout omitted.
    x = jnp.transpose(embed, (1, 0, 2))                       # (T, B, E) time-major

    out, hc = bidir_lstm_pallas(x, input_len, weights)        # (2,Tpad,Bp,Hp), (2,2,Bp,Hp)

    out_f = out[0, :T, :B, :H]                                # (T, B, H) bf16
    out_b = out[1, :T, :B, :H]
    output = jnp.transpose(jnp.concatenate([out_f, out_b], -1),
                           (1, 0, 2)).astype(jnp.float32)     # (B, T, 2H)

    h = jnp.concatenate([hc[0, 0, :B, :H], hc[1, 0, :B, :H]], -1)[None]   # (1, B, 2H)
    c = jnp.concatenate([hc[0, 1, :B, :H], hc[1, 1, :B, :H]], -1)[None]   # (1, B, 2H)
    return output, (h, c)


def sent_encoder_forward(params, input_var, input_len):
    """
    input_var: (B, T) int32 token ids
    input_len: (B,) int32 valid lengths
    Returns: output (B, T, 2H) — full-T, zero past each sequence's length
             (pad_packed_sequence's trim to max(input_len) is a pure slice at the
             caller; doing it here would force a device->host sync every call),
             state = (h, c), each (num_layers=1, B, 2H).
    """
    H = params["hidden_size"]
    weights = {k: v for k, v in params.items() if k != "hidden_size"}
    return _sent_encoder_forward(weights, input_var, input_len, hidden_size=H)


if __name__ == "__main__":
    B, T = 2, 8
    vocab_size, embed_size, hidden_size = 50, 32, 32

    key = jax.random.PRNGKey(0)
    k_param, k_ids = jax.random.split(key)
    params = init_params(k_param, vocab_size, embed_size, hidden_size)

    input_var = jax.random.randint(k_ids, (B, T), 0, vocab_size, dtype=jnp.int32)
    input_len = jnp.array([T, 5], dtype=jnp.int32)

    output, (h, c) = sent_encoder_forward(params, input_var, input_len)
    jax.block_until_ready((output, h, c))

    assert output.shape == (B, T, 2 * hidden_size)
    assert h.shape == (1, B, 2 * hidden_size)
    assert c.shape == (1, B, 2 * hidden_size)
    assert bool(jnp.all(jnp.isfinite(output)))
    # padded tail of the shorter sequence must be exactly zero (pad_packed_sequence)
    assert float(jnp.max(jnp.abs(output[1, 5:, :]))) == 0.0
    print("KERNEL_OK")
</pallas_src>

<mosaic_0001>
module attributes {stable_mosaic.version = 11 : i64} {
  func.func @_bidir_lstm_kernel(%arg0: i32, %arg1: i32, %arg2: memref<1xi32, #tpu.memory_space<smem>>, %arg3: memref<8x8x32xbf16, #tpu.memory_space<vmem>>, %arg4: memref<8x1xi32, #tpu.memory_space<vmem>>, %arg5: memref<1x32x512xbf16, #tpu.memory_space<vmem>>, %arg6: memref<1x128x512xbf16, #tpu.memory_space<vmem>>, %arg7: memref<1x1x512xf32, #tpu.memory_space<vmem>>, %arg8: memref<1x8x8x128xbf16, #tpu.memory_space<vmem>>, %arg9: memref<1x2x8x128xf32, #tpu.memory_space<vmem>>, %arg10: memref<8x8x512xf32, #tpu.memory_space<vmem>>, %arg11: memref<8x128xf32, #tpu.memory_space<vmem>>, %arg12: memref<8x128xf32, #tpu.memory_space<vmem>>) attributes {dimension_semantics = [#tpu.dimension_semantics<parallel>, #tpu.dimension_semantics<arbitrary>], iteration_bounds = array<i64: 2, 1>, scalar_prefetch = 1 : i64, scratch_operands = 3 : i64, tpu.core_type = #tpu.core_type<tc>, window_params = [{transform_indices = @transform_0, window_bounds = array<i64: 8, 8, 32>}, {pipeline_mode = #tpu.pipeline_mode<synchronous>, transform_indices = @transform_1, window_bounds = array<i64: 8, 1>}, {transform_indices = @transform_2, window_bounds = array<i64: 1, 32, 512>}, {transform_indices = @transform_3, window_bounds = array<i64: 1, 128, 512>}, {transform_indices = @transform_4, window_bounds = array<i64: 1, 1, 512>}, {transform_indices = @transform_5, window_bounds = array<i64: 1, 8, 8, 128>}, {transform_indices = @transform_6, window_bounds = array<i64: 1, 2, 8, 128>}]} {
    %c1_i32 = arith.constant 1 : i32
    %0 = arith.subi %c1_i32, %arg0 : i32
    %1 = arith.muli %0, %arg1 : i32
    %c0_i32 = arith.constant 0 : i32
    %2 = arith.subi %c0_i32, %arg1 : i32
    %3 = arith.muli %arg0, %2 : i32
    %4 = arith.addi %1, %3 : i32
    %c8_i32 = arith.constant 8 : i32
    %5 = arith.muli %4, %c8_i32 : i32
    %c0 = arith.constant 0 : index
    %6 = memref.load %arg2[%c0] : memref<1xi32, #tpu.memory_space<smem>>
    %c0_i32_0 = arith.constant 0 : i32
    %7 = arith.cmpi eq, %arg1, %c0_i32_0 : i32
    %8 = arith.extui %7 : i1 to i32
    %c0_i32_1 = arith.constant 0 : i32
    %9 = arith.cmpi ne, %8, %c0_i32_1 : i32
    scf.if %9 {
      %cst = arith.constant 0.000000e+00 : f32
      %24 = vector.broadcast %cst : f32 to vector<8x128xf32>
      %c0_15 = arith.constant 0 : index
      %c0_16 = arith.constant 0 : index
      %25 = vector.load %arg11[%c0_15, %c0_16] : memref<8x128xf32, #tpu.memory_space<vmem>>, vector<8x128xf32>
      tpu.vector_store %arg11[%c0_15, %c0_16], %24 {strides = array<i32>} : memref<8x128xf32, #tpu.memory_space<vmem>>, vector<8x128xf32>,
      %cst_17 = arith.constant 0.000000e+00 : f32
      %26 = vector.broadcast %cst_17 : f32 to vector<8x128xf32>
      %c0_18 = arith.constant 0 : index
      %c0_19 = arith.constant 0 : index
      %27 = vector.load %arg12[%c0_18, %c0_19] : memref<8x128xf32, #tpu.memory_space<vmem>>, vector<8x128xf32>
      tpu.vector_store %arg12[%c0_18, %c0_19], %26 {strides = array<i32>} : memref<8x128xf32, #tpu.memory_space<vmem>>, vector<8x128xf32>,
    } else {
    }
    %10 = arith.cmpi slt, %5, %6 : i32
    %11 = arith.extui %10 : i1 to i32
    %c0_i32_2 = arith.constant 0 : i32
    %12 = arith.cmpi ne, %11, %c0_i32_2 : i32
    scf.if %12 {
      %c0_15 = arith.constant 0 : index
      %c0_16 = arith.constant 0 : index
      %c0_17 = arith.constant 0 : index
      %24 = vector.load %arg3[%c0_15, %c0_16, %c0_17] : memref<8x8x32xbf16, #tpu.memory_space<vmem>>, vector<8x8x32xbf16>
      %25 = vector.shape_cast %24 : vector<8x8x32xbf16> to vector<64x32xbf16>
      %c0_18 = arith.constant 0 : index
      %c0_19 = arith.constant 0 : index
      %c0_20 = arith.constant 0 : index
      %26 = vector.load %arg5[%c0_18, %c0_19, %c0_20] : memref<1x32x512xbf16, #tpu.memory_space<vmem>>, vector<1x32x512xbf16>
      %27 = vector.shape_cast %26 : vector<1x32x512xbf16> to vector<32x512xbf16>
      %cst = arith.constant dense<0.000000e+00> : vector<64x512xf32>
      %28 = tpu.matmul %25, %27, %cst {dimension_numbers = #tpu.dot_dimension_numbers<[1], [0], [0], [1], [0, 0, 1, 1], [], []>} : vector<64x32xbf16>, vector<32x512xbf16>, vector<64x512xf32> -> vector<64x512xf32>
      %c0_21 = arith.constant 0 : index
      %c0_22 = arith.constant 0 : index
      %c0_23 = arith.constant 0 : index
      %29 = vector.load %arg7[%c0_21, %c0_22, %c0_23] : memref<1x1x512xf32, #tpu.memory_space<vmem>>, vector<1x1x512xf32>
      %30 = vector.shape_cast %29 : vector<1x1x512xf32> to vector<1x512xf32>
      %31 = vector.broadcast %30 : vector<1x512xf32> to vector<64x512xf32>
      %32 = arith.addf %28, %31 : vector<64x512xf32>
      %33 = vector.shape_cast %32 : vector<64x512xf32> to vector<8x8x512xf32>
      %c0_24 = arith.constant 0 : index
      %c0_25 = arith.constant 0 : index
      %c0_26 = arith.constant 0 : index
      %34 = vector.load %arg10[%c0_24, %c0_25, %c0_26] : memref<8x8x512xf32, #tpu.memory_space<vmem>>, vector<8x8x512xf32>
      tpu.vector_store %arg10[%c0_24, %c0_25, %c0_26], %33 {strides = array<i32>} : memref<8x8x512xf32, #tpu.memory_space<vmem>>, vector<8x8x512xf32>,
      %c0_27 = arith.constant 0 : index
      %c0_28 = arith.constant 0 : index
      %c0_29 = arith.constant 0 : index
      %35 = vector.load %arg6[%c0_27, %c0_28, %c0_29] : memref<1x128x512xbf16, #tpu.memory_space<vmem>>, vector<1x128x512xbf16>
      %36 = vector.shape_cast %35 : vector<1x128x512xbf16> to vector<128x512xbf16>
      %c0_30 = arith.constant 0 : index
      %c0_31 = arith.constant 0 : index
      %37 = vector.load %arg4[%c0_30, %c0_31] : memref<8x1xi32, #tpu.memory_space<vmem>>, vector<8x1xi32>
      %38 = vector.shape_cast %37 : vector<8x1xi32> to vector<8x1xi32>
      %39 = vector.broadcast %38 : vector<8x1xi32> to vector<8x128xi32>
      %c0_i32_32 = arith.constant 0 : i32
      %40 = arith.cmpi eq, %arg0, %c0_i32_32 : i32
      %41 = arith.extui %40 : i1 to i32
      %c0_i32_33 = arith.constant 0 : i32
      %42 = arith.cmpi ne, %41, %c0_i32_33 : i32
      scf.if %42 {
        %c0_36 = arith.constant 0 : index
        %c0_37 = arith.constant 0 : index
        %46 = vector.load %arg11[%c0_36, %c0_37] : memref<8x128xf32, #tpu.memory_space<vmem>>, vector<8x128xf32>
        %c0_38 = arith.constant 0 : index
        %c0_39 = arith.constant 0 : index
        %47 = vector.load %arg12[%c0_38, %c0_39] : memref<8x128xf32, #tpu.memory_space<vmem>>, vector<8x128xf32>
        %c0_i32_40 = arith.constant 0 : i32
        %48 = arith.index_cast %c0_i32_40 : i32 to index
        %c0_41 = arith.constant 0 : index
        %c0_42 = arith.constant 0 : index
        %49 = vector.load %arg10[%48, %c0_41, %c0_42] : memref<8x8x512xf32, #tpu.memory_space<vmem>>, vector<1x8x512xf32>
        %50 = vector.shape_cast %49 : vector<1x8x512xf32> to vector<8x512xf32>
        %51 = arith.truncf %46 : vector<8x128xf32> to vector<8x128xbf16>
        %cst_43 = arith.constant dense<0.000000e+00> : vector<8x512xf32>
        %52 = tpu.matmul %51, %36, %cst_43 {dimension_numbers = #tpu.dot_dimension_numbers<[1], [0], [0], [1], [0, 0, 1, 1], [], []>} : vector<8x128xbf16>, vector<128x512xbf16>, vector<8x512xf32> -> vector<8x512xf32>
        %53 = arith.addf %50, %52 : vector<8x512xf32>
        %54 = vector.extract_strided_slice %53 {offsets = [0, 0], sizes = [8, 384], strides = [1, 1]} : vector<8x512xf32> to vector<8x384xf32>
        %55 = arith.negf %54 : vector<8x384xf32>
        %56 = math.exp %55 : vector<8x384xf32>
        %cst_44 = arith.constant 1.000000e+00 : f32
        %57 = vector.broadcast %cst_44 : f32 to vector<8x384xf32>
        %58 = arith.addf %57, %56 : vector<8x384xf32>
        %59 = arith.divf %57, %58 : vector<8x384xf32>
        %60 = vector.extract_strided_slice %59 {offsets = [0, 0], sizes = [8, 128], strides = [1, 1]} : vector<8x384xf32> to vector<8x128xf32>
        %61 = vector.extract_strided_slice %59 {offsets = [0, 128], sizes = [8, 128], strides = [1, 1]} : vector<8x384xf32> to vector<8x128xf32>
        %62 = vector.extract_strided_slice %59 {offsets = [0, 256], sizes = [8, 128], strides = [1, 1]} : vector<8x384xf32> to vector<8x128xf32>
        %63 = vector.extract_strided_slice %53 {offsets = [0, 384], sizes = [8, 128], strides = [1, 1]} : vector<8x512xf32> to vector<8x128xf32>
        %64 = math.tanh %63 : vector<8x128xf32>
        %65 = arith.mulf %61, %47 : vector<8x128xf32>
        %66 = arith.mulf %60, %64 : vector<8x128xf32>
        %67 = arith.addf %65, %66 : vector<8x128xf32>
        %68 = math.tanh %67 : vector<8x128xf32>
        %69 = arith.mulf %62, %68 : vector<8x128xf32>
        %70 = arith.addi %5, %c0_i32_40 : i32
        %71 = vector.broadcast %70 : i32 to vector<8x128xi32>
        %72 = arith.cmpi slt, %71, %39 : vector<8x128xi32>
        %73 = arith.select %72, %69, %46 : vector<8x128xi1>, vector<8x128xf32>
        %74 = arith.select %72, %67, %47 : vector<8x128xi1>, vector<8x128xf32>
        %cst_45 = arith.constant 0.000000e+00 : f32
        %75 = vector.broadcast %cst_45 : f32 to vector<8x128xf32>
        %76 = arith.select %72, %69, %75 : vector<8x128xi1>, vector<8x128xf32>
        %77 = arith.truncf %76 : vector<8x128xf32> to vector<8x128xbf16>
        %c0_46 = arith.constant 0 : index
        %78 = arith.index_cast %c0_i32_40 : i32 to index
        %c0_47 = arith.constant 0 : index
        %c0_48 = arith.constant 0 : index
        %79 = vector.load %arg8[%c0_46, %78, %c0_47, %c0_48] : memref<1x8x8x128xbf16, #tpu.memory_space<vmem>>, vector<1x1x8x128xbf16>
        %80 = vector.shape_cast %79 : vector<1x1x8x128xbf16> to vector<8x128xbf16>
        %81 = vector.shape_cast %77 : vector<8x128xbf16> to vector<1x1x8x128xbf16>
        tpu.vector_store %arg8[%c0_46, %78, %c0_47, %c0_48], %81 {strides = array<i32>} : memref<1x8x8x128xbf16, #tpu.memory_space<vmem>>, vector<1x1x8x128xbf16>,
        %c1_i32_49 = arith.constant 1 : i32
        %82 = arith.index_cast %c1_i32_49 : i32 to index
        %c0_50 = arith.constant 0 : index
        %c0_51 = arith.constant 0 : index
        %83 = vector.load %arg10[%82, %c0_50, %c0_51] : memref<8x8x512xf32, #tpu.memory_space<vmem>>, vector<1x8x512xf32>
        %84 = vector.shape_cast %83 : vector<1x8x512xf32> to vector<8x512xf32>
        %85 = arith.truncf %73 : vector<8x128xf32> to vector<8x128xbf16>
        %cst_52 = arith.constant dense<0.000000e+00> : vector<8x512xf32>
        %86 = tpu.matmul %85, %36, %cst_52 {dimension_numbers = #tpu.dot_dimension_numbers<[1], [0], [0], [1], [0, 0, 1, 1], [], []>} : vector<8x128xbf16>, vector<128x512xbf16>, vector<8x512xf32> -> vector<8x512xf32>
        %87 = arith.addf %84, %86 : vector<8x512xf32>
        %88 = vector.extract_strided_slice %87 {offsets = [0, 0], sizes = [8, 384], strides = [1, 1]} : vector<8x512xf32> to vector<8x384xf32>
        %89 = arith.negf %88 : vector<8x384xf32>
        %90 = math.exp %89 : vector<8x384xf32>
        %cst_53 = arith.constant 1.000000e+00 : f32
        %91 = vector.broadcast %cst_53 : f32 to vector<8x384xf32>
        %92 = arith.addf %91, %90 : vector<8x384xf32>
        %93 = arith.divf %91, %92 : vector<8x384xf32>
        %94 = vector.extract_strided_slice %93 {offsets = [0, 0], sizes = [8, 128], strides = [1, 1]} : vector<8x384xf32> to vector<8x128xf32>
        %95 = vector.extract_strided_slice %93 {offsets = [0, 128], sizes = [8, 128], strides = [1, 1]} : vector<8x384xf32> to vector<8x128xf32>
        %96 = vector.extract_strided_slice %93 {offsets = [0, 256], sizes = [8, 128], strides = [1, 1]} : vector<8x384xf32> to vector<8x128xf32>
        %97 = vector.extract_strided_slice %87 {offsets = [0, 384], sizes = [8, 128], strides = [1, 1]} : vector<8x512xf32> to vector<8x128xf32>
        %98 = math.tanh %97 : vector<8x128xf32>
        %99 = arith.mulf %95, %74 : vector<8x128xf32>
        %100 = arith.mulf %94, %98 : vector<8x128xf32>
        %101 = arith.addf %99, %100 : vector<8x128xf32>
        %102 = math.tanh %101 : vector<8x128xf32>
        %103 = arith.mulf %96, %102 : vector<8x128xf32>
        %104 = arith.addi %5, %c1_i32_49 : i32
        %105 = vector.broadcast %104 : i32 to vector<8x128xi32>
        %106 = arith.cmpi slt, %105, %39 : vector<8x128xi32>
        %107 = arith.select %106, %103, %73 : vector<8x128xi1>, vector<8x128xf32>
        %108 = arith.select %106, %101, %74 : vector<8x128xi1>, vector<8x128xf32>
        %cst_54 = arith.constant 0.000000e+00 : f32
        %109 = vector.broadcast %cst_54 : f32 to vector<8x128xf32>
        %110 = arith.select %106, %103, %109 : vector<8x128xi1>, vector<8x128xf32>
        %111 = arith.truncf %110 : vector<8x128xf32> to vector<8x128xbf16>
        %c0_55 = arith.constant 0 : index
        %112 = arith.index_cast %c1_i32_49 : i32 to index
        %c0_56 = arith.constant 0 : index
        %c0_57 = arith.constant 0 : index
        %113 = vector.load %arg8[%c0_55, %112, %c0_56, %c0_57] : memref<1x8x8x128xbf16, #tpu.memory_space<vmem>>, vector<1x1x8x128xbf16>
        %114 = vector.shape_cast %113 : vector<1x1x8x128xbf16> to vector<8x128xbf16>
        %115 = vector.shape_cast %111 : vector<8x128xbf16> to vector<1x1x8x128xbf16>
        tpu.vector_store %arg8[%c0_55, %112, %c0_56, %c0_57], %115 {strides = array<i32>} : memref<1x8x8x128xbf16, #tpu.memory_space<vmem>>, vector<1x1x8x128xbf16>,
        %c2_i32 = arith.constant 2 : i32
        %116 = arith.index_cast %c2_i32 : i32 to index
        %c0_58 = arith.constant 0 : index
        %c0_59 = arith.constant 0 : index
        %117 = vector.load %arg10[%116, %c0_58, %c0_59] : memref<8x8x512xf32, #tpu.memory_space<vmem>>, vector<1x8x512xf32>
        %118 = vector.shape_cast %117 : vector<1x8x512xf32> to vector<8x512xf32>
        %119 = arith.truncf %107 : vector<8x128xf32> to vector<8x128xbf16>
        %cst_60 = arith.constant dense<0.000000e+00> : vector<8x512xf32>
        %120 = tpu.matmul %119, %36, %cst_60 {dimension_numbers = #tpu.dot_dimension_numbers<[1], [0], [0], [1], [0, 0, 1, 1], [], []>} : vector<8x128xbf16>, vector<128x512xbf16>, vector<8x512xf32> -> vector<8x512xf32>
        %121 = arith.addf %118, %120 : vector<8x512xf32>
        %122 = vector.extract_strided_slice %121 {offsets = [0, 0], sizes = [8, 384], strides = [1, 1]} : vector<8x512xf32> to vector<8x384xf32>
        %123 = arith.negf %122 : vector<8x384xf32>
        %124 = math.exp %123 : vector<8x384xf32>
        %cst_61 = arith.constant 1.000000e+00 : f32
        %125 = vector.broadcast %cst_61 : f32 to vector<8x384xf32>
        %126 = arith.addf %125, %124 : vector<8x384xf32>
        %127 = arith.divf %125, %126 : vector<8x384xf32>
        %128 = vector.extract_strided_slice %127 {offsets = [0, 0], sizes = [8, 128], strides = [1, 1]} : vector<8x384xf32> to vector<8x128xf32>
        %129 = vector.extract_strided_slice %127 {offsets = [0, 128], sizes = [8, 128], strides = [1, 1]} : vector<8x384xf32> to vector<8x128xf32>
        %130 = vector.extract_strided_slice %127 {offsets = [0, 256], sizes = [8, 128], strides = [1, 1]} : vector<8x384xf32> to vector<8x128xf32>
        %131 = vector.extract_strided_slice %121 {offsets = [0, 384], sizes = [8, 128], strides = [1, 1]} : vector<8x512xf32> to vector<8x128xf32>
        %132 = math.tanh %131 : vector<8x128xf32>
        %133 = arith.mulf %129, %108 : vector<8x128xf32>
        %134 = arith.mulf %128, %132 : vector<8x128xf32>
        %135 = arith.addf %133, %134 : vector<8x128xf32>
        %136 = math.tanh %135 : vector<8x128xf32>
        %137 = arith.mulf %130, %136 : vector<8x128xf32>
        %138 = arith.addi %5, %c2_i32 : i32
        %139 = vector.broadcast %138 : i32 to vector<8x128xi32>
        %140 = arith.cmpi slt, %139, %39 : vector<8x128xi32>
        %141 = arith.select %140, %137, %107 : vector<8x128xi1>, vector<8x128xf32>
        %142 = arith.select %140, %135, %108 : vector<8x128xi1>, vector<8x128xf32>
        %cst_62 = arith.constant 0.000000e+00 : f32
        %143 = vector.broadcast %cst_62 : f32 to vector<8x128xf32>
        %144 = arith.select %140, %137, %143 : vector<8x128xi1>, vector<8x128xf32>
        %145 = arith.truncf %144 : vector<8x128xf32> to vector<8x128xbf16>
        %c0_63 = arith.constant 0 : index
        %146 = arith.index_cast %c2_i32 : i32 to index
        %c0_64 = arith.constant 0 : index
        %c0_65 = arith.constant 0 : index
        %147 = vector.load %arg8[%c0_63, %146, %c0_64, %c0_65] : memref<1x8x8x128xbf16, #tpu.memory_space<vmem>>, vector<1x1x8x128xbf16>
        %148 = vector.shape_cast %147 : vector<1x1x8x128xbf16> to vector<8x128xbf16>
        %149 = vector.shape_cast %145 : vector<8x128xbf16> to vector<1x1x8x128xbf16>
        tpu.vector_store %arg8[%c0_63, %146, %c0_64, %c0_65], %149 {strides = array<i32>} : memref<1x8x8x128xbf16, #tpu.memory_space<vmem>>, vector<1x1x8x128xbf16>,
        %c3_i32 = arith.constant 3 : i32
        %150 = arith.index_cast %c3_i32 : i32 to index
        %c0_66 = arith.constant 0 : index
        %c0_67 = arith.constant 0 : index
        %151 = vector.load %arg10[%150, %c0_66, %c0_67] : memref<8x8x512xf32, #tpu.memory_space<vmem>>, vector<1x8x512xf32>
        %152 = vector.shape_cast %151 : vector<1x8x512xf32> to vector<8x512xf32>
        %153 = arith.truncf %141 : vector<8x128xf32> to vector<8x128xbf16>
        %cst_68 = arith.constant dense<0.000000e+00> : vector<8x512xf32>
        %154 = tpu.matmul %153, %36, %cst_68 {dimension_numbers = #tpu.dot_dimension_numbers<[1], [0], [0], [1], [0, 0, 1, 1], [], []>} : vector<8x128xbf16>, vector<128x512xbf16>, vector<8x512xf32> -> vector<8x512xf32>
        %155 = arith.addf %152, %154 : vector<8x512xf32>
        %156 = vector.extract_strided_slice %155 {offsets = [0, 0], sizes = [8, 384], strides = [1, 1]} : vector<8x512xf32> to vector<8x384xf32>
        %157 = arith.negf %156 : vector<8x384xf32>
        %158 = math.exp %157 : vector<8x384xf32>
        %cst_69 = arith.constant 1.000000e+00 : f32
        %159 = vector.broadcast %cst_69 : f32 to vector<8x384xf32>
        %160 = arith.addf %159, %158 : vector<8x384xf32>
        %161 = arith.divf %159, %160 : vector<8x384xf32>
        %162 = vector.extract_strided_slice %161 {offsets = [0, 0], sizes = [8, 128], strides = [1, 1]} : vector<8x384xf32> to vector<8x128xf32>
        %163 = vector.extract_strided_slice %161 {offsets = [0, 128], sizes = [8, 128], strides = [1, 1]} : vector<8x384xf32> to vector<8x128xf32>
        %164 = vector.extract_strided_slice %161 {offsets = [0, 256], sizes = [8, 128], strides = [1, 1]} : vector<8x384xf32> to vector<8x128xf32>
        %165 = vector.extract_strided_slice %155 {offsets = [0, 384], sizes = [8, 128], strides = [1, 1]} : vector<8x512xf32> to vector<8x128xf32>
        %166 = math.tanh %165 : vector<8x128xf32>
        %167 = arith.mulf %163, %142 : vector<8x128xf32>
        %168 = arith.mulf %162, %166 : vector<8x128xf32>
        %169 = arith.addf %167, %168 : vector<8x128xf32>
        %170 = math.tanh %169 : vector<8x128xf32>
        %171 = arith.mulf %164, %170 : vector<8x128xf32>
        %172 = arith.addi %5, %c3_i32 : i32
        %173 = vector.broadcast %172 : i32 to vector<8x128xi32>
        %174 = arith.cmpi slt, %173, %39 : vector<8x128xi32>
        %175 = arith.select %174, %171, %141 : vector<8x128xi1>, vector<8x128xf32>
        %176 = arith.select %174, %169, %142 : vector<8x128xi1>, vector<8x128xf32>
        %cst_70 = arith.constant 0.000000e+00 : f32
        %177 = vector.broadcast %cst_70 : f32 to vector<8x128xf32>
        %178 = arith.select %174, %171, %177 : vector<8x128xi1>, vector<8x128xf32>
        %179 = arith.truncf %178 : vector<8x128xf32> to vector<8x128xbf16>
        %c0_71 = arith.constant 0 : index
        %180 = arith.index_cast %c3_i32 : i32 to index
        %c0_72 = arith.constant 0 : index
        %c0_73 = arith.constant 0 : index
        %181 = vector.load %arg8[%c0_71, %180, %c0_72, %c0_73] : memref<1x8x8x128xbf16, #tpu.memory_space<vmem>>, vector<1x1x8x128xbf16>
        %182 = vector.shape_cast %181 : vector<1x1x8x128xbf16> to vector<8x128xbf16>
        %183 = vector.shape_cast %179 : vector<8x128xbf16> to vector<1x1x8x128xbf16>
        tpu.vector_store %arg8[%c0_71, %180, %c0_72, %c0_73], %183 {strides = array<i32>} : memref<1x8x8x128xbf16, #tpu.memory_space<vmem>>, vector<1x1x8x128xbf16>,
        %c4_i32 = arith.constant 4 : i32
        %184 = arith.index_cast %c4_i32 : i32 to index
        %c0_74 = arith.constant 0 : index
        %c0_75 = arith.constant 0 : index
        %185 = vector.load %arg10[%184, %c0_74, %c0_75] : memref<8x8x512xf32, #tpu.memory_space<vmem>>, vector<1x8x512xf32>
        %186 = vector.shape_cast %185 : vector<1x8x512xf32> to vector<8x512xf32>
        %187 = arith.truncf %175 : vector<8x128xf32> to vector<8x128xbf16>
        %cst_76 = arith.constant dense<0.000000e+00> : vector<8x512xf32>
        %188 = tpu.matmul %187, %36, %cst_76 {dimension_numbers = #tpu.dot_dimension_numbers<[1], [0], [0], [1], [0, 0, 1, 1], [], []>} : vector<8x128xbf16>, vector<128x512xbf16>, vector<8x512xf32> -> vector<8x512xf32>
        %189 = arith.addf %186, %188 : vector<8x512xf32>
        %190 = vector.extract_strided_slice %189 {offsets = [0, 0], sizes = [8, 384], strides = [1, 1]} : vector<8x512xf32> to vector<8x384xf32>
        %191 = arith.negf %190 : vector<8x384xf32>
        %192 = math.exp %191 : vector<8x384xf32>
        %cst_77 = arith.constant 1.000000e+00 : f32
        %193 = vector.broadcast %cst_77 : f32 to vector<8x384xf32>
        %194 = arith.addf %193, %192 : vector<8x384xf32>
        %195 = arith.divf %193, %194 : vector<8x384xf32>
        %196 = vector.extract_strided_slice %195 {offsets = [0, 0], sizes = [8, 128], strides = [1, 1]} : vector<8x384xf32> to vector<8x128xf32>
        %197 = vector.extract_strided_slice %195 {offsets = [0, 128], sizes = [8, 128], strides = [1, 1]} : vector<8x384xf32> to vector<8x128xf32>
        %198 = vector.extract_strided_slice %195 {offsets = [0, 256], sizes = [8, 128], strides = [1, 1]} : vector<8x384xf32> to vector<8x128xf32>
        %199 = vector.extract_strided_slice %189 {offsets = [0, 384], sizes = [8, 128], strides = [1, 1]} : vector<8x512xf32> to vector<8x128xf32>
        %200 = math.tanh %199 : vector<8x128xf32>
        %201 = arith.mulf %197, %176 : vector<8x128xf32>
        %202 = arith.mulf %196, %200 : vector<8x128xf32>
        %203 = arith.addf %201, %202 : vector<8x128xf32>
        %204 = math.tanh %203 : vector<8x128xf32>
        %205 = arith.mulf %198, %204 : vector<8x128xf32>
        %206 = arith.addi %5, %c4_i32 : i32
        %207 = vector.broadcast %206 : i32 to vector<8x128xi32>
        %208 = arith.cmpi slt, %207, %39 : vector<8x128xi32>
        %209 = arith.select %208, %205, %175 : vector<8x128xi1>, vector<8x128xf32>
        %210 = arith.select %208, %203, %176 : vector<8x128xi1>, vector<8x128xf32>
        %cst_78 = arith.constant 0.000000e+00 : f32
        %211 = vector.broadcast %cst_78 : f32 to vector<8x128xf32>
        %212 = arith.select %208, %205, %211 : vector<8x128xi1>, vector<8x128xf32>
        %213 = arith.truncf %212 : vector<8x128xf32> to vector<8x128xbf16>
        %c0_79 = arith.constant 0 : index
        %214 = arith.index_cast %c4_i32 : i32 to index
        %c0_80 = arith.constant 0 : index
        %c0_81 = arith.constant 0 : index
        %215 = vector.load %arg8[%c0_79, %214, %c0_80, %c0_81] : memref<1x8x8x128xbf16, #tpu.memory_space<vmem>>, vector<1x1x8x128xbf16>
        %216 = vector.shape_cast %215 : vector<1x1x8x128xbf16> to vector<8x128xbf16>
        %217 = vector.shape_cast %213 : vector<8x128xbf16> to vector<1x1x8x128xbf16>
        tpu.vector_store %arg8[%c0_79, %214, %c0_80, %c0_81], %217 {strides = array<i32>} : memref<1x8x8x128xbf16, #tpu.memory_space<vmem>>, vector<1x1x8x128xbf16>,
        %c5_i32 = arith.constant 5 : i32
        %218 = arith.index_cast %c5_i32 : i32 to index
        %c0_82 = arith.constant 0 : index
        %c0_83 = arith.constant 0 : index
        %219 = vector.load %arg10[%218, %c0_82, %c0_83] : memref<8x8x512xf32, #tpu.memory_space<vmem>>, vector<1x8x512xf32>
        %220 = vector.shape_cast %219 : vector<1x8x512xf32> to vector<8x512xf32>
        %221 = arith.truncf %209 : vector<8x128xf32> to vector<8x128xbf16>
        %cst_84 = arith.constant dense<0.000000e+00> : vector<8x512xf32>
        %222 = tpu.matmul %221, %36, %cst_84 {dimension_numbers = #tpu.dot_dimension_numbers<[1], [0], [0], [1], [0, 0, 1, 1], [], []>} : vector<8x128xbf16>, vector<128x512xbf16>, vector<8x512xf32> -> vector<8x512xf32>
        %223 = arith.addf %220, %222 : vector<8x512xf32>
        %224 = vector.extract_strided_slice %223 {offsets = [0, 0], sizes = [8, 384], strides = [1, 1]} : vector<8x512xf32> to vector<8x384xf32>
        %225 = arith.negf %224 : vector<8x384xf32>
        %226 = math.exp %225 : vector<8x384xf32>
        %cst_85 = arith.constant 1.000000e+00 : f32
        %227 = vector.broadcast %cst_85 : f32 to vector<8x384xf32>
        %228 = arith.addf %227, %226 : vector<8x384xf32>
        %229 = arith.divf %227, %228 : vector<8x384xf32>
        %230 = vector.extract_strided_slice %229 {offsets = [0, 0], sizes = [8, 128], strides = [1, 1]} : vector<8x384xf32> to vector<8x128xf32>
        %231 = vector.extract_strided_slice %229 {offsets = [0, 128], sizes = [8, 128], strides = [1, 1]} : vector<8x384xf32> to vector<8x128xf32>
        %232 = vector.extract_strided_slice %229 {offsets = [0, 256], sizes = [8, 128], strides = [1, 1]} : vector<8x384xf32> to vector<8x128xf32>
        %233 = vector.extract_strided_slice %223 {offsets = [0, 384], sizes = [8, 128], strides = [1, 1]} : vector<8x512xf32> to vector<8x128xf32>
        %234 = math.tanh %233 : vector<8x128xf32>
        %235 = arith.mulf %231, %210 : vector<8x128xf32>
        %236 = arith.mulf %230, %234 : vector<8x128xf32>
        %237 = arith.addf %235, %236 : vector<8x128xf32>
        %238 = math.tanh %237 : vector<8x128xf32>
        %239 = arith.mulf %232, %238 : vector<8x128xf32>
        %240 = arith.addi %5, %c5_i32 : i32
        %241 = vector.broadcast %240 : i32 to vector<8x128xi32>
        %242 = arith.cmpi slt, %241, %39 : vector<8x128xi32>
        %243 = arith.select %242, %239, %209 : vector<8x128xi1>, vector<8x128xf32>
        %244 = arith.select %242, %237, %210 : vector<8x128xi1>, vector<8x128xf32>
        %cst_86 = arith.constant 0.000000e+00 : f32
        %245 = vector.broadcast %cst_86 : f32 to vector<8x128xf32>
        %246 = arith.select %242, %239, %245 : vector<8x128xi1>, vector<8x128xf32>
        %247 = arith.truncf %246 : vector<8x128xf32> to vector<8x128xbf16>
        %c0_87 = arith.constant 0 : index
        %248 = arith.index_cast %c5_i32 : i32 to index
        %c0_88 = arith.constant 0 : index
        %c0_89 = arith.constant 0 : index
        %249 = vector.load %arg8[%c0_87, %248, %c0_88, %c0_89] : memref<1x8x8x128xbf16, #tpu.memory_space<vmem>>, vector<1x1x8x128xbf16>
        %250 = vector.shape_cast %249 : vector<1x1x8x128xbf16> to vector<8x128xbf16>
        %251 = vector.shape_cast %247 : vector<8x128xbf16> to vector<1x1x8x128xbf16>
        tpu.vector_store %arg8[%c0_87, %248, %c0_88, %c0_89], %251 {strides = array<i32>} : memref<1x8x8x128xbf16, #tpu.memory_space<vmem>>, vector<1x1x8x128xbf16>,
        %c6_i32 = arith.constant 6 : i32
        %252 = arith.index_cast %c6_i32 : i32 to index
        %c0_90 = arith.constant 0 : index
        %c0_91 = arith.constant 0 : index
        %253 = vector.load %arg10[%252, %c0_90, %c0_91] : memref<8x8x512xf32, #tpu.memory_space<vmem>>, vector<1x8x512xf32>
        %254 = vector.shape_cast %253 : vector<1x8x512xf32> to vector<8x512xf32>
        %255 = arith.truncf %243 : vector<8x128xf32> to vector<8x128xbf16>
        %cst_92 = arith.constant dense<0.000000e+00> : vector<8x512xf32>
        %256 = tpu.matmul %255, %36, %cst_92 {dimension_numbers = #tpu.dot_dimension_numbers<[1], [0], [0], [1], [0, 0, 1, 1], [], []>} : vector<8x128xbf16>, vector<128x512xbf16>, vector<8x512xf32> -> vector<8x512xf32>
        %257 = arith.addf %254, %256 : vector<8x512xf32>
        %258 = vector.extract_strided_slice %257 {offsets = [0, 0], sizes = [8, 384], strides = [1, 1]} : vector<8x512xf32> to vector<8x384xf32>
        %259 = arith.negf %258 : vector<8x384xf32>
        %260 = math.exp %259 : vector<8x384xf32>
        %cst_93 = arith.constant 1.000000e+00 : f32
        %261 = vector.broadcast %cst_93 : f32 to vector<8x384xf32>
        %262 = arith.addf %261, %260 : vector<8x384xf32>
        %263 = arith.divf %261, %262 : vector<8x384xf32>
        %264 = vector.extract_strided_slice %263 {offsets = [0, 0], sizes = [8, 128], strides = [1, 1]} : vector<8x384xf32> to vector<8x128xf32>
        %265 = vector.extract_strided_slice %263 {offsets = [0, 128], sizes = [8, 128], strides = [1, 1]} : vector<8x384xf32> to vector<8x128xf32>
        %266 = vector.extract_strided_slice %263 {offsets = [0, 256], sizes = [8, 128], strides = [1, 1]} : vector<8x384xf32> to vector<8x128xf32>
        %267 = vector.extract_strided_slice %257 {offsets = [0, 384], sizes = [8, 128], strides = [1, 1]} : vector<8x512xf32> to vector<8x128xf32>
        %268 = math.tanh %267 : vector<8x128xf32>
        %269 = arith.mulf %265, %244 : vector<8x128xf32>
        %270 = arith.mulf %264, %268 : vector<8x128xf32>
        %271 = arith.addf %269, %270 : vector<8x128xf32>
        %272 = math.tanh %271 : vector<8x128xf32>
        %273 = arith.mulf %266, %272 : vector<8x128xf32>
        %274 = arith.addi %5, %c6_i32 : i32
        %275 = vector.broadcast %274 : i32 to vector<8x128xi32>
        %276 = arith.cmpi slt, %275, %39 : vector<8x128xi32>
        %277 = arith.select %276, %273, %243 : vector<8x128xi1>, vector<8x128xf32>
        %278 = arith.select %276, %271, %244 : vector<8x128xi1>, vector<8x128xf32>
        %cst_94 = arith.constant 0.000000e+00 : f32
        %279 = vector.broadcast %cst_94 : f32 to vector<8x128xf32>
        %280 = arith.select %276, %273, %279 : vector<8x128xi1>, vector<8x128xf32>
        %281 = arith.truncf %280 : vector<8x128xf32> to vector<8x128xbf16>
        %c0_95 = arith.constant 0 : index
        %282 = arith.index_cast %c6_i32 : i32 to index
        %c0_96 = arith.constant 0 : index
        %c0_97 = arith.constant 0 : index
        %283 = vector.load %arg8[%c0_95, %282, %c0_96, %c0_97] : memref<1x8x8x128xbf16, #tpu.memory_space<vmem>>, vector<1x1x8x128xbf16>
        %284 = vector.shape_cast %283 : vector<1x1x8x128xbf16> to vector<8x128xbf16>
        %285 = vector.shape_cast %281 : vector<8x128xbf16> to vector<1x1x8x128xbf16>
        tpu.vector_store %arg8[%c0_95, %282, %c0_96, %c0_97], %285 {strides = array<i32>} : memref<1x8x8x128xbf16, #tpu.memory_space<vmem>>, vector<1x1x8x128xbf16>,
        %c7_i32 = arith.constant 7 : i32
        %286 = arith.index_cast %c7_i32 : i32 to index
        %c0_98 = arith.constant 0 : index
        %c0_99 = arith.constant 0 : index
        %287 = vector.load %arg10[%286, %c0_98, %c0_99] : memref<8x8x512xf32, #tpu.memory_space<vmem>>, vector<1x8x512xf32>
        %288 = vector.shape_cast %287 : vector<1x8x512xf32> to vector<8x512xf32>
        %289 = arith.truncf %277 : vector<8x128xf32> to vector<8x128xbf16>
        %cst_100 = arith.constant dense<0.000000e+00> : vector<8x512xf32>
        %290 = tpu.matmul %289, %36, %cst_100 {dimension_numbers = #tpu.dot_dimension_numbers<[1], [0], [0], [1], [0, 0, 1, 1], [], []>} : vector<8x128xbf16>, vector<128x512xbf16>, vector<8x512xf32> -> vector<8x512xf32>
        %291 = arith.addf %288, %290 : vector<8x512xf32>
        %292 = vector.extract_strided_slice %291 {offsets = [0, 0], sizes = [8, 384], strides = [1, 1]} : vector<8x512xf32> to vector<8x384xf32>
        %293 = arith.negf %292 : vector<8x384xf32>
        %294 = math.exp %293 : vector<8x384xf32>
        %cst_101 = arith.constant 1.000000e+00 : f32
        %295 = vector.broadcast %cst_101 : f32 to vector<8x384xf32>
        %296 = arith.addf %295, %294 : vector<8x384xf32>
        %297 = arith.divf %295, %296 : vector<8x384xf32>
        %298 = vector.extract_strided_slice %297 {offsets = [0, 0], sizes = [8, 128], strides = [1, 1]} : vector<8x384xf32> to vector<8x128xf32>
        %299 = vector.extract_strided_slice %297 {offsets = [0, 128], sizes = [8, 128], strides = [1, 1]} : vector<8x384xf32> to vector<8x128xf32>
        %300 = vector.extract_strided_slice %297 {offsets = [0, 256], sizes = [8, 128], strides = [1, 1]} : vector<8x384xf32> to vector<8x128xf32>
        %301 = vector.extract_strided_slice %291 {offsets = [0, 384], sizes = [8, 128], strides = [1, 1]} : vector<8x512xf32> to vector<8x128xf32>
        %302 = math.tanh %301 : vector<8x128xf32>
        %303 = arith.mulf %299, %278 : vector<8x128xf32>
        %304 = arith.mulf %298, %302 : vector<8x128xf32>
        %305 = arith.addf %303, %304 : vector<8x128xf32>
        %306 = math.tanh %305 : vector<8x128xf32>
        %307 = arith.mulf %300, %306 : vector<8x128xf32>
        %308 = arith.addi %5, %c7_i32 : i32
        %309 = vector.broadcast %308 : i32 to vector<8x128xi32>
        %310 = arith.cmpi slt, %309, %39 : vector<8x128xi32>
        %311 = arith.select %310, %307, %277 : vector<8x128xi1>, vector<8x128xf32>
        %312 = arith.select %310, %305, %278 : vector<8x128xi1>, vector<8x128xf32>
        %cst_102 = arith.constant 0.000000e+00 : f32
        %313 = vector.broadcast %cst_102 : f32 to vector<8x128xf32>
        %314 = arith.select %310, %307, %313 : vector<8x128xi1>, vector<8x128xf32>
        %315 = arith.truncf %314 : vector<8x128xf32> to vector<8x128xbf16>
        %c0_103 = arith.constant 0 : index
        %316 = arith.index_cast %c7_i32 : i32 to index
        %c0_104 = arith.constant 0 : index
        %c0_105 = arith.constant 0 : index
        %317 = vector.load %arg8[%c0_103, %316, %c0_104, %c0_105] : memref<1x8x8x128xbf16, #tpu.memory_space<vmem>>, vector<1x1x8x128xbf16>
        %318 = vector.shape_cast %317 : vector<1x1x8x128xbf16> to vector<8x128xbf16>
        %319 = vector.shape_cast %315 : vector<8x128xbf16> to vector<1x1x8x128xbf16>
        tpu.vector_store %arg8[%c0_103, %316, %c0_104, %c0_105], %319 {strides = array<i32>} : memref<1x8x8x128xbf16, #tpu.memory_space<vmem>>, vector<1x1x8x128xbf16>,
        %c8_i32_106 = arith.constant 8 : i32
        %c0_107 = arith.constant 0 : index
        %c0_108 = arith.constant 0 : index
        %320 = vector.load %arg11[%c0_107, %c0_108] : memref<8x128xf32, #tpu.memory_space<vmem>>, vector<8x128xf32>
        tpu.vector_store %arg11[%c0_107, %c0_108], %311 {strides = array<i32>} : memref<8x128xf32, #tpu.memory_space<vmem>>, vector<8x128xf32>,
        %c0_109 = arith.constant 0 : index
        %c0_110 = arith.constant 0 : index
        %321 = vector.load %arg12[%c0_109, %c0_110] : memref<8x128xf32, #tpu.memory_space<vmem>>, vector<8x128xf32>
        tpu.vector_store %arg12[%c0_109, %c0_110], %312 {strides = array<i32>} : memref<8x128xf32, #tpu.memory_space<vmem>>, vector<8x128xf32>,
      } else {
      }
      %c1_i32_34 = arith.constant 1 : i32
      %43 = arith.cmpi eq, %arg0, %c1_i32_34 : i32
      %44 = arith.extui %43 : i1 to i32
      %c0_i32_35 = arith.constant 0 : i32
      %45 = arith.cmpi ne, %44, %c0_i32_35 : i32
      scf.if %45 {
        %c0_36 = arith.constant 0 : index
        %c0_37 = arith.constant 0 : index
        %46 = vector.load %arg11[%c0_36, %c0_37] : memref<8x128xf32, #tpu.memory_space<vmem>>, vector<8x128xf32>
        %c0_38 = arith.constant 0 : index
        %c0_39 = arith.constant 0 : index
        %47 = vector.load %arg12[%c0_38, %c0_39] : memref<8x128xf32, #tpu.memory_space<vmem>>, vector<8x128xf32>
        %c0_i32_40 = arith.constant 0 : i32
        %c7_i32 = arith.constant 7 : i32
        %48 = arith.subi %c7_i32, %c0_i32_40 : i32
        %49 = arith.index_cast %48 : i32 to index
        %c0_41 = arith.constant 0 : index
        %c0_42 = arith.constant 0 : index
        %50 = vector.load %arg10[%49, %c0_41, %c0_42] : memref<8x8x512xf32, #tpu.memory_space<vmem>>, vector<1x8x512xf32>
        %51 = vector.shape_cast %50 : vector<1x8x512xf32> to vector<8x512xf32>
        %52 = arith.truncf %46 : vector<8x128xf32> to vector<8x128xbf16>
        %cst_43 = arith.constant dense<0.000000e+00> : vector<8x512xf32>
        %53 = tpu.matmul %52, %36, %cst_43 {dimension_numbers = #tpu.dot_dimension_numbers<[1], [0], [0], [1], [0, 0, 1, 1], [], []>} : vector<8x128xbf16>, vector<128x512xbf16>, vector<8x512xf32> -> vector<8x512xf32>
        %54 = arith.addf %51, %53 : vector<8x512xf32>
        %55 = vector.extract_strided_slice %54 {offsets = [0, 0], sizes = [8, 384], strides = [1, 1]} : vector<8x512xf32> to vector<8x384xf32>
        %56 = arith.negf %55 : vector<8x384xf32>
        %57 = math.exp %56 : vector<8x384xf32>
        %cst_44 = arith.constant 1.000000e+00 : f32
        %58 = vector.broadcast %cst_44 : f32 to vector<8x384xf32>
        %59 = arith.addf %58, %57 : vector<8x384xf32>
        %60 = arith.divf %58, %59 : vector<8x384xf32>
        %61 = vector.extract_strided_slice %60 {offsets = [0, 0], sizes = [8, 128], strides = [1, 1]} : vector<8x384xf32> to vector<8x128xf32>
        %62 = vector.extract_strided_slice %60 {offsets = [0, 128], sizes = [8, 128], strides = [1, 1]} : vector<8x384xf32> to vector<8x128xf32>
        %63 = vector.extract_strided_slice %60 {offsets = [0, 256], sizes = [8, 128], strides = [1, 1]} : vector<8x384xf32> to vector<8x128xf32>
        %64 = vector.extract_strided_slice %54 {offsets = [0, 384], sizes = [8, 128], strides = [1, 1]} : vector<8x512xf32> to vector<8x128xf32>
        %65 = math.tanh %64 : vector<8x128xf32>
        %66 = arith.mulf %62, %47 : vector<8x128xf32>
        %67 = arith.mulf %61, %65 : vector<8x128xf32>
        %68 = arith.addf %66, %67 : vector<8x128xf32>
        %69 = math.tanh %68 : vector<8x128xf32>
        %70 = arith.mulf %63, %69 : vector<8x128xf32>
        %71 = arith.addi %5, %48 : i32
        %72 = vector.broadcast %71 : i32 to vector<8x128xi32>
        %73 = arith.cmpi slt, %72, %39 : vector<8x128xi32>
        %74 = arith.select %73, %70, %46 : vector<8x128xi1>, vector<8x128xf32>
        %75 = arith.select %73, %68, %47 : vector<8x128xi1>, vector<8x128xf32>
        %cst_45 = arith.constant 0.000000e+00 : f32
        %76 = vector.broadcast %cst_45 : f32 to vector<8x128xf32>
        %77 = arith.select %73, %70, %76 : vector<8x128xi1>, vector<8x128xf32>
        %78 = arith.truncf %77 : vector<8x128xf32> to vector<8x128xbf16>
        %c0_46 = arith.constant 0 : index
        %79 = arith.index_cast %48 : i32 to index
        %c0_47 = arith.constant 0 : index
        %c0_48 = arith.constant 0 : index
        %80 = vector.load %arg8[%c0_46, %79, %c0_47, %c0_48] : memref<1x8x8x128xbf16, #tpu.memory_space<vmem>>, vector<1x1x8x128xbf16>
        %81 = vector.shape_cast %80 : vector<1x1x8x128xbf16> to vector<8x128xbf16>
        %82 = vector.shape_cast %78 : vector<8x128xbf16> to vector<1x1x8x128xbf16>
        tpu.vector_store %arg8[%c0_46, %79, %c0_47, %c0_48], %82 {strides = array<i32>} : memref<1x8x8x128xbf16, #tpu.memory_space<vmem>>, vector<1x1x8x128xbf16>,
        %c1_i32_49 = arith.constant 1 : i32
        %c7_i32_50 = arith.constant 7 : i32
        %83 = arith.subi %c7_i32_50, %c1_i32_49 : i32
        %84 = arith.index_cast %83 : i32 to index
        %c0_51 = arith.constant 0 : index
        %c0_52 = arith.constant 0 : index
        %85 = vector.load %arg10[%84, %c0_51, %c0_52] : memref<8x8x512xf32, #tpu.memory_space<vmem>>, vector<1x8x512xf32>
        %86 = vector.shape_cast %85 : vector<1x8x512xf32> to vector<8x512xf32>
        %87 = arith.truncf %74 : vector<8x128xf32> to vector<8x128xbf16>
        %cst_53 = arith.constant dense<0.000000e+00> : vector<8x512xf32>
        %88 = tpu.matmul %87, %36, %cst_53 {dimension_numbers = #tpu.dot_dimension_numbers<[1], [0], [0], [1], [0, 0, 1, 1], [], []>} : vector<8x128xbf16>, vector<128x512xbf16>, vector<8x512xf32> -> vector<8x512xf32>
        %89 = arith.addf %86, %88 : vector<8x512xf32>
        %90 = vector.extract_strided_slice %89 {offsets = [0, 0], sizes = [8, 384], strides = [1, 1]} : vector<8x512xf32> to vector<8x384xf32>
        %91 = arith.negf %90 : vector<8x384xf32>
        %92 = math.exp %91 : vector<8x384xf32>
        %cst_54 = arith.constant 1.000000e+00 : f32
        %93 = vector.broadcast %cst_54 : f32 to vector<8x384xf32>
        %94 = arith.addf %93, %92 : vector<8x384xf32>
        %95 = arith.divf %93, %94 : vector<8x384xf32>
        %96 = vector.extract_strided_slice %95 {offsets = [0, 0], sizes = [8, 128], strides = [1, 1]} : vector<8x384xf32> to vector<8x128xf32>
        %97 = vector.extract_strided_slice %95 {offsets = [0, 128], sizes = [8, 128], strides = [1, 1]} : vector<8x384xf32> to vector<8x128xf32>
        %98 = vector.extract_strided_slice %95 {offsets = [0, 256], sizes = [8, 128], strides = [1, 1]} : vector<8x384xf32> to vector<8x128xf32>
        %99 = vector.extract_strided_slice %89 {offsets = [0, 384], sizes = [8, 128], strides = [1, 1]} : vector<8x512xf32> to vector<8x128xf32>
        %100 = math.tanh %99 : vector<8x128xf32>
        %101 = arith.mulf %97, %75 : vector<8x128xf32>
        %102 = arith.mulf %96, %100 : vector<8x128xf32>
        %103 = arith.addf %101, %102 : vector<8x128xf32>
        %104 = math.tanh %103 : vector<8x128xf32>
        %105 = arith.mulf %98, %104 : vector<8x128xf32>
        %106 = arith.addi %5, %83 : i32
        %107 = vector.broadcast %106 : i32 to vector<8x128xi32>
        %108 = arith.cmpi slt, %107, %39 : vector<8x128xi32>
        %109 = arith.select %108, %105, %74 : vector<8x128xi1>, vector<8x128xf32>
        %110 = arith.select %108, %103, %75 : vector<8x128xi1>, vector<8x128xf32>
        %cst_55 = arith.constant 0.000000e+00 : f32
        %111 = vector.broadcast %cst_55 : f32 to vector<8x128xf32>
        %112 = arith.select %108, %105, %111 : vector<8x128xi1>, vector<8x128xf32>
        %113 = arith.truncf %112 : vector<8x128xf32> to vector<8x128xbf16>
        %c0_56 = arith.constant 0 : index
        %114 = arith.index_cast %83 : i32 to index
        %c0_57 = arith.constant 0 : index
        %c0_58 = arith.constant 0 : index
        %115 = vector.load %arg8[%c0_56, %114, %c0_57, %c0_58] : memref<1x8x8x128xbf16, #tpu.memory_space<vmem>>, vector<1x1x8x128xbf16>
        %116 = vector.shape_cast %115 : vector<1x1x8x128xbf16> to vector<8x128xbf16>
        %117 = vector.shape_cast %113 : vector<8x128xbf16> to vector<1x1x8x128xbf16>
        tpu.vector_store %arg8[%c0_56, %114, %c0_57, %c0_58], %117 {strides = array<i32>} : memref<1x8x8x128xbf16, #tpu.memory_space<vmem>>, vector<1x1x8x128xbf16>,
        %c2_i32 = arith.constant 2 : i32
        %c7_i32_59 = arith.constant 7 : i32
        %118 = arith.subi %c7_i32_59, %c2_i32 : i32
        %119 = arith.index_cast %118 : i32 to index
        %c0_60 = arith.constant 0 : index
        %c0_61 = arith.constant 0 : index
        %120 = vector.load %arg10[%119, %c0_60, %c0_61] : memref<8x8x512xf32, #tpu.memory_space<vmem>>, vector<1x8x512xf32>
        %121 = vector.shape_cast %120 : vector<1x8x512xf32> to vector<8x512xf32>
        %122 = arith.truncf %109 : vector<8x128xf32> to vector<8x128xbf16>
        %cst_62 = arith.constant dense<0.000000e+00> : vector<8x512xf32>
        %123 = tpu.matmul %122, %36, %cst_62 {dimension_numbers = #tpu.dot_dimension_numbers<[1], [0], [0], [1], [0, 0, 1, 1], [], []>} : vector<8x128xbf16>, vector<128x512xbf16>, vector<8x512xf32> -> vector<8x512xf32>
        %124 = arith.addf %121, %123 : vector<8x512xf32>
        %125 = vector.extract_strided_slice %124 {offsets = [0, 0], sizes = [8, 384], strides = [1, 1]} : vector<8x512xf32> to vector<8x384xf32>
        %126 = arith.negf %125 : vector<8x384xf32>
        %127 = math.exp %126 : vector<8x384xf32>
        %cst_63 = arith.constant 1.000000e+00 : f32
        %128 = vector.broadcast %cst_63 : f32 to vector<8x384xf32>
        %129 = arith.addf %128, %127 : vector<8x384xf32>
        %130 = arith.divf %128, %129 : vector<8x384xf32>
        %131 = vector.extract_strided_slice %130 {offsets = [0, 0], sizes = [8, 128], strides = [1, 1]} : vector<8x384xf32> to vector<8x128xf32>
        %132 = vector.extract_strided_slice %130 {offsets = [0, 128], sizes = [8, 128], strides = [1, 1]} : vector<8x384xf32> to vector<8x128xf32>
        %133 = vector.extract_strided_slice %130 {offsets = [0, 256], sizes = [8, 128], strides = [1, 1]} : vector<8x384xf32> to vector<8x128xf32>
        %134 = vector.extract_strided_slice %124 {offsets = [0, 384], sizes = [8, 128], strides = [1, 1]} : vector<8x512xf32> to vector<8x128xf32>
        %135 = math.tanh %134 : vector<8x128xf32>
        %136 = arith.mulf %132, %110 : vector<8x128xf32>
        %137 = arith.mulf %131, %135 : vector<8x128xf32>
        %138 = arith.addf %136, %137 : vector<8x128xf32>
        %139 = math.tanh %138 : vector<8x128xf32>
        %140 = arith.mulf %133, %139 : vector<8x128xf32>
        %141 = arith.addi %5, %118 : i32
        %142 = vector.broadcast %141 : i32 to vector<8x128xi32>
        %143 = arith.cmpi slt, %142, %39 : vector<8x128xi32>
        %144 = arith.select %143, %140, %109 : vector<8x128xi1>, vector<8x128xf32>
        %145 = arith.select %143, %138, %110 : vector<8x128xi1>, vector<8x128xf32>
        %cst_64 = arith.constant 0.000000e+00 : f32
        %146 = vector.broadcast %cst_64 : f32 to vector<8x128xf32>
        %147 = arith.select %143, %140, %146 : vector<8x128xi1>, vector<8x128xf32>
        %148 = arith.truncf %147 : vector<8x128xf32> to vector<8x128xbf16>
        %c0_65 = arith.constant 0 : index
        %149 = arith.index_cast %118 : i32 to index
        %c0_66 = arith.constant 0 : index
        %c0_67 = arith.constant 0 : index
        %150 = vector.load %arg8[%c0_65, %149, %c0_66, %c0_67] : memref<1x8x8x128xbf16, #tpu.memory_space<vmem>>, vector<1x1x8x128xbf16>
        %151 = vector.shape_cast %150 : vector<1x1x8x128xbf16> to vector<8x128xbf16>
        %152 = vector.shape_cast %148 : vector<8x128xbf16> to vector<1x1x8x128xbf16>
        tpu.vector_store %arg8[%c0_65, %149, %c0_66, %c0_67], %152 {strides = array<i32>} : memref<1x8x8x128xbf16, #tpu.memory_space<vmem>>, vector<1x1x8x128xbf16>,
        %c3_i32 = arith.constant 3 : i32
        %c7_i32_68 = arith.constant 7 : i32
        %153 = arith.subi %c7_i32_68, %c3_i32 : i32
        %154 = arith.index_cast %153 : i32 to index
        %c0_69 = arith.constant 0 : index
        %c0_70 = arith.constant 0 : index
        %155 = vector.load %arg10[%154, %c0_69, %c0_70] : memref<8x8x512xf32, #tpu.memory_space<vmem>>, vector<1x8x512xf32>
        %156 = vector.shape_cast %155 : vector<1x8x512xf32> to vector<8x512xf32>
        %157 = arith.truncf %144 : vector<8x128xf32> to vector<8x128xbf16>
        %cst_71 = arith.constant dense<0.000000e+00> : vector<8x512xf32>
        %158 = tpu.matmul %157, %36, %cst_71 {dimension_numbers = #tpu.dot_dimension_numbers<[1], [0], [0], [1], [0, 0, 1, 1], [], []>} : vector<8x128xbf16>, vector<128x512xbf16>, vector<8x512xf32> -> vector<8x512xf32>
        %159 = arith.addf %156, %158 : vector<8x512xf32>
        %160 = vector.extract_strided_slice %159 {offsets = [0, 0], sizes = [8, 384], strides = [1, 1]} : vector<8x512xf32> to vector<8x384xf32>
        %161 = arith.negf %160 : vector<8x384xf32>
        %162 = math.exp %161 : vector<8x384xf32>
        %cst_72 = arith.constant 1.000000e+00 : f32
        %163 = vector.broadcast %cst_72 : f32 to vector<8x384xf32>
        %164 = arith.addf %163, %162 : vector<8x384xf32>
        %165 = arith.divf %163, %164 : vector<8x384xf32>
        %166 = vector.extract_strided_slice %165 {offsets = [0, 0], sizes = [8, 128], strides = [1, 1]} : vector<8x384xf32> to vector<8x128xf32>
        %167 = vector.extract_strided_slice %165 {offsets = [0, 128], sizes = [8, 128], strides = [1, 1]} : vector<8x384xf32> to vector<8x128xf32>
        %168 = vector.extract_strided_slice %165 {offsets = [0, 256], sizes = [8, 128], strides = [1, 1]} : vector<8x384xf32> to vector<8x128xf32>
        %169 = vector.extract_strided_slice %159 {offsets = [0, 384], sizes = [8, 128], strides = [1, 1]} : vector<8x512xf32> to vector<8x128xf32>
        %170 = math.tanh %169 : vector<8x128xf32>
        %171 = arith.mulf %167, %145 : vector<8x128xf32>
        %172 = arith.mulf %166, %170 : vector<8x128xf32>
        %173 = arith.addf %171, %172 : vector<8x128xf32>
        %174 = math.tanh %173 : vector<8x128xf32>
        %175 = arith.mulf %168, %174 : vector<8x128xf32>
        %176 = arith.addi %5, %153 : i32
        %177 = vector.broadcast %176 : i32 to vector<8x128xi32>
        %178 = arith.cmpi slt, %177, %39 : vector<8x128xi32>
        %179 = arith.select %178, %175, %144 : vector<8x128xi1>, vector<8x128xf32>
        %180 = arith.select %178, %173, %145 : vector<8x128xi1>, vector<8x128xf32>
        %cst_73 = arith.constant 0.000000e+00 : f32
        %181 = vector.broadcast %cst_73 : f32 to vector<8x128xf32>
        %182 = arith.select %178, %175, %181 : vector<8x128xi1>, vector<8x128xf32>
        %183 = arith.truncf %182 : vector<8x128xf32> to vector<8x128xbf16>
        %c0_74 = arith.constant 0 : index
        %184 = arith.index_cast %153 : i32 to index
        %c0_75 = arith.constant 0 : index
        %c0_76 = arith.constant 0 : index
        %185 = vector.load %arg8[%c0_74, %184, %c0_75, %c0_76] : memref<1x8x8x128xbf16, #tpu.memory_space<vmem>>, vector<1x1x8x128xbf16>
        %186 = vector.shape_cast %185 : vector<1x1x8x128xbf16> to vector<8x128xbf16>
        %187 = vector.shape_cast %183 : vector<8x128xbf16> to vector<1x1x8x128xbf16>
        tpu.vector_store %arg8[%c0_74, %184, %c0_75, %c0_76], %187 {strides = array<i32>} : memref<1x8x8x128xbf16, #tpu.memory_space<vmem>>, vector<1x1x8x128xbf16>,
        %c4_i32 = arith.constant 4 : i32
        %c7_i32_77 = arith.constant 7 : i32
        %188 = arith.subi %c7_i32_77, %c4_i32 : i32
        %189 = arith.index_cast %188 : i32 to index
        %c0_78 = arith.constant 0 : index
        %c0_79 = arith.constant 0 : index
        %190 = vector.load %arg10[%189, %c0_78, %c0_79] : memref<8x8x512xf32, #tpu.memory_space<vmem>>, vector<1x8x512xf32>
        %191 = vector.shape_cast %190 : vector<1x8x512xf32> to vector<8x512xf32>
        %192 = arith.truncf %179 : vector<8x128xf32> to vector<8x128xbf16>
        %cst_80 = arith.constant dense<0.000000e+00> : vector<8x512xf32>
        %193 = tpu.matmul %192, %36, %cst_80 {dimension_numbers = #tpu.dot_dimension_numbers<[1], [0], [0], [1], [0, 0, 1, 1], [], []>} : vector<8x128xbf16>, vector<128x512xbf16>, vector<8x512xf32> -> vector<8x512xf32>
        %194 = arith.addf %191, %193 : vector<8x512xf32>
        %195 = vector.extract_strided_slice %194 {offsets = [0, 0], sizes = [8, 384], strides = [1, 1]} : vector<8x512xf32> to vector<8x384xf32>
        %196 = arith.negf %195 : vector<8x384xf32>
        %197 = math.exp %196 : vector<8x384xf32>
        %cst_81 = arith.constant 1.000000e+00 : f32
        %198 = vector.broadcast %cst_81 : f32 to vector<8x384xf32>
        %199 = arith.addf %198, %197 : vector<8x384xf32>
        %200 = arith.divf %198, %199 : vector<8x384xf32>
        %201 = vector.extract_strided_slice %200 {offsets = [0, 0], sizes = [8, 128], strides = [1, 1]} : vector<8x384xf32> to vector<8x128xf32>
        %202 = vector.extract_strided_slice %200 {offsets = [0, 128], sizes = [8, 128], strides = [1, 1]} : vector<8x384xf32> to vector<8x128xf32>
        %203 = vector.extract_strided_slice %200 {offsets = [0, 256], sizes = [8, 128], strides = [1, 1]} : vector<8x384xf32> to vector<8x128xf32>
        %204 = vector.extract_strided_slice %194 {offsets = [0, 384], sizes = [8, 128], strides = [1, 1]} : vector<8x512xf32> to vector<8x128xf32>
        %205 = math.tanh %204 : vector<8x128xf32>
        %206 = arith.mulf %202, %180 : vector<8x128xf32>
        %207 = arith.mulf %201, %205 : vector<8x128xf32>
        %208 = arith.addf %206, %207 : vector<8x128xf32>
        %209 = math.tanh %208 : vector<8x128xf32>
        %210 = arith.mulf %203, %209 : vector<8x128xf32>
        %211 = arith.addi %5, %188 : i32
        %212 = vector.broadcast %211 : i32 to vector<8x128xi32>
        %213 = arith.cmpi slt, %212, %39 : vector<8x128xi32>
        %214 = arith.select %213, %210, %179 : vector<8x128xi1>, vector<8x128xf32>
        %215 = arith.select %213, %208, %180 : vector<8x128xi1>, vector<8x128xf32>
        %cst_82 = arith.constant 0.000000e+00 : f32
        %216 = vector.broadcast %cst_82 : f32 to vector<8x128xf32>
        %217 = arith.select %213, %210, %216 : vector<8x128xi1>, vector<8x128xf32>
        %218 = arith.truncf %217 : vector<8x128xf32> to vector<8x128xbf16>
        %c0_83 = arith.constant 0 : index
        %219 = arith.index_cast %188 : i32 to index
        %c0_84 = arith.constant 0 : index
        %c0_85 = arith.constant 0 : index
        %220 = vector.load %arg8[%c0_83, %219, %c0_84, %c0_85] : memref<1x8x8x128xbf16, #tpu.memory_space<vmem>>, vector<1x1x8x128xbf16>
        %221 = vector.shape_cast %220 : vector<1x1x8x128xbf16> to vector<8x128xbf16>
        %222 = vector.shape_cast %218 : vector<8x128xbf16> to vector<1x1x8x128xbf16>
        tpu.vector_store %arg8[%c0_83, %219, %c0_84, %c0_85], %222 {strides = array<i32>} : memref<1x8x8x128xbf16, #tpu.memory_space<vmem>>, vector<1x1x8x128xbf16>,
        %c5_i32 = arith.constant 5 : i32
        %c7_i32_86 = arith.constant 7 : i32
        %223 = arith.subi %c7_i32_86, %c5_i32 : i32
        %224 = arith.index_cast %223 : i32 to index
        %c0_87 = arith.constant 0 : index
        %c0_88 = arith.constant 0 : index
        %225 = vector.load %arg10[%224, %c0_87, %c0_88] : memref<8x8x512xf32, #tpu.memory_space<vmem>>, vector<1x8x512xf32>
        %226 = vector.shape_cast %225 : vector<1x8x512xf32> to vector<8x512xf32>
        %227 = arith.truncf %214 : vector<8x128xf32> to vector<8x128xbf16>
        %cst_89 = arith.constant dense<0.000000e+00> : vector<8x512xf32>
        %228 = tpu.matmul %227, %36, %cst_89 {dimension_numbers = #tpu.dot_dimension_numbers<[1], [0], [0], [1], [0, 0, 1, 1], [], []>} : vector<8x128xbf16>, vector<128x512xbf16>, vector<8x512xf32> -> vector<8x512xf32>
        %229 = arith.addf %226, %228 : vector<8x512xf32>
        %230 = vector.extract_strided_slice %229 {offsets = [0, 0], sizes = [8, 384], strides = [1, 1]} : vector<8x512xf32> to vector<8x384xf32>
        %231 = arith.negf %230 : vector<8x384xf32>
        %232 = math.exp %231 : vector<8x384xf32>
        %cst_90 = arith.constant 1.000000e+00 : f32
        %233 = vector.broadcast %cst_90 : f32 to vector<8x384xf32>
        %234 = arith.addf %233, %232 : vector<8x384xf32>
        %235 = arith.divf %233, %234 : vector<8x384xf32>
        %236 = vector.extract_strided_slice %235 {offsets = [0, 0], sizes = [8, 128], strides = [1, 1]} : vector<8x384xf32> to vector<8x128xf32>
        %237 = vector.extract_strided_slice %235 {offsets = [0, 128], sizes = [8, 128], strides = [1, 1]} : vector<8x384xf32> to vector<8x128xf32>
        %238 = vector.extract_strided_slice %235 {offsets = [0, 256], sizes = [8, 128], strides = [1, 1]} : vector<8x384xf32> to vector<8x128xf32>
        %239 = vector.extract_strided_slice %229 {offsets = [0, 384], sizes = [8, 128], strides = [1, 1]} : vector<8x512xf32> to vector<8x128xf32>
        %240 = math.tanh %239 : vector<8x128xf32>
        %241 = arith.mulf %237, %215 : vector<8x128xf32>
        %242 = arith.mulf %236, %240 : vector<8x128xf32>
        %243 = arith.addf %241, %242 : vector<8x128xf32>
        %244 = math.tanh %243 : vector<8x128xf32>
        %245 = arith.mulf %238, %244 : vector<8x128xf32>
        %246 = arith.addi %5, %223 : i32
        %247 = vector.broadcast %246 : i32 to vector<8x128xi32>
        %248 = arith.cmpi slt, %247, %39 : vector<8x128xi32>
        %249 = arith.select %248, %245, %214 : vector<8x128xi1>, vector<8x128xf32>
        %250 = arith.select %248, %243, %215 : vector<8x128xi1>, vector<8x128xf32>
        %cst_91 = arith.constant 0.000000e+00 : f32
        %251 = vector.broadcast %cst_91 : f32 to vector<8x128xf32>
        %252 = arith.select %248, %245, %251 : vector<8x128xi1>, vector<8x128xf32>
        %253 = arith.truncf %252 : vector<8x128xf32> to vector<8x128xbf16>
        %c0_92 = arith.constant 0 : index
        %254 = arith.index_cast %223 : i32 to index
        %c0_93 = arith.constant 0 : index
        %c0_94 = arith.constant 0 : index
        %255 = vector.load %arg8[%c0_92, %254, %c0_93, %c0_94] : memref<1x8x8x128xbf16, #tpu.memory_space<vmem>>, vector<1x1x8x128xbf16>
        %256 = vector.shape_cast %255 : vector<1x1x8x128xbf16> to vector<8x128xbf16>
        %257 = vector.shape_cast %253 : vector<8x128xbf16> to vector<1x1x8x128xbf16>
        tpu.vector_store %arg8[%c0_92, %254, %c0_93, %c0_94], %257 {strides = array<i32>} : memref<1x8x8x128xbf16, #tpu.memory_space<vmem>>, vector<1x1x8x128xbf16>,
        %c6_i32 = arith.constant 6 : i32
        %c7_i32_95 = arith.constant 7 : i32
        %258 = arith.subi %c7_i32_95, %c6_i32 : i32
        %259 = arith.index_cast %258 : i32 to index
        %c0_96 = arith.constant 0 : index
        %c0_97 = arith.constant 0 : index
        %260 = vector.load %arg10[%259, %c0_96, %c0_97] : memref<8x8x512xf32, #tpu.memory_space<vmem>>, vector<1x8x512xf32>
        %261 = vector.shape_cast %260 : vector<1x8x512xf32> to vector<8x512xf32>
        %262 = arith.truncf %249 : vector<8x128xf32> to vector<8x128xbf16>
        %cst_98 = arith.constant dense<0.000000e+00> : vector<8x512xf32>
        %263 = tpu.matmul %262, %36, %cst_98 {dimension_numbers = #tpu.dot_dimension_numbers<[1], [0], [0], [1], [0, 0, 1, 1], [], []>} : vector<8x128xbf16>, vector<128x512xbf16>, vector<8x512xf32> -> vector<8x512xf32>
        %264 = arith.addf %261, %263 : vector<8x512xf32>
        %265 = vector.extract_strided_slice %264 {offsets = [0, 0], sizes = [8, 384], strides = [1, 1]} : vector<8x512xf32> to vector<8x384xf32>
        %266 = arith.negf %265 : vector<8x384xf32>
        %267 = math.exp %266 : vector<8x384xf32>
        %cst_99 = arith.constant 1.000000e+00 : f32
        %268 = vector.broadcast %cst_99 : f32 to vector<8x384xf32>
        %269 = arith.addf %268, %267 : vector<8x384xf32>
        %270 = arith.divf %268, %269 : vector<8x384xf32>
        %271 = vector.extract_strided_slice %270 {offsets = [0, 0], sizes = [8, 128], strides = [1, 1]} : vector<8x384xf32> to vector<8x128xf32>
        %272 = vector.extract_strided_slice %270 {offsets = [0, 128], sizes = [8, 128], strides = [1, 1]} : vector<8x384xf32> to vector<8x128xf32>
        %273 = vector.extract_strided_slice %270 {offsets = [0, 256], sizes = [8, 128], strides = [1, 1]} : vector<8x384xf32> to vector<8x128xf32>
        %274 = vector.extract_strided_slice %264 {offsets = [0, 384], sizes = [8, 128], strides = [1, 1]} : vector<8x512xf32> to vector<8x128xf32>
        %275 = math.tanh %274 : vector<8x128xf32>
        %276 = arith.mulf %272, %250 : vector<8x128xf32>
        %277 = arith.mulf %271, %275 : vector<8x128xf32>
        %278 = arith.addf %276, %277 : vector<8x128xf32>
        %279 = math.tanh %278 : vector<8x128xf32>
        %280 = arith.mulf %273, %279 : vector<8x128xf32>
        %281 = arith.addi %5, %258 : i32
        %282 = vector.broadcast %281 : i32 to vector<8x128xi32>
        %283 = arith.cmpi slt, %282, %39 : vector<8x128xi32>
        %284 = arith.select %283, %280, %249 : vector<8x128xi1>, vector<8x128xf32>
        %285 = arith.select %283, %278, %250 : vector<8x128xi1>, vector<8x128xf32>
        %cst_100 = arith.constant 0.000000e+00 : f32
        %286 = vector.broadcast %cst_100 : f32 to vector<8x128xf32>
        %287 = arith.select %283, %280, %286 : vector<8x128xi1>, vector<8x128xf32>
        %288 = arith.truncf %287 : vector<8x128xf32> to vector<8x128xbf16>
        %c0_101 = arith.constant 0 : index
        %289 = arith.index_cast %258 : i32 to index
        %c0_102 = arith.constant 0 : index
        %c0_103 = arith.constant 0 : index
        %290 = vector.load %arg8[%c0_101, %289, %c0_102, %c0_103] : memref<1x8x8x128xbf16, #tpu.memory_space<vmem>>, vector<1x1x8x128xbf16>
        %291 = vector.shape_cast %290 : vector<1x1x8x128xbf16> to vector<8x128xbf16>
        %292 = vector.shape_cast %288 : vector<8x128xbf16> to vector<1x1x8x128xbf16>
        tpu.vector_store %arg8[%c0_101, %289, %c0_102, %c0_103], %292 {strides = array<i32>} : memref<1x8x8x128xbf16, #tpu.memory_space<vmem>>, vector<1x1x8x128xbf16>,
        %c7_i32_104 = arith.constant 7 : i32
        %c7_i32_105 = arith.constant 7 : i32
        %293 = arith.subi %c7_i32_105, %c7_i32_104 : i32
        %294 = arith.index_cast %293 : i32 to index
        %c0_106 = arith.constant 0 : index
        %c0_107 = arith.constant 0 : index
        %295 = vector.load %arg10[%294, %c0_106, %c0_107] : memref<8x8x512xf32, #tpu.memory_space<vmem>>, vector<1x8x512xf32>
        %296 = vector.shape_cast %295 : vector<1x8x512xf32> to vector<8x512xf32>
        %297 = arith.truncf %284 : vector<8x128xf32> to vector<8x128xbf16>
        %cst_108 = arith.constant dense<0.000000e+00> : vector<8x512xf32>
        %298 = tpu.matmul %297, %36, %cst_108 {dimension_numbers = #tpu.dot_dimension_numbers<[1], [0], [0], [1], [0, 0, 1, 1], [], []>} : vector<8x128xbf16>, vector<128x512xbf16>, vector<8x512xf32> -> vector<8x512xf32>
        %299 = arith.addf %296, %298 : vector<8x512xf32>
        %300 = vector.extract_strided_slice %299 {offsets = [0, 0], sizes = [8, 384], strides = [1, 1]} : vector<8x512xf32> to vector<8x384xf32>
        %301 = arith.negf %300 : vector<8x384xf32>
        %302 = math.exp %301 : vector<8x384xf32>
        %cst_109 = arith.constant 1.000000e+00 : f32
        %303 = vector.broadcast %cst_109 : f32 to vector<8x384xf32>
        %304 = arith.addf %303, %302 : vector<8x384xf32>
        %305 = arith.divf %303, %304 : vector<8x384xf32>
        %306 = vector.extract_strided_slice %305 {offsets = [0, 0], sizes = [8, 128], strides = [1, 1]} : vector<8x384xf32> to vector<8x128xf32>
        %307 = vector.extract_strided_slice %305 {offsets = [0, 128], sizes = [8, 128], strides = [1, 1]} : vector<8x384xf32> to vector<8x128xf32>
        %308 = vector.extract_strided_slice %305 {offsets = [0, 256], sizes = [8, 128], strides = [1, 1]} : vector<8x384xf32> to vector<8x128xf32>
        %309 = vector.extract_strided_slice %299 {offsets = [0, 384], sizes = [8, 128], strides = [1, 1]} : vector<8x512xf32> to vector<8x128xf32>
        %310 = math.tanh %309 : vector<8x128xf32>
        %311 = arith.mulf %307, %285 : vector<8x128xf32>
        %312 = arith.mulf %306, %310 : vector<8x128xf32>
        %313 = arith.addf %311, %312 : vector<8x128xf32>
        %314 = math.tanh %313 : vector<8x128xf32>
        %315 = arith.mulf %308, %314 : vector<8x128xf32>
        %316 = arith.addi %5, %293 : i32
        %317 = vector.broadcast %316 : i32 to vector<8x128xi32>
        %318 = arith.cmpi slt, %317, %39 : vector<8x128xi32>
        %319 = arith.select %318, %315, %284 : vector<8x128xi1>, vector<8x128xf32>
        %320 = arith.select %318, %313, %285 : vector<8x128xi1>, vector<8x128xf32>
        %cst_110 = arith.constant 0.000000e+00 : f32
        %321 = vector.broadcast %cst_110 : f32 to vector<8x128xf32>
        %322 = arith.select %318, %315, %321 : vector<8x128xi1>, vector<8x128xf32>
        %323 = arith.truncf %322 : vector<8x128xf32> to vector<8x128xbf16>
        %c0_111 = arith.constant 0 : index
        %324 = arith.index_cast %293 : i32 to index
        %c0_112 = arith.constant 0 : index
        %c0_113 = arith.constant 0 : index
        %325 = vector.load %arg8[%c0_111, %324, %c0_112, %c0_113] : memref<1x8x8x128xbf16, #tpu.memory_space<vmem>>, vector<1x1x8x128xbf16>
        %326 = vector.shape_cast %325 : vector<1x1x8x128xbf16> to vector<8x128xbf16>
        %327 = vector.shape_cast %323 : vector<8x128xbf16> to vector<1x1x8x128xbf16>
        tpu.vector_store %arg8[%c0_111, %324, %c0_112, %c0_113], %327 {strides = array<i32>} : memref<1x8x8x128xbf16, #tpu.memory_space<vmem>>, vector<1x1x8x128xbf16>,
        %c8_i32_114 = arith.constant 8 : i32
        %c0_115 = arith.constant 0 : index
        %c0_116 = arith.constant 0 : index
        %328 = vector.load %arg11[%c0_115, %c0_116] : memref<8x128xf32, #tpu.memory_space<vmem>>, vector<8x128xf32>
        tpu.vector_store %arg11[%c0_115, %c0_116], %319 {strides = array<i32>} : memref<8x128xf32, #tpu.memory_space<vmem>>, vector<8x128xf32>,
        %c0_117 = arith.constant 0 : index
        %c0_118 = arith.constant 0 : index
        %329 = vector.load %arg12[%c0_117, %c0_118] : memref<8x128xf32, #tpu.memory_space<vmem>>, vector<8x128xf32>
        tpu.vector_store %arg12[%c0_117, %c0_118], %320 {strides = array<i32>} : memref<8x128xf32, #tpu.memory_space<vmem>>, vector<8x128xf32>,
      } else {
      }
    } else {
    }
    %true = arith.constant true
    %13 = arith.xori %10, %true : i1
    %14 = arith.extui %13 : i1 to i32
    %c0_i32_3 = arith.constant 0 : i32
    %15 = arith.cmpi ne, %14, %c0_i32_3 : i32
    scf.if %15 {
      %cst = arith.constant 0.000000e+00 : bf16
      %24 = vector.broadcast %cst : bf16 to vector<8x8x128xbf16>
      %c0_15 = arith.constant 0 : index
      %c0_16 = arith.constant 0 : index
      %c0_17 = arith.constant 0 : index
      %c0_18 = arith.constant 0 : index
      %25 = vector.load %arg8[%c0_15, %c0_16, %c0_17, %c0_18] : memref<1x8x8x128xbf16, #tpu.memory_space<vmem>>, vector<1x8x8x128xbf16>
      %26 = vector.shape_cast %25 : vector<1x8x8x128xbf16> to vector<8x8x128xbf16>
      %27 = vector.shape_cast %24 : vector<8x8x128xbf16> to vector<1x8x8x128xbf16>
      tpu.vector_store %arg8[%c0_15, %c0_16, %c0_17, %c0_18], %27 {strides = array<i32>} : memref<1x8x8x128xbf16, #tpu.memory_space<vmem>>, vector<1x8x8x128xbf16>,
    } else {
    }
    %c0_4 = arith.constant 0 : index
    %c0_5 = arith.constant 0 : index
    %16 = vector.load %arg11[%c0_4, %c0_5] : memref<8x128xf32, #tpu.memory_space<vmem>>, vector<8x128xf32>
    %c0_6 = arith.constant 0 : index
    %c0_7 = arith.constant 0 : index
    %c0_8 = arith.constant 0 : index
    %c0_9 = arith.constant 0 : index
    %17 = vector.load %arg9[%c0_6, %c0_7, %c0_8, %c0_9] : memref<1x2x8x128xf32, #tpu.memory_space<vmem>>, vector<1x1x8x128xf32>
    %18 = vector.shape_cast %17 : vector<1x1x8x128xf32> to vector<8x128xf32>
    %19 = vector.shape_cast %16 : vector<8x128xf32> to vector<1x1x8x128xf32>
    tpu.vector_store %arg9[%c0_6, %c0_7, %c0_8, %c0_9], %19 {strides = array<i32>} : memref<1x2x8x128xf32, #tpu.memory_space<vmem>>, vector<1x1x8x128xf32>,
    %c0_10 = arith.constant 0 : index
    %c0_11 = arith.constant 0 : index
    %20 = vector.load %arg12[%c0_10, %c0_11] : memref<8x128xf32, #tpu.memory_space<vmem>>, vector<8x128xf32>
    %c0_12 = arith.constant 0 : index
    %c1 = arith.constant 1 : index
    %c0_13 = arith.constant 0 : index
    %c0_14 = arith.constant 0 : index
    %21 = vector.load %arg9[%c0_12, %c1, %c0_13, %c0_14] : memref<1x2x8x128xf32, #tpu.memory_space<vmem>>, vector<1x1x8x128xf32>
    %22 = vector.shape_cast %21 : vector<1x1x8x128xf32> to vector<8x128xf32>
    %23 = vector.shape_cast %20 : vector<8x128xf32> to vector<1x1x8x128xf32>
    tpu.vector_store %arg9[%c0_12, %c1, %c0_13, %c0_14], %23 {strides = array<i32>} : memref<1x2x8x128xf32, #tpu.memory_space<vmem>>, vector<1x1x8x128xf32>,
    return
  }
  func.func @transform_0(%arg0: i32, %arg1: i32, %arg2: memref<1xi32, #tpu.memory_space<smem>>) -> (i32, i32, i32) {
    %c1_i32 = arith.constant 1 : i32
    %0 = arith.subi %c1_i32, %arg0 : i32
    %1 = arith.muli %0, %arg1 : i32
    %c0_i32 = arith.constant 0 : i32
    %2 = arith.subi %c0_i32, %arg1 : i32
    %3 = arith.muli %arg0, %2 : i32
    %4 = arith.addi %1, %3 : i32
    %c0_i32_0 = arith.constant 0 : i32
    %c0_i32_1 = arith.constant 0 : i32
    %c0_i32_2 = arith.constant 0 : i32
    return %4, %c0_i32_0, %c0_i32_1 : i32, i32, i32
  }
  func.func @transform_1(%arg0: i32, %arg1: i32, %arg2: memref<1xi32, #tpu.memory_space<smem>>) -> (i32, i32) {
    %c0_i32 = arith.constant 0 : i32
    %c0_i32_0 = arith.constant 0 : i32
    %c0_i32_1 = arith.constant 0 : i32
    return %c0_i32, %c0_i32_0 : i32, i32
  }
  func.func @transform_2(%arg0: i32, %arg1: i32, %arg2: memref<1xi32, #tpu.memory_space<smem>>) -> (i32, i32, i32) {
    %c0_i32 = arith.constant 0 : i32
    %c0_i32_0 = arith.constant 0 : i32
    %c0_i32_1 = arith.constant 0 : i32
    return %arg0, %c0_i32, %c0_i32_0 : i32, i32, i32
  }
  func.func @transform_3(%arg0: i32, %arg1: i32, %arg2: memref<1xi32, #tpu.memory_space<smem>>) -> (i32, i32, i32) {
    %c0_i32 = arith.constant 0 : i32
    %c0_i32_0 = arith.constant 0 : i32
    %c0_i32_1 = arith.constant 0 : i32
    return %arg0, %c0_i32, %c0_i32_0 : i32, i32, i32
  }
  func.func @transform_4(%arg0: i32, %arg1: i32, %arg2: memref<1xi32, #tpu.memory_space<smem>>) -> (i32, i32, i32) {
    %c0_i32 = arith.constant 0 : i32
    %c0_i32_0 = arith.constant 0 : i32
    %c0_i32_1 = arith.constant 0 : i32
    return %arg0, %c0_i32, %c0_i32_0 : i32, i32, i32
  }
  func.func @transform_5(%arg0: i32, %arg1: i32, %arg2: memref<1xi32, #tpu.memory_space<smem>>) -> (i32, i32, i32, i32) {
    %c1_i32 = arith.constant 1 : i32
    %0 = arith.subi %c1_i32, %arg0 : i32
    %1 = arith.muli %0, %arg1 : i32
    %c0_i32 = arith.constant 0 : i32
    %2 = arith.subi %c0_i32, %arg1 : i32
    %3 = arith.muli %arg0, %2 : i32
    %4 = arith.addi %1, %3 : i32
    %c0_i32_0 = arith.constant 0 : i32
    %c0_i32_1 = arith.constant 0 : i32
    %c0_i32_2 = arith.constant 0 : i32
    return %arg0, %4, %c0_i32_0, %c0_i32_1 : i32, i32, i32, i32
  }
  func.func @transform_6(%arg0: i32, %arg1: i32, %arg2: memref<1xi32, #tpu.memory_space<smem>>) -> (i32, i32, i32, i32) {
    %c0_i32 = arith.constant 0 : i32
    %c0_i32_0 = arith.constant 0 : i32
    %c0_i32_1 = arith.constant 0 : i32
    %c0_i32_2 = arith.constant 0 : i32
    return %arg0, %c0_i32, %c0_i32_0, %c0_i32_1 : i32, i32, i32, i32
  }
}

</mosaic_0001>

<llo_original>
// kernel: _sent_encoder_forward.1
$region0: #{_sent_encoder_forward.1}
  #allocation0 [shape = 'u32[]', space=smem, size = 0x4, offset = 0x4, fixed_abs, tag = 'smem constant byte address 0x4 - core index']
  #allocation1 [shape = 'u32[144,128]{1,0:T(1,128)}', space=vmem, size = 0x12000, scoped, tag = 'internal scratch']
  #allocation2 [shape = 'f32[8,8,512]{2,1,0:T(8,128)}', space=vmem, size = 0x20000, scoped, tag = 'scratch operand']
  #allocation3 [shape = 'f32[8,128]{1,0:T(8,128)}', space=vmem, size = 0x1000, scoped, tag = 'scratch operand']
  #allocation4 [shape = 'f32[8,128]{1,0:T(8,128)}', space=vmem, size = 0x1000, scoped, tag = 'scratch operand']
  #allocation5 [shape = 's32[1]{0}', space=sflag, size = 0x4, scoped, tag = 'scoped memory for _sent_encoder_forward.1']
  #allocation6 [shape = 's32[1]{0:T(128)S(6)}', space=smem, size = 0x200, scoped, tag = 'prefetched SMEM operand 0']
  %s0 = inlined_call_operand.<no memory space> [shape: s32[1], index: 0, kind: input, shape index: {}]
  %s1 = inlined_call_operand.vmem [shape: bf16[8,8,32], index: 1, kind: input, shape index: {}]
  %s2 = inlined_call_operand.vmem [shape: s32[8,1], index: 2, kind: input, shape index: {}]
  %s3 = inlined_call_operand.vmem [shape: bf16[2,32,512], index: 3, kind: input, shape index: {}]
  %s4 = inlined_call_operand.hbm [shape: bf16[2,128,512], index: 4, kind: input, shape index: {}]
  %s5 = inlined_call_operand.vmem [shape: f32[2,1,512], index: 5, kind: input, shape index: {}]
  %s6 = inlined_call_operand.vmem [shape: bf16[2,8,8,128], index: 6, kind: output, shape index: {0}]
  %s7 = inlined_call_operand.vmem [shape: f32[2,2,8,128], index: 7, kind: output, shape index: {1}]
  %8 = xla_tuple %s6, %s7
  %s9 = sld [smem:[#allocation0]]
  $region85: #{_sent_encoder_forward.1} parent=0
    _
  %s11 = ssub.s32 1, %s9
  %s12 = scalar_select 0, %s11, %s9
  %13 = sst [smem:[#allocation6]] %s0
  $region1: #{_sent_encoder_forward.1} parent=0
    #allocation7 [shape = 'u8[262144]{0}', space=vmem, size = 0x40000, scoped, tag = 'input window, operand 4']
    #allocation8 [shape = 's32[2]{0}', space=sflag, size = 0x8, scoped, tag = 'scoped memory for _sent_encoder_forward.1']
    %14 = vsyncpa [#allocation8], 0
    %s15 = scalar_lea.sflag [#allocation8], 1
    %16 = vsyncpa %s15, 0
    loop: start=0, step=1, limit=4
    $region2: #{_sent_encoder_forward.1} parent=1 // loop_pre_header
      _
    $region3: #{_sent_encoder_forward.1} parent=1 // loop_header
      %s18 = sphi 0, %s22
      %p19 = scmp.ge.s32.totalorder %s18, 4
      %s25 = sphi 0, %s37
      %s26 = sphi 0, %s33
      %s27 = sphi 0, %s25
      %s28 = sphi 0, %s26
      %s29 = sphi 0, %s27
      %s30 = sphi 0, %s28
      %s50 = sphi 0, %s52
      %s53 = sphi 0, %s50
      %s54 = sphi 0, %s53
      %s70 = sphi 0, %s54
      %s74 = sphi 0, %s74
      %s76 = sphi 0, %s74
      %s77 = sphi 0, %s76
      %s91 = sphi 0, %s77
      %s97 = sphi 0, %s99
      %s100 = sphi 0, %s97
      %s101 = sphi 0, %s100
      %s117 = sphi 0, %s101
      %s123 = sphi 0, %s125
      %s126 = sphi 0, %s123
      %s127 = sphi 0, %s126
      %s143 = sphi 0, %s127
      %s149 = sphi 0, %s151
      %s152 = sphi 0, %s149
      %s153 = sphi 0, %s152
      %s169 = sphi 0, %s153
      %s187 = sphi 0, %s189
      %s190 = sphi 0, %s187
      %s191 = sphi 0, %s190
      %s207 = sphi 0, %s191
      %s213 = sphi 0, %s215
      %s216 = sphi 0, %s213
      %s217 = sphi 0, %s216
      %s233 = sphi 0, %s217
    $region4: #{_sent_encoder_forward.1} parent=1 // loop_header_branch
      %21 = sbr.rel (%p19) target = $region8
    $region5: #{_sent_encoder_forward.1} parent=1 // loop_body
      %s23 = ssub.s32 %s18, 1
      %s24 = ssub.s32 %s18, 2
      %s31 = sadd.s32 1, %s26
      %p32 = scmp.ge.s32.totalorder %s31, 1
      %s33 = scalar_select %p32, 0, %s31
      %s34 = sadd.s32 1, %s25
      %s35 = scalar_select %p32, %s34, %s25
      %p36 = scmp.ge.s32.totalorder %s35, 2
      %s37 = scalar_select %p36, 0, %s35
      %s38 = ssub.s32 1, %s25
      %s39 = smul.u32 %s38, %s26
      %s40 = ssub.s32 0, %s26
      %s41 = smul.u32 %s25, %s40
      %s42 = sadd.s32 %s39, %s41
      %s43 = ssub.s32 1, %s37
      %s44 = smul.u32 %s43, %s33
      %s45 = ssub.s32 0, %s33
      %s46 = smul.u32 %s37, %s45
      %s47 = sadd.s32 %s44, %s46
      %s48 = ssub.s32 %s42, %s47
      %p49 = scmp.eq.s32.totalorder %s48, 0
      %s51 = sadd.s32 %s50, 1
      %s52 = scalar_select %p49, %s50, %s51
      %p55 = pneg %p49
      %p56 = scmp.eq.s32.totalorder %s18, 1
      %p57 = por %p55, %p56
      %p58 = scmp.ne.s32.totalorder %s50, %s53
      %p59 = scmp.eq.s32.totalorder %s18, 0
      %p60 = por %p58, %p59
      %p61 = scmp.ne.s32.totalorder %s50, %s53
      %p62 = scmp.eq.s32.totalorder %s23, 1
      %p63 = por %p61, %p62
      %p64 = scmp.ne.s32.totalorder %s53, %s54
      %p65 = scmp.eq.s32.totalorder %s23, 0
      %p66 = por %p64, %p65
      %p67 = scmp.ne.s32.totalorder %s53, %s54
      %p68 = scmp.eq.s32.totalorder %s24, 1
      %p69 = por %p67, %p68
      %p71 = scmp.ne.s32.totalorder %s54, %s70
      %p72 = scmp.eq.s32.totalorder %s24, 0
      %p73 = por %p71, %p72
      %s75 = sadd.s32 %s74, 1
      %p78 = scmp.eq.s32.totalorder %s18, 1
      %p79 = scmp.ne.s32.totalorder %s74, %s76
      %p80 = scmp.eq.s32.totalorder %s18, 0
      %p81 = por %p79, %p80
      %p82 = scmp.ne.s32.totalorder %s74, %s76
      %p83 = scmp.eq.s32.totalorder %s23, 1
      %p84 = por %p82, %p83
      %p85 = scmp.ne.s32.totalorder %s76, %s77
      %p86 = scmp.eq.s32.totalorder %s23, 0
      %p87 = por %p85, %p86
      %p88 = scmp.ne.s32.totalorder %s76, %s77
      %p89 = scmp.eq.s32.totalorder %s24, 1
      %p90 = por %p88, %p89
      %p92 = scmp.ne.s32.totalorder %s77, %s91
      %p93 = scmp.eq.s32.totalorder %s24, 0
      %p94 = por %p92, %p93
      %s95 = ssub.s32 %s25, %s37
      %p96 = scmp.eq.s32.totalorder %s95, 0
      %s98 = sadd.s32 %s97, 1
      %s99 = scalar_select %p96, %s97, %s98
      %p102 = pneg %p96
      %p103 = scmp.eq.s32.totalorder %s18, 1
      %p104 = por %p102, %p103
      %p105 = scmp.ne.s32.totalorder %s97, %s100
      %p106 = scmp.eq.s32.totalorder %s18, 0
      %p107 = por %p105, %p106
      %p108 = scmp.ne.s32.totalorder %s97, %s100
      %p109 = scmp.eq.s32.totalorder %s23, 1
      %p110 = por %p108, %p109
      %p111 = scmp.ne.s32.totalorder %s100, %s101
      %p112 = scmp.eq.s32.totalorder %s23, 0
      %p113 = por %p111, %p112
      %p114 = scmp.ne.s32.totalorder %s100, %s101
      %p115 = scmp.eq.s32.totalorder %s24, 1
      %p116 = por %p114, %p115
      %p118 = scmp.ne.s32.totalorder %s101, %s117
      %p119 = scmp.eq.s32.totalorder %s24, 0
      %p120 = por %p118, %p119
      %s121 = ssub.s32 %s25, %s37
      %p122 = scmp.eq.s32.totalorder %s121, 0
      %s124 = sadd.s32 %s123, 1
      %s125 = scalar_select %p122, %s123, %s124
      %p128 = pneg %p122
      %p129 = scmp.eq.s32.totalorder %s18, 1
      %p130 = por %p128, %p129
      %p131 = scmp.ne.s32.totalorder %s123, %s126
      %p132 = scmp.eq.s32.totalorder %s18, 0
      %p133 = por %p131, %p132
      %p134 = scmp.ne.s32.totalorder %s123, %s126
      %p135 = scmp.eq.s32.totalorder %s23, 1
      %p136 = por %p134, %p135
      %p137 = scmp.ne.s32.totalorder %s126, %s127
      %p138 = scmp.eq.s32.totalorder %s23, 0
      %p139 = por %p137, %p138
      %p140 = scmp.ne.s32.totalorder %s126, %s127
      %p141 = scmp.eq.s32.totalorder %s24, 1
      %p142 = por %p140, %p141
      %p144 = scmp.ne.s32.totalorder %s127, %s143
      %p145 = scmp.eq.s32.totalorder %s24, 0
      %p146 = por %p144, %p145
      %s147 = ssub.s32 %s25, %s37
      %p148 = scmp.eq.s32.totalorder %s147, 0
      %s150 = sadd.s32 %s149, 1
      %s151 = scalar_select %p148, %s149, %s150
      %p154 = pneg %p148
      %p155 = scmp.eq.s32.totalorder %s18, 1
      %p156 = por %p154, %p155
      %p157 = scmp.ne.s32.totalorder %s149, %s152
      %p158 = scmp.eq.s32.totalorder %s18, 0
      %p159 = por %p157, %p158
      %p160 = scmp.ne.s32.totalorder %s149, %s152
      %p161 = scmp.eq.s32.totalorder %s23, 1
      %p162 = por %p160, %p161
      %p163 = scmp.ne.s32.totalorder %s152, %s153
      %p164 = scmp.eq.s32.totalorder %s23, 0
      %p165 = por %p163, %p164
      %p166 = scmp.ne.s32.totalorder %s152, %s153
      %p167 = scmp.eq.s32.totalorder %s24, 1
      %p168 = por %p166, %p167
      %p170 = scmp.ne.s32.totalorder %s153, %s169
      %p171 = scmp.eq.s32.totalorder %s24, 0
      %p172 = por %p170, %p171
      %s173 = ssub.s32 1, %s25
      %s174 = smul.u32 %s173, %s26
      %s175 = ssub.s32 0, %s26
      %s176 = smul.u32 %s25, %s175
      %s177 = sadd.s32 %s174, %s176
      %s178 = ssub.s32 1, %s37
      %s179 = smul.u32 %s178, %s33
      %s180 = ssub.s32 0, %s33
      %s181 = smul.u32 %s37, %s180
      %s182 = sadd.s32 %s179, %s181
      %s183 = ssub.s32 %s25, %s37
      %s184 = ssub.s32 %s177, %s182
      %s185 = sor.u32 %s183, %s184
      %p186 = scmp.eq.s32.totalorder %s185, 0
      %s188 = sadd.s32 %s187, 1
      %s189 = scalar_select %p186, %s187, %s188
      %p192 = pneg %p186
      %p193 = scmp.eq.s32.totalorder %s18, 1
      %p194 = por %p192, %p193
      %p195 = scmp.ne.s32.totalorder %s187, %s190
      %p196 = scmp.eq.s32.totalorder %s18, 0
      %p197 = por %p195, %p196
      %p198 = scmp.ne.s32.totalorder %s187, %s190
      %p199 = scmp.eq.s32.totalorder %s23, 1
      %p200 = por %p198, %p199
      %p201 = scmp.ne.s32.totalorder %s190, %s191
      %p202 = scmp.eq.s32.totalorder %s23, 0
      %p203 = por %p201, %p202
      %p204 = scmp.ne.s32.totalorder %s190, %s191
      %p205 = scmp.eq.s32.totalorder %s24, 1
      %p206 = por %p204, %p205
      %p208 = scmp.ne.s32.totalorder %s191, %s207
      %p209 = scmp.eq.s32.totalorder %s24, 0
      %p210 = por %p208, %p209
      %s211 = ssub.s32 %s25, %s37
      %p212 = scmp.eq.s32.totalorder %s211, 0
      %s214 = sadd.s32 %s213, 1
      %s215 = scalar_select %p212, %s213, %s214
      %p218 = pneg %p212
      %p219 = scmp.eq.s32.totalorder %s18, 1
      %p220 = por %p218, %p219
      %p221 = scmp.ne.s32.totalorder %s213, %s216
      %p222 = scmp.eq.s32.totalorder %s18, 0
      %p223 = por %p221, %p222
      %p224 = scmp.ne.s32.totalorder %s213, %s216
      %p225 = scmp.eq.s32.totalorder %s23, 1
      %p226 = por %p224, %p225
      %p227 = scmp.ne.s32.totalorder %s216, %s217
      %p228 = scmp.eq.s32.totalorder %s23, 0
      %p229 = por %p227, %p228
      %p230 = scmp.ne.s32.totalorder %s216, %s217
      %p231 = scmp.eq.s32.totalorder %s24, 1
      %p232 = por %p230, %p231
      %p234 = scmp.ne.s32.totalorder %s217, %s233
      %p235 = scmp.eq.s32.totalorder %s24, 0
      %p236 = por %p234, %p235
      %p237 = scmp.le.s32.totalorder 1, %s18
      %p238 = scmp.lt.s32.totalorder %s18, 3
      %p239 = pnand %p237, %p238
      %p240 = pneg %p239
      // Predicated region
      $region9: #{_sent_encoder_forward.1} parent=5 // pred_check
        _
      $region10: #{_sent_encoder_forward.1} parent=5 // pred_check_branch
        %242 = sbr.rel (%p239) target = $region12
      $region11: #{_sent_encoder_forward.1} parent=5 // pred_region
        %s243 = ssub.s32 %s18, 1
        // Predicated region
        $region13: #{_sent_encoder_forward.1} parent=11 // pred_check
          %p244 = pneg %p87
        $region14: #{_sent_encoder_forward.1} parent=11 // pred_check_branch
          %246 = sbr.rel (%p244) target = $region16
        $region15: #{_sent_encoder_forward.1} parent=11 // pred_region
          _
        $region16: #{_sent_encoder_forward.1} parent=11 // pred_fallthru
          _
      $region12: #{_sent_encoder_forward.1} parent=5 // pred_fallthru
        _
      %p247 = scmp.lt.s32.totalorder %s18, 2
      // Predicated region
      $region17: #{_sent_encoder_forward.1} parent=5 // pred_check
        %p248 = pneg %p247
      $region18: #{_sent_encoder_forward.1} parent=5 // pred_check_branch
        %250 = sbr.rel (%p248) target = $region20
      $region19: #{_sent_encoder_forward.1} parent=5 // pred_region
        // Predicated region
        $region21: #{_sent_encoder_forward.1} parent=19 // pred_check
          %p251 = pneg %p60
        $region22: #{_sent_encoder_forward.1} parent=19 // pred_check_branch
          %253 = sbr.rel (%p251) target = $region24
        $region23: #{_sent_encoder_forward.1} parent=19 // pred_region
          %s254 = ssub.s32 1, %s25
          %s255 = smul.u32 %s254, %s26
          %s256 = ssub.s32 0, %s26
          %s257 = smul.u32 %s25, %s256
          %s258 = sadd.s32 %s255, %s257
          %s259 = smul.u32 8, %s258
          %p260 = scmp.lt.s32.totalorder %s259, 7
          %s261 = scalar_select %p260, %s259, 7
          %s262 = smul.addr %s261, 4
          %s263 = scalar_lea.vmem %s1, %s262
          %s264 = ssub.s32 1, %s25
          %s265 = smul.u32 %s264, %s26
          %s266 = ssub.s32 0, %s26
          %s267 = smul.u32 %s25, %s266
          %s268 = sadd.s32 %s265, %s267
          %s269 = smul.u32 8, %s268
        $region24: #{_sent_encoder_forward.1} parent=19 // pred_fallthru
          _
        // Predicated region
        $region25: #{_sent_encoder_forward.1} parent=19 // pred_check
          %p270 = pneg %p107
        $region26: #{_sent_encoder_forward.1} parent=19 // pred_check_branch
          %272 = sbr.rel (%p270) target = $region28
        $region27: #{_sent_encoder_forward.1} parent=19 // pred_region
          %p273 = scmp.lt.s32.totalorder %s25, 1
          %s274 = scalar_select %p273, %s25, 1
          %s275 = smul.addr %s274, 16
          %s276 = smul.addr %s275, 4
          %s277 = scalar_lea.vmem %s3, %s276
        $region28: #{_sent_encoder_forward.1} parent=19 // pred_fallthru
          _
        // Predicated region
        $region29: #{_sent_encoder_forward.1} parent=19 // pred_check
          %p278 = pneg %p133
        $region30: #{_sent_encoder_forward.1} parent=19 // pred_check_branch
          %280 = sbr.rel (%p278) target = $region32
        $region31: #{_sent_encoder_forward.1} parent=19 // pred_region
          %s281 = sand.u32 %s123, 1
          %s282 = scalar_lea.sflag [#allocation8], %s281
          %s283 = sand.u32 %s123, 1
          %s284 = smul.addr %s283, 256
          %s285 = scalar_lea.vmem [#allocation7], %s284
          %s287 = ssub.s32 4096, 4096
          %288 = vsyncadd %s282, %s287
          %s289 = smul.addr %s25, 64
          %s290 = smul.addr %s289, 64
          %s291 = scalar_lea.hbm %s4, %s290
          %s292 = sshll.u32 %s285, 4
          %s293 = int_to_ptr.vmem [resolvable:$true] %s292
          %298 = dma.hbm_to_vmem [thread:$0]  %s291, 4096, %s293, %s282, 256, 256, 16
        $region32: #{_sent_encoder_forward.1} parent=19 // pred_fallthru
          _
        // Predicated region
        $region33: #{_sent_encoder_forward.1} parent=19 // pred_check
          %p299 = pneg %p159
        $region34: #{_sent_encoder_forward.1} parent=19 // pred_check_branch
          %301 = sbr.rel (%p299) target = $region36
        $region35: #{_sent_encoder_forward.1} parent=19 // pred_region
          %p302 = scmp.lt.s32.totalorder %s25, 1
          %s303 = scalar_select %p302, %s25, 1
          %s304 = smul.addr %s303, 4
          %s305 = scalar_lea.vmem %s5, %s304
        $region36: #{_sent_encoder_forward.1} parent=19 // pred_fallthru
          _
      $region20: #{_sent_encoder_forward.1} parent=5 // pred_fallthru
        _
      %p306 = scmp.le.s32.totalorder 1, %s18
      %p307 = scmp.lt.s32.totalorder %s18, 3
      %p308 = pnand %p306, %p307
      %p309 = pneg %p308
      // Predicated region
      $region37: #{_sent_encoder_forward.1} parent=5 // pred_check
        _
      $region38: #{_sent_encoder_forward.1} parent=5 // pred_check_branch
        %311 = sbr.rel (%p308) target = $region40
      $region39: #{_sent_encoder_forward.1} parent=5 // pred_region
        %s312 = ssub.s32 %s18, 1
        %s313 = sand.u32 %s126, 1
        %s314 = scalar_lea.sflag [#allocation8], %s313
        %s315 = sand.u32 %s126, 1
        %s316 = smul.addr %s315, 256
        %s317 = scalar_lea.vmem [#allocation7], %s316
        // Predicated region
        $region41: #{_sent_encoder_forward.1} parent=39 // pred_check
          %p318 = pneg %p139
        $region42: #{_sent_encoder_forward.1} parent=39 // pred_check_branch
          %320 = sbr.rel (%p318) target = $region44
        $region43: #{_sent_encoder_forward.1} parent=39 // pred_region
          %321 = dma.done %s314, 4096
        $region44: #{_sent_encoder_forward.1} parent=39 // pred_fallthru
          _
        %s322 = ssub.s32 1, %s27
        %s323 = smul.u32 %s322, %s28
        %s324 = ssub.s32 0, %s28
        %s325 = smul.u32 %s27, %s324
        %s326 = sadd.s32 %s323, %s325
        %s327 = smul.u32 8, %s326
        %p328 = scmp.lt.s32.totalorder %s327, 7
        %s329 = scalar_select %p328, %s327, 7
        %s330 = smul.addr %s329, 4
        %s331 = scalar_lea.vmem %s1, %s330
        %p332 = pneg %p66
        %p333 = pneg %p63
        %p334 = pneg %p87
        %p335 = pneg %p84
        %p336 = scmp.lt.s32.totalorder %s27, 1
        %s337 = scalar_select %p336, %s27, 1
        %s338 = smul.addr %s337, 16
        %s339 = smul.addr %s338, 4
        %s340 = scalar_lea.vmem %s3, %s339
        %p341 = pneg %p113
        %p342 = pneg %p110
        %s343 = sand.u32 %s126, 1
        %s344 = scalar_lea.sflag [#allocation8], %s343
        %s345 = sand.u32 %s126, 1
        %s346 = smul.addr %s345, 256
        %s347 = scalar_lea.vmem [#allocation7], %s346
        %p348 = pneg %p139
        %p349 = pneg %p136
        %p350 = scmp.lt.s32.totalorder %s27, 1
        %s351 = scalar_select %p350, %s27, 1
        %s352 = smul.addr %s351, 4
        %s353 = scalar_lea.vmem %s5, %s352
        %p354 = pneg %p165
        %p355 = pneg %p162
        %p356 = pneg %p203
        %p357 = pneg %p200
        %s358 = ssub.s32 1, %s27
        %s359 = smul.u32 %s358, %s28
        %s360 = ssub.s32 0, %s28
        %s361 = smul.u32 %s27, %s360
        %s362 = sadd.s32 %s359, %s361
        %s363 = smul.u32 8, %s362
        %p364 = scmp.lt.s32.totalorder %s27, 1
        %s365 = scalar_select %p364, %s27, 1
        %p366 = scmp.lt.s32.totalorder %s363, 7
        %s367 = scalar_select %p366, %s363, 7
        %s368 = smul.addr %s365, 8
        %s369 = sadd.s32 %s367, %s368
        %s370 = smul.addr %s369, 4
        %s371 = scalar_lea.vmem %s6, %s370
        %p372 = pneg %p229
        %p373 = pneg %p226
        %p374 = scmp.lt.s32.totalorder %s27, 1
        %s375 = scalar_select %p374, %s27, 1
        %s376 = smul.addr %s375, 2
        %s377 = smul.addr %s376, 8
        %s378 = scalar_lea.vmem %s7, %s377
        %s379 = ssub.s32 1, %s27
        %s380 = smul.u32 %s379, %s28
        %s381 = ssub.s32 0, %s28
        %s382 = smul.u32 %s27, %s381
        %s383 = sadd.s32 %s380, %s382
        %s384 = smul.u32 8, %s383
        %p385 = scmp.lt.s32.totalorder %s384, 7
        %s386 = scalar_select %p385, %s384, 7
        %s387 = smul.addr %s386, 4
        %s388 = scalar_lea.vmem %s1, %s387
        %s389 = ssub.s32 1, %s27
        %s390 = smul.u32 %s389, %s28
        %s391 = ssub.s32 0, %s28
        %s392 = smul.u32 %s27, %s391
        %s393 = sadd.s32 %s390, %s392
        %s394 = smul.u32 8, %s393
        %p395 = scmp.lt.s32.totalorder %s27, 1
        %s396 = scalar_select %p395, %s27, 1
        %s397 = smul.addr %s396, 16
        %s398 = smul.addr %s397, 4
        %s399 = scalar_lea.vmem %s3, %s398
        %p400 = scmp.lt.s32.totalorder %s27, 1
        %s401 = scalar_select %p400, %s27, 1
        %s402 = smul.addr %s401, 4
        %s403 = scalar_lea.vmem %s5, %s402
        %s404 = ssub.s32 1, %s27
        %s405 = smul.u32 %s404, %s28
        %s406 = ssub.s32 0, %s28
        %s407 = smul.u32 %s27, %s406
        %s408 = sadd.s32 %s405, %s407
        %s409 = smul.u32 8, %s408
        %p410 = scmp.lt.s32.totalorder %s27, 1
        %s411 = scalar_select %p410, %s27, 1
        %p412 = scmp.lt.s32.totalorder %s409, 7
        %s413 = scalar_select %p412, %s409, 7
        %s414 = smul.addr %s411, 8
        %s415 = sadd.s32 %s413, %s414
        %s416 = smul.addr %s415, 4
        %s417 = scalar_lea.vmem %s6, %s416
        %s418 = ssub.s32 1, %s27
        %s419 = smul.u32 %s418, %s28
        %s420 = ssub.s32 0, %s28
        %s421 = smul.u32 %s27, %s420
        %s422 = sadd.s32 %s419, %s421
        %s423 = smul.u32 8, %s422
        %p424 = scmp.lt.s32.totalorder %s27, 1
        %s425 = scalar_select %p424, %s27, 1
        %s426 = smul.addr %s425, 2
        %s427 = smul.addr %s426, 8
        %s428 = scalar_lea.vmem %s7, %s427
        %s430 = ssub.s32 1, %s27
        %s431 = smul.u32 %s430, %s28
        %s432 = ssub.s32 0, %s28
        %s433 = smul.u32 %s27, %s432
        %s434 = sadd.s32 %s431, %s433
        %s435 = smul.u32 %s434, 8
        %s436 = sld [smem:[#allocation6]]
        %p437 = scmp.eq.s32.totalorder %s28, 0
        // Predicated region
        $region45: #{_sent_encoder_forward.1} parent=39 // pred_check
          %p438 = pneg %p437
        $region46: #{_sent_encoder_forward.1} parent=39 // pred_check_branch
          %440 = sbr.rel (%p438) target = $region48
        $region47: #{_sent_encoder_forward.1} parent=39 // pred_region
          %441 = vst [vmem:[#allocation3] sm:$0xff] 0.0
          %442 = vst [vmem:[#allocation4] sm:$0xff] 0.0
        $region48: #{_sent_encoder_forward.1} parent=39 // pred_fallthru
          _
        %p443 = scmp.lt.s32.totalorder %s435, %s436
        // Predicated region
        $region49: #{_sent_encoder_forward.1} parent=39 // pred_check
          %p444 = pneg %p443
        $region50: #{_sent_encoder_forward.1} parent=39 // pred_check_branch
          %446 = sbr.rel (%p444) target = $region52
        $region51: #{_sent_encoder_forward.1} parent=39 // pred_region
          %v447 = vld [vmem:[%s388] sm:$0xf]
          %v448 = vld [vmem:[%s388 + $0x4] sm:$0xf]
          %v449 = vld [vmem:[%s388 + $0x8] sm:$0xf]
          %v450 = vld [vmem:[%s388 + $0xc] sm:$0xf]
          %v451 = vld [vmem:[%s388 + $0x10] sm:$0xf]
          %v452 = vld [vmem:[%s388 + $0x14] sm:$0xf]
          %v453 = vld [vmem:[%s388 + $0x18] sm:$0xf]
          %v454 = vld [vmem:[%s388 + $0x1c] sm:$0xf]
          %v455 = vld [vmem:[%s399] sm:$0xff]
          %v456 = vld [vmem:[%s399 + $0x8] sm:$0xff]
          %v457 = vld [vmem:[%s399 + $0x10] sm:$0xff]
          %v458 = vld [vmem:[%s399 + $0x18] sm:$0xff]
          %v459 = vld [vmem:[%s399 + $0x20] sm:$0xff]
          %v460 = vld [vmem:[%s399 + $0x28] sm:$0xff]
          %v461 = vld [vmem:[%s399 + $0x30] sm:$0xff]
          %v462 = vld [vmem:[%s399 + $0x38] sm:$0xff]
          %v463 = vld [vmem:[%s403] sm:$0xf]
          %v465 = vlaneseq
          %v466 = vshrl.u32 %v465, 7
          %v467 = vsub.s32 0, %v466
          %v468 = vrot.slane %v463, %v467
          %v469 = vlaneseq
          %v470 = vshrl.u32 %v469, 7
          %v471 = vsub.s32 1, %v470
          %v472 = vrot.slane %v463, %v471
          %v473 = vlaneseq
          %v474 = vshrl.u32 %v473, 7
          %v475 = vsub.s32 2, %v474
          %v476 = vrot.slane %v463, %v475
          %v477 = vlaneseq
          %v478 = vshrl.u32 %v477, 7
          %v479 = vsub.s32 3, %v478
          %v480 = vrot.slane %v463, %v479
          %v493 = vunpack.c.l.b16 %v447
          %v494 = vunpack.c.l.b16 %v448
          %v495 = vunpack.c.l.b16 %v449
          %v496 = vunpack.c.l.b16 %v450
          %v497 = vunpack.c.l.b16 %v451
          %v498 = vunpack.c.l.b16 %v452
          %v499 = vunpack.c.l.b16 %v453
          %v500 = vunpack.c.l.b16 %v454
          %v501 = vpack.c.b16 %v494, %v493
          %v502 = vpack.c.b16 %v496, %v495
          %v503 = vpack.c.b16 %v498, %v497
          %v504 = vpack.c.b16 %v500, %v499
          %v513 = vunpack.c.l.b16 %v455
          %v514 = vunpack.c.h.b16 %v455
          %v515 = vunpack.c.l.b16 %v456
          %v516 = vunpack.c.h.b16 %v456
          %v517 = vunpack.c.l.b16 %v457
          %v518 = vunpack.c.h.b16 %v457
          %v519 = vunpack.c.l.b16 %v458
          %v520 = vunpack.c.h.b16 %v458
          %v521 = vunpack.c.l.b16 %v459
          %v522 = vunpack.c.h.b16 %v459
          %v523 = vunpack.c.l.b16 %v460
          %v524 = vunpack.c.h.b16 %v460
          %v525 = vunpack.c.l.b16 %v461
          %v526 = vunpack.c.h.b16 %v461
          %v527 = vunpack.c.l.b16 %v462
          %v528 = vunpack.c.h.b16 %v462
          %v529 = vpack.c.b16 %v517, %v513
          %v530 = vpack.c.b16 %v518, %v514
          %v531 = vpack.c.b16 %v519, %v515
          %v532 = vpack.c.b16 %v520, %v516
          %v533 = vpack.c.b16 %v525, %v521
          %v534 = vpack.c.b16 %v526, %v522
          %v535 = vpack.c.b16 %v527, %v523
          %v536 = vpack.c.b16 %v528, %v524
          %vm545 = vcmask 261120
          %v547 = vsel %vm545, %v501, 0
          %v550 = vsel %vm545, %v502, 0
          %v553 = vsel %vm545, %v503, 0
          %v556 = vsel %vm545, %v504, 0
          %558 = vmatprep.subr.bf16.mxu0 %v530
          %559 = vmatpush1.bf16.msra.mxu0 %v529
          %560 = vmatprep.subr.bf16.mxu0 %v534
          %561 = vmatpush1.bf16.msra.mxu0 %v533
          %562 = vmatprep.subr.bf16.mxu0 0
          %563 = vmatpush1.bf16.msra.mxu0 0
          %564 = vmatprep.subr.bf16.mxu0 0
          %565 = vmatpush1.bf16.msra.mxu0 0
          %566 = vmatprep.subr.bf16.mxu0 0
          %567 = vmatpush1.bf16.msra.mxu0 0
          %568 = vmatprep.subr.bf16.mxu0 0
          %569 = vmatpush1.bf16.msra.mxu0 0
          %570 = vmatprep.subr.bf16.mxu0 0
          %571 = vmatpush1.bf16.msra.mxu0 0
          %572 = vmatprep.subr.bf16.mxu0 0
          %573 = vmatpush1.bf16.msra.mxu0 0
          %574 = vmatprep.subr.bf16.mxu0 0
          %575 = vmatpush1.bf16.msra.mxu0 0
          %576 = vmatprep.subr.bf16.mxu0 0
          %577 = vmatpush1.bf16.msra.mxu0 0
          %578 = vmatprep.subr.bf16.mxu0 0
          %579 = vmatpush1.bf16.msra.mxu0 0
          %580 = vmatprep.subr.bf16.mxu0 0
          %581 = vmatpush1.bf16.msra.mxu0 0
          %582 = vmatprep.subr.bf16.mxu0 0
          %583 = vmatpush1.bf16.msra.mxu0 0
          %584 = vmatprep.subr.bf16.mxu0 0
          %585 = vmatpush1.bf16.msra.mxu0 0
          %586 = vmatprep.subr.bf16.mxu0 0
          %587 = vmatpush1.bf16.msra.mxu0 0
          %588 = vmatprep.subr.bf16.mxu0 0
          %589 = vmatpush1.bf16.msra.mxu0 0
          %590 = vmatprep.mubr.bf16.mxu0 0
          %591 = vmatmul.mubr.bf16.gmra.mrb[0].mxu0 %v547
          %v592 = vpop.f32.mrb[0].mxu0
          %v593 = vadd.f32 %v468, %v592
          %v594 = vpop.f32.mrb[0].mxu0
          %v595 = vadd.f32 %v472, %v594
          %v596 = vpop.f32.mrb[0].mxu0
          %v597 = vadd.f32 %v468, %v596
          %v598 = vpop.f32.mrb[0].mxu0
          %v599 = vadd.f32 %v472, %v598
          %600 = vmatprep.mubr.bf16.mxu0 0
          %601 = vmatmul.mubr.bf16.gmra.mrb[0].mxu0 %v550
          %v602 = vpop.f32.mrb[0].mxu0
          %v603 = vadd.f32 %v468, %v602
          %v604 = vpop.f32.mrb[0].mxu0
          %v605 = vadd.f32 %v472, %v604
          %v606 = vpop.f32.mrb[0].mxu0
          %v607 = vadd.f32 %v468, %v606
          %v608 = vpop.f32.mrb[0].mxu0
          %v609 = vadd.f32 %v472, %v608
          %610 = vmatprep.mubr.bf16.mxu0 0
          %611 = vmatmul.mubr.bf16.gmra.mrb[0].mxu0 %v553
          %v612 = vpop.f32.mrb[0].mxu0
          %v613 = vadd.f32 %v468, %v612
          %v614 = vpop.f32.mrb[0].mxu0
          %v615 = vadd.f32 %v472, %v614
          %v616 = vpop.f32.mrb[0].mxu0
          %v617 = vadd.f32 %v468, %v616
          %v618 = vpop.f32.mrb[0].mxu0
          %v619 = vadd.f32 %v472, %v618
          %620 = vmatprep.mubr.bf16.mxu0 0
          %621 = vmatmul.mubr.bf16.gmra.mrb[0].mxu0 %v556
          %v622 = vpop.f32.mrb[0].mxu0
          %v623 = vadd.f32 %v468, %v622
          %v624 = vpop.f32.mrb[0].mxu0
          %v625 = vadd.f32 %v472, %v624
          %v626 = vpop.f32.mrb[0].mxu0
          %v627 = vadd.f32 %v468, %v626
          %v628 = vpop.f32.mrb[0].mxu0
          %v629 = vadd.f32 %v472, %v628
          %630 = vdwg.mxu0
          %631 = vmatprep.subr.bf16.mxu0 %v532
          %632 = vmatpush1.bf16.msra.mxu0 %v531
          %633 = vmatprep.subr.bf16.mxu0 %v536
          %634 = vmatpush1.bf16.msra.mxu0 %v535
          %635 = vmatprep.subr.bf16.mxu0 0
          %636 = vmatpush1.bf16.msra.mxu0 0
          %637 = vmatprep.subr.bf16.mxu0 0
          %638 = vmatpush1.bf16.msra.mxu0 0
          %639 = vmatprep.subr.bf16.mxu0 0
          %640 = vmatpush1.bf16.msra.mxu0 0
          %641 = vmatprep.subr.bf16.mxu0 0
          %642 = vmatpush1.bf16.msra.mxu0 0
          %643 = vmatprep.subr.bf16.mxu0 0
          %644 = vmatpush1.bf16.msra.mxu0 0
          %645 = vmatprep.subr.bf16.mxu0 0
          %646 = vmatpush1.bf16.msra.mxu0 0
          %647 = vmatprep.subr.bf16.mxu0 0
          %648 = vmatpush1.bf16.msra.mxu0 0
          %649 = vmatprep.subr.bf16.mxu0 0
          %650 = vmatpush1.bf16.msra.mxu0 0
          %651 = vmatprep.subr.bf16.mxu0 0
          %652 = vmatpush1.bf16.msra.mxu0 0
          %653 = vmatprep.subr.bf16.mxu0 0
          %654 = vmatpush1.bf16.msra.mxu0 0
          %655 = vmatprep.subr.bf16.mxu0 0
          %656 = vmatpush1.bf16.msra.mxu0 0
          %657 = vmatprep.subr.bf16.mxu0 0
          %658 = vmatpush1.bf16.msra.mxu0 0
          %659 = vmatprep.subr.bf16.mxu0 0
          %660 = vmatpush1.bf16.msra.mxu0 0
          %661 = vmatprep.subr.bf16.mxu0 0
          %662 = vmatpush1.bf16.msra.mxu0 0
          %663 = vmatprep.mubr.bf16.mxu0 0
          %664 = vmatmul.mubr.bf16.gmra.mrb[0].mxu0 %v547
          %v665 = vpop.f32.mrb[0].mxu0
          %v666 = vadd.f32 %v476, %v665
          %v667 = vpop.f32.mrb[0].mxu0
          %v668 = vadd.f32 %v480, %v667
          %v669 = vpop.f32.mrb[0].mxu0
          %v670 = vadd.f32 %v476, %v669
          %v671 = vpop.f32.mrb[0].mxu0
          %v672 = vadd.f32 %v480, %v671
          %673 = vmatprep.mubr.bf16.mxu0 0
          %674 = vmatmul.mubr.bf16.gmra.mrb[0].mxu0 %v550
          %v675 = vpop.f32.mrb[0].mxu0
          %v676 = vadd.f32 %v476, %v675
          %v677 = vpop.f32.mrb[0].mxu0
          %v678 = vadd.f32 %v480, %v677
          %v679 = vpop.f32.mrb[0].mxu0
          %v680 = vadd.f32 %v476, %v679
          %v681 = vpop.f32.mrb[0].mxu0
          %v682 = vadd.f32 %v480, %v681
          %683 = vmatprep.mubr.bf16.mxu0 0
          %684 = vmatmul.mubr.bf16.gmra.mrb[0].mxu0 %v553
          %v685 = vpop.f32.mrb[0].mxu0
          %v686 = vadd.f32 %v476, %v685
          %v687 = vpop.f32.mrb[0].mxu0
          %v688 = vadd.f32 %v480, %v687
          %v689 = vpop.f32.mrb[0].mxu0
          %v690 = vadd.f32 %v476, %v689
          %v691 = vpop.f32.mrb[0].mxu0
          %v692 = vadd.f32 %v480, %v691
          %693 = vmatprep.mubr.bf16.mxu0 0
          %694 = vmatmul.mubr.bf16.gmra.mrb[0].mxu0 %v556
          %v695 = vpop.f32.mrb[0].mxu0
          %v696 = vadd.f32 %v476, %v695
          %v697 = vpop.f32.mrb[0].mxu0
          %v698 = vadd.f32 %v480, %v697
          %v699 = vpop.f32.mrb[0].mxu0
          %v700 = vadd.f32 %v476, %v699
          %v701 = vpop.f32.mrb[0].mxu0
          %v702 = vadd.f32 %v480, %v701
          %703 = vdwg.mxu0
          %704 = vst [vmem:[#allocation2] sm:$0xff] %v593
          %705 = vst [vmem:[#allocation2 + $0x8] sm:$0xff] %v595
          %706 = vst [vmem:[#allocation2 + $0x10] sm:$0xff] %v666
          %707 = vst [vmem:[#allocation2 + $0x18] sm:$0xff] %v668
          %708 = vst [vmem:[#allocation2 + $0x20] sm:$0xff] %v597
          %709 = vst [vmem:[#allocation2 + $0x28] sm:$0xff] %v599
          %710 = vst [vmem:[#allocation2 + $0x30] sm:$0xff] %v670
          %711 = vst [vmem:[#allocation2 + $0x38] sm:$0xff] %v672
          %712 = vst [vmem:[#allocation2 + $0x40] sm:$0xff] %v603
          %713 = vst [vmem:[#allocation2 + $0x48] sm:$0xff] %v605
          %714 = vst [vmem:[#allocation2 + $0x50] sm:$0xff] %v676
          %715 = vst [vmem:[#allocation2 + $0x58] sm:$0xff] %v678
          %716 = vst [vmem:[#allocation2 + $0x60] sm:$0xff] %v607
          %717 = vst [vmem:[#allocation2 + $0x68] sm:$0xff] %v609
          %718 = vst [vmem:[#allocation2 + $0x70] sm:$0xff] %v680
          %719 = vst [vmem:[#allocation2 + $0x78] sm:$0xff] %v682
          %720 = vst [vmem:[#allocation2 + $0x80] sm:$0xff] %v613
          %721 = vst [vmem:[#allocation2 + $0x88] sm:$0xff] %v615
          %722 = vst [vmem:[#allocation2 + $0x90] sm:$0xff] %v686
          %723 = vst [vmem:[#allocation2 + $0x98] sm:$0xff] %v688
          %724 = vst [vmem:[#allocation2 + $0xa0] sm:$0xff] %v617
          %725 = vst [vmem:[#allocation2 + $0xa8] sm:$0xff] %v619
          %726 = vst [vmem:[#allocation2 + $0xb0] sm:$0xff] %v690
          %727 = vst [vmem:[#allocation2 + $0xb8] sm:$0xff] %v692
          %728 = vst [vmem:[#allocation2 + $0xc0] sm:$0xff] %v623
          %729 = vst [vmem:[#allocation2 + $0xc8] sm:$0xff] %v625
          %730 = vst [vmem:[#allocation2 + $0xd0] sm:$0xff] %v696
          %731 = vst [vmem:[#allocation2 + $0xd8] sm:$0xff] %v698
          %732 = vst [vmem:[#allocation2 + $0xe0] sm:$0xff] %v627
          %733 = vst [vmem:[#allocation2 + $0xe8] sm:$0xff] %v629
          %734 = vst [vmem:[#allocation2 + $0xf0] sm:$0xff] %v700
          %735 = vst [vmem:[#allocation2 + $0xf8] sm:$0xff] %v702
          %v736 = vld [vmem:[%s317] sm:$0xff]
          %v737 = vld [vmem:[%s317 + $0x8] sm:$0xff]
          %v738 = vld [vmem:[%s317 + $0x10] sm:$0xff]
          %v739 = vld [vmem:[%s317 + $0x18] sm:$0xff]
          %v740 = vld [vmem:[%s317 + $0x20] sm:$0xff]
          %v741 = vld [vmem:[%s317 + $0x28] sm:$0xff]
          %v742 = vld [vmem:[%s317 + $0x30] sm:$0xff]
          %v743 = vld [vmem:[%s317 + $0x38] sm:$0xff]
          %v744 = vld [vmem:[%s317 + $0x40] sm:$0xff]
          %v745 = vld [vmem:[%s317 + $0x48] sm:$0xff]
          %v746 = vld [vmem:[%s317 + $0x50] sm:$0xff]
          %v747 = vld [vmem:[%s317 + $0x58] sm:$0xff]
          %v748 = vld [vmem:[%s317 + $0x60] sm:$0xff]
          %v749 = vld [vmem:[%s317 + $0x68] sm:$0xff]
          %v750 = vld [vmem:[%s317 + $0x70] sm:$0xff]
          %v751 = vld [vmem:[%s317 + $0x78] sm:$0xff]
          %v752 = vld [vmem:[%s317 + $0x80] sm:$0xff]
          %v753 = vld [vmem:[%s317 + $0x88] sm:$0xff]
          %v754 = vld [vmem:[%s317 + $0x90] sm:$0xff]
          %v755 = vld [vmem:[%s317 + $0x98] sm:$0xff]
          %v756 = vld [vmem:[%s317 + $0xa0] sm:$0xff]
          %v757 = vld [vmem:[%s317 + $0xa8] sm:$0xff]
          %v758 = vld [vmem:[%s317 + $0xb0] sm:$0xff]
          %v759 = vld [vmem:[%s317 + $0xb8] sm:$0xff]
          %v760 = vld [vmem:[%s317 + $0xc0] sm:$0xff]
          %v761 = vld [vmem:[%s317 + $0xc8] sm:$0xff]
          %v762 = vld [vmem:[%s317 + $0xd0] sm:$0xff]
          %v763 = vld [vmem:[%s317 + $0xd8] sm:$0xff]
          %v764 = vld [vmem:[%s317 + $0xe0] sm:$0xff]
          %v765 = vld [vmem:[%s317 + $0xe8] sm:$0xff]
          %v766 = vld [vmem:[%s317 + $0xf0] sm:$0xff]
          %v767 = vld [vmem:[%s317 + $0xf8] sm:$0xff]
          %v768 = vld [vmem:[%s2] sm:$0xff]
          %769 = vset.pattern.permute.xlu0 0
          %770 = vperm.xlu0 %769, %v768
          %v771 = vpop.permute.xlu0 %770
          %p772 = scmp.eq.s32.totalorder %s27, 0
          // Predicated region
          $region53: #{_sent_encoder_forward.1} parent=51 // pred_check
            %p773 = pneg %p772
          $region54: #{_sent_encoder_forward.1} parent=51 // pred_check_branch
            %775 = sbr.rel (%p773) target = $region56
          $region55: #{_sent_encoder_forward.1} parent=51 // pred_region
            %v776 = vld [vmem:[#allocation3] sm:$0xff]
            %v777 = vld [vmem:[#allocation4] sm:$0xff]
            %v778 = vld [vmem:[#allocation2] sm:$0xff]
            %v779 = vld [vmem:[#allocation2 + $0x8] sm:$0xff]
            %v780 = vld [vmem:[#allocation2 + $0x10] sm:$0xff]
            %v781 = vld [vmem:[#allocation2 + $0x18] sm:$0xff]
            %v782 = vpack.c.bf16 %v776, %v776
            %v815 = vunpack.c.l.b16 %v736
            %v816 = vunpack.c.h.b16 %v736
            %v817 = vunpack.c.l.b16 %v737
            %v818 = vunpack.c.h.b16 %v737
            %v819 = vunpack.c.l.b16 %v738
            %v820 = vunpack.c.h.b16 %v738
            %v821 = vunpack.c.l.b16 %v739
            %v822 = vunpack.c.h.b16 %v739
            %v823 = vunpack.c.l.b16 %v740
            %v824 = vunpack.c.h.b16 %v740
            %v825 = vunpack.c.l.b16 %v741
            %v826 = vunpack.c.h.b16 %v741
            %v827 = vunpack.c.l.b16 %v742
            %v828 = vunpack.c.h.b16 %v742
            %v829 = vunpack.c.l.b16 %v743
            %v830 = vunpack.c.h.b16 %v743
            %v831 = vunpack.c.l.b16 %v744
            %v832 = vunpack.c.h.b16 %v744
            %v833 = vunpack.c.l.b16 %v745
            %v834 = vunpack.c.h.b16 %v745
            %v835 = vunpack.c.l.b16 %v746
            %v836 = vunpack.c.h.b16 %v746
            %v837 = vunpack.c.l.b16 %v747
            %v838 = vunpack.c.h.b16 %v747
            %v839 = vunpack.c.l.b16 %v748
            %v840 = vunpack.c.h.b16 %v748
            %v841 = vunpack.c.l.b16 %v749
            %v842 = vunpack.c.h.b16 %v749
            %v843 = vunpack.c.l.b16 %v750
            %v844 = vunpack.c.h.b16 %v750
            %v845 = vunpack.c.l.b16 %v751
            %v846 = vunpack.c.h.b16 %v751
            %v847 = vunpack.c.l.b16 %v752
            %v848 = vunpack.c.h.b16 %v752
            %v849 = vunpack.c.l.b16 %v753
            %v850 = vunpack.c.h.b16 %v753
            %v851 = vunpack.c.l.b16 %v754
            %v852 = vunpack.c.h.b16 %v754
            %v853 = vunpack.c.l.b16 %v755
            %v854 = vunpack.c.h.b16 %v755
            %v855 = vunpack.c.l.b16 %v756
            %v856 = vunpack.c.h.b16 %v756
            %v857 = vunpack.c.l.b16 %v757
            %v858 = vunpack.c.h.b16 %v757
            %v859 = vunpack.c.l.b16 %v758
            %v860 = vunpack.c.h.b16 %v758
            %v861 = vunpack.c.l.b16 %v759
            %v862 = vunpack.c.h.b16 %v759
            %v863 = vunpack.c.l.b16 %v760
            %v864 = vunpack.c.h.b16 %v760
            %v865 = vunpack.c.l.b16 %v761
            %v866 = vunpack.c.h.b16 %v761
            %v867 = vunpack.c.l.b16 %v762
            %v868 = vunpack.c.h.b16 %v762
            %v869 = vunpack.c.l.b16 %v763
            %v870 = vunpack.c.h.b16 %v763
            %v871 = vunpack.c.l.b16 %v764
            %v872 = vunpack.c.h.b16 %v764
            %v873 = vunpack.c.l.b16 %v765
            %v874 = vunpack.c.h.b16 %v765
            %v875 = vunpack.c.l.b16 %v766
            %v876 = vunpack.c.h.b16 %v766
            %v877 = vunpack.c.l.b16 %v767
            %v878 = vunpack.c.h.b16 %v767
            %v879 = vpack.c.b16 %v819, %v815
            %v880 = vpack.c.b16 %v820, %v816
            %v881 = vpack.c.b16 %v821, %v817
            %v882 = vpack.c.b16 %v822, %v818
            %v883 = vpack.c.b16 %v827, %v823
            %v884 = vpack.c.b16 %v828, %v824
            %v885 = vpack.c.b16 %v829, %v825
            %v886 = vpack.c.b16 %v830, %v826
            %v887 = vpack.c.b16 %v835, %v831
            %v888 = vpack.c.b16 %v836, %v832
            %v889 = vpack.c.b16 %v837, %v833
            %v890 = vpack.c.b16 %v838, %v834
            %v891 = vpack.c.b16 %v843, %v839
            %v892 = vpack.c.b16 %v844, %v840
            %v893 = vpack.c.b16 %v845, %v841
            %v894 = vpack.c.b16 %v846, %v842
            %v895 = vpack.c.b16 %v851, %v847
            %v896 = vpack.c.b16 %v852, %v848
            %v897 = vpack.c.b16 %v853, %v849
            %v898 = vpack.c.b16 %v854, %v850
            %v899 = vpack.c.b16 %v859, %v855
            %v900 = vpack.c.b16 %v860, %v856
            %v901 = vpack.c.b16 %v861, %v857
            %v902 = vpack.c.b16 %v862, %v858
            %v903 = vpack.c.b16 %v867, %v863
            %v904 = vpack.c.b16 %v868, %v864
            %v905 = vpack.c.b16 %v869, %v865
            %v906 = vpack.c.b16 %v870, %v866
            %v907 = vpack.c.b16 %v875, %v871
            %v908 = vpack.c.b16 %v876, %v872
            %v909 = vpack.c.b16 %v877, %v873
            %v910 = vpack.c.b16 %v878, %v874
            %943 = vmatprep.subr.bf16.mxu0 %v880
            %944 = vmatpush1.bf16.msra.mxu0 %v879
            %945 = vmatprep.subr.bf16.mxu0 %v884
            %946 = vmatpush1.bf16.msra.mxu0 %v883
            %947 = vmatprep.subr.bf16.mxu0 %v888
            %948 = vmatpush1.bf16.msra.mxu0 %v887
            %949 = vmatprep.subr.bf16.mxu0 %v892
            %950 = vmatpush1.bf16.msra.mxu0 %v891
            %951 = vmatprep.subr.bf16.mxu0 %v896
            %952 = vmatpush1.bf16.msra.mxu0 %v895
            %953 = vmatprep.subr.bf16.mxu0 %v900
            %954 = vmatpush1.bf16.msra.mxu0 %v899
            %955 = vmatprep.subr.bf16.mxu0 %v904
            %956 = vmatpush1.bf16.msra.mxu0 %v903
            %957 = vmatprep.subr.bf16.mxu0 %v908
            %958 = vmatpush1.bf16.msra.mxu0 %v907
            %959 = vmatprep.subr.bf16.mxu0 0
            %960 = vmatpush1.bf16.msra.mxu0 0
            %961 = vmatprep.subr.bf16.mxu0 0
            %962 = vmatpush1.bf16.msra.mxu0 0
            %963 = vmatprep.subr.bf16.mxu0 0
            %964 = vmatpush1.bf16.msra.mxu0 0
            %965 = vmatprep.subr.bf16.mxu0 0
            %966 = vmatpush1.bf16.msra.mxu0 0
            %967 = vmatprep.subr.bf16.mxu0 0
            %968 = vmatpush1.bf16.msra.mxu0 0
            %969 = vmatprep.subr.bf16.mxu0 0
            %970 = vmatpush1.bf16.msra.mxu0 0
            %971 = vmatprep.subr.bf16.mxu0 0
            %972 = vmatpush1.bf16.msra.mxu0 0
            %973 = vmatprep.subr.bf16.mxu0 0
            %974 = vmatpush1.bf16.msra.mxu0 0
            %975 = vmatprep.mubr.bf16.mxu0 0
            %976 = vmatmul.mubr.bf16.gmra.mrb[0].mxu0 %v782
            %v977 = vpop.f32.mrb[0].mxu0
            %v978 = vadd.f32 0.0, %v977
            %v979 = vpop.f32.mrb[0].mxu0
            %v980 = vadd.f32 0.0, %v979
            %v981 = vpop.f32.mrb[0].mxu0
            %v982 = vpop.f32.mrb[0].mxu0
            %983 = vdwg.mxu0
            %984 = vmatprep.subr.bf16.mxu0 %v882
            %985 = vmatpush1.bf16.msra.mxu0 %v881
            %986 = vmatprep.subr.bf16.mxu0 %v886
            %987 = vmatpush1.bf16.msra.mxu0 %v885
            %988 = vmatprep.subr.bf16.mxu0 %v890
            %989 = vmatpush1.bf16.msra.mxu0 %v889
            %990 = vmatprep.subr.bf16.mxu0 %v894
            %991 = vmatpush1.bf16.msra.mxu0 %v893
            %992 = vmatprep.subr.bf16.mxu0 %v898
            %993 = vmatpush1.bf16.msra.mxu0 %v897
            %994 = vmatprep.subr.bf16.mxu0 %v902
            %995 = vmatpush1.bf16.msra.mxu0 %v901
            %996 = vmatprep.subr.bf16.mxu0 %v906
            %997 = vmatpush1.bf16.msra.mxu0 %v905
            %998 = vmatprep.subr.bf16.mxu0 %v910
            %999 = vmatpush1.bf16.msra.mxu0 %v909
            %1000 = vmatprep.subr.bf16.mxu0 0
            %1001 = vmatpush1.bf16.msra.mxu0 0
            %1002 = vmatprep.subr.bf16.mxu0 0
            %1003 = vmatpush1.bf16.msra.mxu0 0
            %1004 = vmatprep.subr.bf16.mxu0 0
            %1005 = vmatpush1.bf16.msra.mxu0 0
            %1006 = vmatprep.subr.bf16.mxu0 0
            %1007 = vmatpush1.bf16.msra.mxu0 0
            %1008 = vmatprep.subr.bf16.mxu0 0
            %1009 = vmatpush1.bf16.msra.mxu0 0
            %1010 = vmatprep.subr.bf16.mxu0 0
            %1011 = vmatpush1.bf16.msra.mxu0 0
            %1012 = vmatprep.subr.bf16.mxu0 0
            %1013 = vmatpush1.bf16.msra.mxu0 0
            %1014 = vmatprep.subr.bf16.mxu0 0
            %1015 = vmatpush1.bf16.msra.mxu0 0
            %1016 = vmatprep.mubr.bf16.mxu0 0
            %1017 = vmatmul.mubr.bf16.gmra.mrb[0].mxu0 %v782
            %v1018 = vpop.f32.mrb[0].mxu0
            %v1019 = vadd.f32 0.0, %v1018
            %v1020 = vpop.f32.mrb[0].mxu0
            %v1021 = vadd.f32 0.0, %v1020
            %v1022 = vpop.f32.mrb[0].mxu0
            %v1023 = vpop.f32.mrb[0].mxu0
            %1024 = vdwg.mxu0
            %v1025 = vadd.f32 %v778, %v978
            %v1026 = vadd.f32 %v779, %v980
            %v1027 = vadd.f32 %v780, %v1019
            %v1028 = vadd.f32 %v781, %v1021
            %v1029 = vxor.u32 %v1025, 2147483648
            %v1030 = vxor.u32 %v1026, 2147483648
            %v1031 = vxor.u32 %v1027, 2147483648
            %v1032 = vmul.f32 %v1029, 1.442695
            %v1033 = vpow.pop %v1032
            %v1034 = vmul.f32 %v1030, 1.442695
            %v1035 = vpow.pop %v1034
            %v1036 = vmul.f32 %v1031, 1.442695
            %v1037 = vpow.pop %v1036
            %v1038 = vadd.f32 %v1033, 1.0
            %v1039 = vadd.f32 %v1035, 1.0
            %v1040 = vadd.f32 %v1037, 1.0
            %v1041 = vrcp.pop %v1038
            %v1042 = vmul.f32 1.0, %v1041
            %v1043 = vrcp.pop %v1039
            %v1044 = vmul.f32 1.0, %v1043
            %v1045 = vrcp.pop %v1040
            %v1046 = vmul.f32 1.0, %v1045
            %v1047 = vtanh.pop %v1028
            %v1048 = vmul.f32 %v1044, %v777
            %v1049 = vmul.f32 %v1042, %v1047
            %v1050 = vadd.f32 %v1048, %v1049
            %v1051 = vtanh.pop %v1050
            %v1052 = vmul.f32 %v1046, %v1051
            %v1053 = vstv %s435
            %vm1054 = vcmp.lt.s32.totalorder %v1053, %v771
            %v1055 = vsel %vm1054, %v1052, %v776
            %v1056 = vsel %vm1054, %v1050, %v777
            %v1057 = vsel %vm1054, %v1052, 0.0
            %v1058 = vpack.c.bf16 %v1057, %v1057
            %1059 = vst [vmem:[%s417] sm:$0xf] %v1058
            %s1060 = scalar_lea.vmem [#allocation2], 32
            %v1061 = vld [vmem:[%s1060] sm:$0xff]
            %v1062 = vld [vmem:[%s1060 + $0x8] sm:$0xff]
            %v1063 = vld [vmem:[%s1060 + $0x10] sm:$0xff]
            %v1064 = vld [vmem:[%s1060 + $0x18] sm:$0xff]
            %v1065 = vpack.c.bf16 %v1055, %v1055
            %1066 = vmatprep.subr.bf16.mxu0 %v880
            %1067 = vmatpush1.bf16.msra.mxu0 %v879
            %1068 = vmatprep.subr.bf16.mxu0 %v884
            %1069 = vmatpush1.bf16.msra.mxu0 %v883
            %1070 = vmatprep.subr.bf16.mxu0 %v888
            %1071 = vmatpush1.bf16.msra.mxu0 %v887
            %1072 = vmatprep.subr.bf16.mxu0 %v892
            %1073 = vmatpush1.bf16.msra.mxu0 %v891
            %1074 = vmatprep.subr.bf16.mxu0 %v896
            %1075 = vmatpush1.bf16.msra.mxu0 %v895
            %1076 = vmatprep.subr.bf16.mxu0 %v900
            %1077 = vmatpush1.bf16.msra.mxu0 %v899
            %1078 = vmatprep.subr.bf16.mxu0 %v904
            %1079 = vmatpush1.bf16.msra.mxu0 %v903
            %1080 = vmatprep.subr.bf16.mxu0 %v908
            %1081 = vmatpush1.bf16.msra.mxu0 %v907
            %1082 = vmatprep.subr.bf16.mxu0 0
            %1083 = vmatpush1.bf16.msra.mxu0 0
            %1084 = vmatprep.subr.bf16.mxu0 0
            %1085 = vmatpush1.bf16.msra.mxu0 0
            %1086 = vmatprep.subr.bf16.mxu0 0
            %1087 = vmatpush1.bf16.msra.mxu0 0
            %1088 = vmatprep.subr.bf16.mxu0 0
            %1089 = vmatpush1.bf16.msra.mxu0 0
            %1090 = vmatprep.subr.bf16.mxu0 0
            %1091 = vmatpush1.bf16.msra.mxu0 0
            %1092 = vmatprep.subr.bf16.mxu0 0
            %1093 = vmatpush1.bf16.msra.mxu0 0
            %1094 = vmatprep.subr.bf16.mxu0 0
            %1095 = vmatpush1.bf16.msra.mxu0 0
            %1096 = vmatprep.subr.bf16.mxu0 0
            %1097 = vmatpush1.bf16.msra.mxu0 0
            %1098 = vmatprep.mubr.bf16.mxu0 0
            %1099 = vmatmul.mubr.bf16.gmra.mrb[0].mxu0 %v1065
            %v1100 = vpop.f32.mrb[0].mxu0
            %v1101 = vadd.f32 0.0, %v1100
            %v1102 = vpop.f32.mrb[0].mxu0
            %v1103 = vadd.f32 0.0, %v1102
            %v1104 = vpop.f32.mrb[0].mxu0
            %v1105 = vpop.f32.mrb[0].mxu0
            %1106 = vdwg.mxu0
            %1107 = vmatprep.subr.bf16.mxu0 %v882
            %1108 = vmatpush1.bf16.msra.mxu0 %v881
            %1109 = vmatprep.subr.bf16.mxu0 %v886
            %1110 = vmatpush1.bf16.msra.mxu0 %v885
            %1111 = vmatprep.subr.bf16.mxu0 %v890
            %1112 = vmatpush1.bf16.msra.mxu0 %v889
            %1113 = vmatprep.subr.bf16.mxu0 %v894
            %1114 = vmatpush1.bf16.msra.mxu0 %v893
            %1115 = vmatprep.subr.bf16.mxu0 %v898
            %1116 = vmatpush1.bf16.msra.mxu0 %v897
            %1117 = vmatprep.subr.bf16.mxu0 %v902
            %1118 = vmatpush1.bf16.msra.mxu0 %v901
            %1119 = vmatprep.subr.bf16.mxu0 %v906
            %1120 = vmatpush1.bf16.msra.mxu0 %v905
            %1121 = vmatprep.subr.bf16.mxu0 %v910
            %1122 = vmatpush1.bf16.msra.mxu0 %v909
            %1123 = vmatprep.subr.bf16.mxu0 0
            %1124 = vmatpush1.bf16.msra.mxu0 0
            %1125 = vmatprep.subr.bf16.mxu0 0
            %1126 = vmatpush1.bf16.msra.mxu0 0
            %1127 = vmatprep.subr.bf16.mxu0 0
            %1128 = vmatpush1.bf16.msra.mxu0 0
            %1129 = vmatprep.subr.bf16.mxu0 0
            %1130 = vmatpush1.bf16.msra.mxu0 0
            %1131 = vmatprep.subr.bf16.mxu0 0
            %1132 = vmatpush1.bf16.msra.mxu0 0
            %1133 = vmatprep.subr.bf16.mxu0 0
            %1134 = vmatpush1.bf16.msra.mxu0 0
            %1135 = vmatprep.subr.bf16.mxu0 0
            %1136 = vmatpush1.bf16.msra.mxu0 0
            %1137 = vmatprep.subr.bf16.mxu0 0
            %1138 = vmatpush1.bf16.msra.mxu0 0
            %1139 = vmatprep.mubr.bf16.mxu0 0
            %1140 = vmatmul.mubr.bf16.gmra.mrb[0].mxu0 %v1065
            %v1141 = vpop.f32.mrb[0].mxu0
            %v1142 = vadd.f32 0.0, %v1141
            %v1143 = vpop.f32.mrb[0].mxu0
            %v1144 = vadd.f32 0.0, %v1143
            %v1145 = vpop.f32.mrb[0].mxu0
            %v1146 = vpop.f32.mrb[0].mxu0
            %1147 = vdwg.mxu0
            %v1148 = vadd.f32 %v1061, %v1101
            %v1149 = vadd.f32 %v1062, %v1103
            %v1150 = vadd.f32 %v1063, %v1142
            %v1151 = vadd.f32 %v1064, %v1144
            %v1152 = vxor.u32 %v1148, 2147483648
            %v1153 = vxor.u32 %v1149, 2147483648
            %v1154 = vxor.u32 %v1150, 2147483648
            %v1155 = vmul.f32 %v1152, 1.442695
            %v1156 = vpow.pop %v1155
            %v1157 = vmul.f32 %v1153, 1.442695
            %v1158 = vpow.pop %v1157
            %v1159 = vmul.f32 %v1154, 1.442695
            %v1160 = vpow.pop %v1159
            %v1161 = vadd.f32 %v1156, 1.0
            %v1162 = vadd.f32 %v1158, 1.0
            %v1163 = vadd.f32 %v1160, 1.0
            %v1164 = vrcp.pop %v1161
            %v1165 = vmul.f32 1.0, %v1164
            %v1166 = vrcp.pop %v1162
            %v1167 = vmul.f32 1.0, %v1166
            %v1168 = vrcp.pop %v1163
            %v1169 = vmul.f32 1.0, %v1168
            %v1170 = vtanh.pop %v1151
            %v1171 = vmul.f32 %v1167, %v1056
            %v1172 = vmul.f32 %v1165, %v1170
            %v1173 = vadd.f32 %v1171, %v1172
            %v1174 = vtanh.pop %v1173
            %v1175 = vmul.f32 %v1169, %v1174
            %s1176 = sadd.s32 %s435, 1
            %v1177 = vstv %s1176
            %vm1178 = vcmp.lt.s32.totalorder %v1177, %v771
            %v1179 = vsel %vm1178, %v1175, %v1055
            %v1180 = vsel %vm1178, %v1173, %v1056
            %v1181 = vsel %vm1178, %v1175, 0.0
            %v1182 = vpack.c.bf16 %v1181, %v1181
            %s1183 = scalar_lea.vmem %s417, 4
            %1184 = vst [vmem:[%s1183] sm:$0xf] %v1182
            %s1185 = scalar_lea.vmem [#allocation2], 64
            %v1186 = vld [vmem:[%s1185] sm:$0xff]
            %v1187 = vld [vmem:[%s1185 + $0x8] sm:$0xff]
            %v1188 = vld [vmem:[%s1185 + $0x10] sm:$0xff]
            %v1189 = vld [vmem:[%s1185 + $0x18] sm:$0xff]
            %v1190 = vpack.c.bf16 %v1179, %v1179
            %1191 = vmatprep.subr.bf16.mxu0 %v880
            %1192 = vmatpush1.bf16.msra.mxu0 %v879
            %1193 = vmatprep.subr.bf16.mxu0 %v884
            %1194 = vmatpush1.bf16.msra.mxu0 %v883
            %1195 = vmatprep.subr.bf16.mxu0 %v888
            %1196 = vmatpush1.bf16.msra.mxu0 %v887
            %1197 = vmatprep.subr.bf16.mxu0 %v892
            %1198 = vmatpush1.bf16.msra.mxu0 %v891
            %1199 = vmatprep.subr.bf16.mxu0 %v896
            %1200 = vmatpush1.bf16.msra.mxu0 %v895
            %1201 = vmatprep.subr.bf16.mxu0 %v900
            %1202 = vmatpush1.bf16.msra.mxu0 %v899
            %1203 = vmatprep.subr.bf16.mxu0 %v904
            %1204 = vmatpush1.bf16.msra.mxu0 %v903
            %1205 = vmatprep.subr.bf16.mxu0 %v908
            %1206 = vmatpush1.bf16.msra.mxu0 %v907
            %1207 = vmatprep.subr.bf16.mxu0 0
            %1208 = vmatpush1.bf16.msra.mxu0 0
            %1209 = vmatprep.subr.bf16.mxu0 0
            %1210 = vmatpush1.bf16.msra.mxu0 0
            %1211 = vmatprep.subr.bf16.mxu0 0
            %1212 = vmatpush1.bf16.msra.mxu0 0
            %1213 = vmatprep.subr.bf16.mxu0 0
            %1214 = vmatpush1.bf16.msra.mxu0 0
            %1215 = vmatprep.subr.bf16.mxu0 0
            %1216 = vmatpush1.bf16.msra.mxu0 0
            %1217 = vmatprep.subr.bf16.mxu0 0
            %1218 = vmatpush1.bf16.msra.mxu0 0
            %1219 = vmatprep.subr.bf16.mxu0 0
            %1220 = vmatpush1.bf16.msra.mxu0 0
            %1221 = vmatprep.subr.bf16.mxu0 0
            %1222 = vmatpush1.bf16.msra.mxu0 0
            %1223 = vmatprep.mubr.bf16.mxu0 0
            %1224 = vmatmul.mubr.bf16.gmra.mrb[0].mxu0 %v1190
            %v1225 = vpop.f32.mrb[0].mxu0
            %v1226 = vadd.f32 0.0, %v1225
            %v1227 = vpop.f32.mrb[0].mxu0
            %v1228 = vadd.f32 0.0, %v1227
            %v1229 = vpop.f32.mrb[0].mxu0
            %v1230 = vpop.f32.mrb[0].mxu0
            %1231 = vdwg.mxu0
            %1232 = vmatprep.subr.bf16.mxu0 %v882
            %1233 = vmatpush1.bf16.msra.mxu0 %v881
            %1234 = vmatprep.subr.bf16.mxu0 %v886
            %1235 = vmatpush1.bf16.msra.mxu0 %v885
            %1236 = vmatprep.subr.bf16.mxu0 %v890
            %1237 = vmatpush1.bf16.msra.mxu0 %v889
            %1238 = vmatprep.subr.bf16.mxu0 %v894
            %1239 = vmatpush1.bf16.msra.mxu0 %v893
            %1240 = vmatprep.subr.bf16.mxu0 %v898
            %1241 = vmatpush1.bf16.msra.mxu0 %v897
            %1242 = vmatprep.subr.bf16.mxu0 %v902
            %1243 = vmatpush1.bf16.msra.mxu0 %v901
            %1244 = vmatprep.subr.bf16.mxu0 %v906
            %1245 = vmatpush1.bf16.msra.mxu0 %v905
            %1246 = vmatprep.subr.bf16.mxu0 %v910
            %1247 = vmatpush1.bf16.msra.mxu0 %v909
            %1248 = vmatprep.subr.bf16.mxu0 0
            %1249 = vmatpush1.bf16.msra.mxu0 0
            %1250 = vmatprep.subr.bf16.mxu0 0
            %1251 = vmatpush1.bf16.msra.mxu0 0
            %1252 = vmatprep.subr.bf16.mxu0 0
            %1253 = vmatpush1.bf16.msra.mxu0 0
            %1254 = vmatprep.subr.bf16.mxu0 0
            %1255 = vmatpush1.bf16.msra.mxu0 0
            %1256 = vmatprep.subr.bf16.mxu0 0
            %1257 = vmatpush1.bf16.msra.mxu0 0
            %1258 = vmatprep.subr.bf16.mxu0 0
            %1259 = vmatpush1.bf16.msra.mxu0 0
            %1260 = vmatprep.subr.bf16.mxu0 0
            %1261 = vmatpush1.bf16.msra.mxu0 0
            %1262 = vmatprep.subr.bf16.mxu0 0
            %1263 = vmatpush1.bf16.msra.mxu0 0
            %1264 = vmatprep.mubr.bf16.mxu0 0
            %1265 = vmatmul.mubr.bf16.gmra.mrb[0].mxu0 %v1190
            %v1266 = vpop.f32.mrb[0].mxu0
            %v1267 = vadd.f32 0.0, %v1266
            %v1268 = vpop.f32.mrb[0].mxu0
            %v1269 = vadd.f32 0.0, %v1268
            %v1270 = vpop.f32.mrb[0].mxu0
            %v1271 = vpop.f32.mrb[0].mxu0
            %1272 = vdwg.mxu0
            %v1273 = vadd.f32 %v1186, %v1226
            %v1274 = vadd.f32 %v1187, %v1228
            %v1275 = vadd.f32 %v1188, %v1267
            %v1276 = vadd.f32 %v1189, %v1269
            %v1277 = vxor.u32 %v1273, 2147483648
            %v1278 = vxor.u32 %v1274, 2147483648
            %v1279 = vxor.u32 %v1275, 2147483648
            %v1280 = vmul.f32 %v1277, 1.442695
            %v1281 = vpow.pop %v1280
            %v1282 = vmul.f32 %v1278, 1.442695
            %v1283 = vpow.pop %v1282
            %v1284 = vmul.f32 %v1279, 1.442695
            %v1285 = vpow.pop %v1284
            %v1286 = vadd.f32 %v1281, 1.0
            %v1287 = vadd.f32 %v1283, 1.0
            %v1288 = vadd.f32 %v1285, 1.0
            %v1289 = vrcp.pop %v1286
            %v1290 = vmul.f32 1.0, %v1289
            %v1291 = vrcp.pop %v1287
            %v1292 = vmul.f32 1.0, %v1291
            %v1293 = vrcp.pop %v1288
            %v1294 = vmul.f32 1.0, %v1293
            %v1295 = vtanh.pop %v1276
            %v1296 = vmul.f32 %v1292, %v1180
            %v1297 = vmul.f32 %v1290, %v1295
            %v1298 = vadd.f32 %v1296, %v1297
            %v1299 = vtanh.pop %v1298
            %v1300 = vmul.f32 %v1294, %v1299
            %s1301 = sadd.s32 %s435, 2
            %v1302 = vstv %s1301
            %vm1303 = vcmp.lt.s32.totalorder %v1302, %v771
            %v1304 = vsel %vm1303, %v1300, %v1179
            %v1305 = vsel %vm1303, %v1298, %v1180
            %v1306 = vsel %vm1303, %v1300, 0.0
            %v1307 = vpack.c.bf16 %v1306, %v1306
            %s1308 = scalar_lea.vmem %s417, 8
            %1309 = vst [vmem:[%s1308] sm:$0xf] %v1307
            %s1310 = scalar_lea.vmem [#allocation2], 96
            %v1311 = vld [vmem:[%s1310] sm:$0xff]
            %v1312 = vld [vmem:[%s1310 + $0x8] sm:$0xff]
            %v1313 = vld [vmem:[%s1310 + $0x10] sm:$0xff]
            %v1314 = vld [vmem:[%s1310 + $0x18] sm:$0xff]
            %v1315 = vpack.c.bf16 %v1304, %v1304
            %1316 = vmatprep.subr.bf16.mxu0 %v880
            %1317 = vmatpush1.bf16.msra.mxu0 %v879
            %1318 = vmatprep.subr.bf16.mxu0 %v884
            %1319 = vmatpush1.bf16.msra.mxu0 %v883
            %1320 = vmatprep.subr.bf16.mxu0 %v888
            %1321 = vmatpush1.bf16.msra.mxu0 %v887
            %1322 = vmatprep.subr.bf16.mxu0 %v892
            %1323 = vmatpush1.bf16.msra.mxu0 %v891
            %1324 = vmatprep.subr.bf16.mxu0 %v896
            %1325 = vmatpush1.bf16.msra.mxu0 %v895
            %1326 = vmatprep.subr.bf16.mxu0 %v900
            %1327 = vmatpush1.bf16.msra.mxu0 %v899
            %1328 = vmatprep.subr.bf16.mxu0 %v904
            %1329 = vmatpush1.bf16.msra.mxu0 %v903
            %1330 = vmatprep.subr.bf16.mxu0 %v908
            %1331 = vmatpush1.bf16.msra.mxu0 %v907
            %1332 = vmatprep.subr.bf16.mxu0 0
            %1333 = vmatpush1.bf16.msra.mxu0 0
            %1334 = vmatprep.subr.bf16.mxu0 0
            %1335 = vmatpush1.bf16.msra.mxu0 0
            %1336 = vmatprep.subr.bf16.mxu0 0
            %1337 = vmatpush1.bf16.msra.mxu0 0
            %1338 = vmatprep.subr.bf16.mxu0 0
            %1339 = vmatpush1.bf16.msra.mxu0 0
            %1340 = vmatprep.subr.bf16.mxu0 0
            %1341 = vmatpush1.bf16.msra.mxu0 0
            %1342 = vmatprep.subr.bf16.mxu0 0
            %1343 = vmatpush1.bf16.msra.mxu0 0
            %1344 = vmatprep.subr.bf16.mxu0 0
            %1345 = vmatpush1.bf16.msra.mxu0 0
            %1346 = vmatprep.subr.bf16.mxu0 0
            %1347 = vmatpush1.bf16.msra.mxu0 0
            %1348 = vmatprep.mubr.bf16.mxu0 0
            %1349 = vmatmul.mubr.bf16.gmra.mrb[0].mxu0 %v1315
            %v1350 = vpop.f32.mrb[0].mxu0
            %v1351 = vadd.f32 0.0, %v1350
            %v1352 = vpop.f32.mrb[0].mxu0
            %v1353 = vadd.f32 0.0, %v1352
            %v1354 = vpop.f32.mrb[0].mxu0
            %v1355 = vpop.f32.mrb[0].mxu0
            %1356 = vdwg.mxu0
            %1357 = vmatprep.subr.bf16.mxu0 %v882
            %1358 = vmatpush1.bf16.msra.mxu0 %v881
            %1359 = vmatprep.subr.bf16.mxu0 %v886
            %1360 = vmatpush1.bf16.msra.mxu0 %v885
            %1361 = vmatprep.subr.bf16.mxu0 %v890
            %1362 = vmatpush1.bf16.msra.mxu0 %v889
            %1363 = vmatprep.subr.bf16.mxu0 %v894
            %1364 = vmatpush1.bf16.msra.mxu0 %v893
            %1365 = vmatprep.subr.bf16.mxu0 %v898
            %1366 = vmatpush1.bf16.msra.mxu0 %v897
            %1367 = vmatprep.subr.bf16.mxu0 %v902
            %1368 = vmatpush1.bf16.msra.mxu0 %v901
            %1369 = vmatprep.subr.bf16.mxu0 %v906
            %1370 = vmatpush1.bf16.msra.mxu0 %v905
            %1371 = vmatprep.subr.bf16.mxu0 %v910
            %1372 = vmatpush1.bf16.msra.mxu0 %v909
            %1373 = vmatprep.subr.bf16.mxu0 0
            %1374 = vmatpush1.bf16.msra.mxu0 0
            %1375 = vmatprep.subr.bf16.mxu0 0
            %1376 = vmatpush1.bf16.msra.mxu0 0
            %1377 = vmatprep.subr.bf16.mxu0 0
            %1378 = vmatpush1.bf16.msra.mxu0 0
            %1379 = vmatprep.subr.bf16.mxu0 0
            %1380 = vmatpush1.bf16.msra.mxu0 0
            %1381 = vmatprep.subr.bf16.mxu0 0
            %1382 = vmatpush1.bf16.msra.mxu0 0
            %1383 = vmatprep.subr.bf16.mxu0 0
            %1384 = vmatpush1.bf16.msra.mxu0 0
            %1385 = vmatprep.subr.bf16.mxu0 0
            %1386 = vmatpush1.bf16.msra.mxu0 0
            %1387 = vmatprep.subr.bf16.mxu0 0
            %1388 = vmatpush1.bf16.msra.mxu0 0
            %1389 = vmatprep.mubr.bf16.mxu0 0
            %1390 = vmatmul.mubr.bf16.gmra.mrb[0].mxu0 %v1315
            %v1391 = vpop.f32.mrb[0].mxu0
            %v1392 = vadd.f32 0.0, %v1391
            %v1393 = vpop.f32.mrb[0].mxu0
            %v1394 = vadd.f32 0.0, %v1393
            %v1395 = vpop.f32.mrb[0].mxu0
            %v1396 = vpop.f32.mrb[0].mxu0
            %1397 = vdwg.mxu0
            %v1398 = vadd.f32 %v1311, %v1351
            %v1399 = vadd.f32 %v1312, %v1353
            %v1400 = vadd.f32 %v1313, %v1392
            %v1401 = vadd.f32 %v1314, %v1394
            %v1402 = vxor.u32 %v1398, 2147483648
            %v1403 = vxor.u32 %v1399, 2147483648
            %v1404 = vxor.u32 %v1400, 2147483648
            %v1405 = vmul.f32 %v1402, 1.442695
            %v1406 = vpow.pop %v1405
            %v1407 = vmul.f32 %v1403, 1.442695
            %v1408 = vpow.pop %v1407
            %v1409 = vmul.f32 %v1404, 1.442695
            %v1410 = vpow.pop %v1409
            %v1411 = vadd.f32 %v1406, 1.0
            %v1412 = vadd.f32 %v1408, 1.0
            %v1413 = vadd.f32 %v1410, 1.0
            %v1414 = vrcp.pop %v1411
            %v1415 = vmul.f32 1.0, %v1414
            %v1416 = vrcp.pop %v1412
            %v1417 = vmul.f32 1.0, %v1416
            %v1418 = vrcp.pop %v1413
            %v1419 = vmul.f32 1.0, %v1418
            %v1420 = vtanh.pop %v1401
            %v1421 = vmul.f32 %v1417, %v1305
            %v1422 = vmul.f32 %v1415, %v1420
            %v1423 = vadd.f32 %v1421, %v1422
            %v1424 = vtanh.pop %v1423
            %v1425 = vmul.f32 %v1419, %v1424
            %s1426 = sadd.s32 %s435, 3
            %v1427 = vstv %s1426
            %vm1428 = vcmp.lt.s32.totalorder %v1427, %v771
            %v1429 = vsel %vm1428, %v1425, %v1304
            %v1430 = vsel %vm1428, %v1423, %v1305
            %v1431 = vsel %vm1428, %v1425, 0.0
            %v1432 = vpack.c.bf16 %v1431, %v1431
            %s1433 = scalar_lea.vmem %s417, 12
            %1434 = vst [vmem:[%s1433] sm:$0xf] %v1432
            %s1435 = scalar_lea.vmem [#allocation2], 128
            %v1436 = vld [vmem:[%s1435] sm:$0xff]
            %v1437 = vld [vmem:[%s1435 + $0x8] sm:$0xff]
            %v1438 = vld [vmem:[%s1435 + $0x10] sm:$0xff]
            %v1439 = vld [vmem:[%s1435 + $0x18] sm:$0xff]
            %v1440 = vpack.c.bf16 %v1429, %v1429
            %1441 = vmatprep.subr.bf16.mxu0 %v880
            %1442 = vmatpush1.bf16.msra.mxu0 %v879
            %1443 = vmatprep.subr.bf16.mxu0 %v884
            %1444 = vmatpush1.bf16.msra.mxu0 %v883
            %1445 = vmatprep.subr.bf16.mxu0 %v888
            %1446 = vmatpush1.bf16.msra.mxu0 %v887
            %1447 = vmatprep.subr.bf16.mxu0 %v892
            %1448 = vmatpush1.bf16.msra.mxu0 %v891
            %1449 = vmatprep.subr.bf16.mxu0 %v896
            %1450 = vmatpush1.bf16.msra.mxu0 %v895
            %1451 = vmatprep.subr.bf16.mxu0 %v900
            %1452 = vmatpush1.bf16.msra.mxu0 %v899
            %1453 = vmatprep.subr.bf16.mxu0 %v904
            %1454 = vmatpush1.bf16.msra.mxu0 %v903
            %1455 = vmatprep.subr.bf16.mxu0 %v908
            %1456 = vmatpush1.bf16.msra.mxu0 %v907
            %1457 = vmatprep.subr.bf16.mxu0 0
            %1458 = vmatpush1.bf16.msra.mxu0 0
            %1459 = vmatprep.subr.bf16.mxu0 0
            %1460 = vmatpush1.bf16.msra.mxu0 0
            %1461 = vmatprep.subr.bf16.mxu0 0
            %1462 = vmatpush1.bf16.msra.mxu0 0
            %1463 = vmatprep.subr.bf16.mxu0 0
            %1464 = vmatpush1.bf16.msra.mxu0 0
            %1465 = vmatprep.subr.bf16.mxu0 0
            %1466 = vmatpush1.bf16.msra.mxu0 0
            %1467 = vmatprep.subr.bf16.mxu0 0
            %1468 = vmatpush1.bf16.msra.mxu0 0
            %1469 = vmatprep.subr.bf16.mxu0 0
            %1470 = vmatpush1.bf16.msra.mxu0 0
            %1471 = vmatprep.subr.bf16.mxu0 0
            %1472 = vmatpush1.bf16.msra.mxu0 0
            %1473 = vmatprep.mubr.bf16.mxu0 0
            %1474 = vmatmul.mubr.bf16.gmra.mrb[0].mxu0 %v1440
            %v1475 = vpop.f32.mrb[0].mxu0
            %v1476 = vadd.f32 0.0, %v1475
            %v1477 = vpop.f32.mrb[0].mxu0
            %v1478 = vadd.f32 0.0, %v1477
            %v1479 = vpop.f32.mrb[0].mxu0
            %v1480 = vpop.f32.mrb[0].mxu0
            %1481 = vdwg.mxu0
            %1482 = vmatprep.subr.bf16.mxu0 %v882
            %1483 = vmatpush1.bf16.msra.mxu0 %v881
            %1484 = vmatprep.subr.bf16.mxu0 %v886
            %1485 = vmatpush1.bf16.msra.mxu0 %v885
            %1486 = vmatprep.subr.bf16.mxu0 %v890
            %1487 = vmatpush1.bf16.msra.mxu0 %v889
            %1488 = vmatprep.subr.bf16.mxu0 %v894
            %1489 = vmatpush1.bf16.msra.mxu0 %v893
            %1490 = vmatprep.subr.bf16.mxu0 %v898
            %1491 = vmatpush1.bf16.msra.mxu0 %v897
            %1492 = vmatprep.subr.bf16.mxu0 %v902
            %1493 = vmatpush1.bf16.msra.mxu0 %v901
            %1494 = vmatprep.subr.bf16.mxu0 %v906
            %1495 = vmatpush1.bf16.msra.mxu0 %v905
            %1496 = vmatprep.subr.bf16.mxu0 %v910
            %1497 = vmatpush1.bf16.msra.mxu0 %v909
            %1498 = vmatprep.subr.bf16.mxu0 0
            %1499 = vmatpush1.bf16.msra.mxu0 0
            %1500 = vmatprep.subr.bf16.mxu0 0
            %1501 = vmatpush1.bf16.msra.mxu0 0
            %1502 = vmatprep.subr.bf16.mxu0 0
            %1503 = vmatpush1.bf16.msra.mxu0 0
            %1504 = vmatprep.subr.bf16.mxu0 0
            %1505 = vmatpush1.bf16.msra.mxu0 0
            %1506 = vmatprep.subr.bf16.mxu0 0
            %1507 = vmatpush1.bf16.msra.mxu0 0
            %1508 = vmatprep.subr.bf16.mxu0 0
            %1509 = vmatpush1.bf16.msra.mxu0 0
            %1510 = vmatprep.subr.bf16.mxu0 0
            %1511 = vmatpush1.bf16.msra.mxu0 0
            %1512 = vmatprep.subr.bf16.mxu0 0
            %1513 = vmatpush1.bf16.msra.mxu0 0
            %1514 = vmatprep.mubr.bf16.mxu0 0
            %1515 = vmatmul.mubr.bf16.gmra.mrb[0].mxu0 %v1440
            %v1516 = vpop.f32.mrb[0].mxu0
            %v1517 = vadd.f32 0.0, %v1516
            %v1518 = vpop.f32.mrb[0].mxu0
            %v1519 = vadd.f32 0.0, %v1518
            %v1520 = vpop.f32.mrb[0].mxu0
            %v1521 = vpop.f32.mrb[0].mxu0
            %1522 = vdwg.mxu0
            %v1523 = vadd.f32 %v1436, %v1476
            %v1524 = vadd.f32 %v1437, %v1478
            %v1525 = vadd.f32 %v1438, %v1517
            %v1526 = vadd.f32 %v1439, %v1519
            %v1527 = vxor.u32 %v1523, 2147483648
            %v1528 = vxor.u32 %v1524, 2147483648
            %v1529 = vxor.u32 %v1525, 2147483648
            %v1530 = vmul.f32 %v1527, 1.442695
            %v1531 = vpow.pop %v1530
            %v1532 = vmul.f32 %v1528, 1.442695
            %v1533 = vpow.pop %v1532
            %v1534 = vmul.f32 %v1529, 1.442695
            %v1535 = vpow.pop %v1534
            %v1536 = vadd.f32 %v1531, 1.0
            %v1537 = vadd.f32 %v1533, 1.0
            %v1538 = vadd.f32 %v1535, 1.0
            %v1539 = vrcp.pop %v1536
            %v1540 = vmul.f32 1.0, %v1539
            %v1541 = vrcp.pop %v1537
            %v1542 = vmul.f32 1.0, %v1541
            %v1543 = vrcp.pop %v1538
            %v1544 = vmul.f32 1.0, %v1543
            %v1545 = vtanh.pop %v1526
            %v1546 = vmul.f32 %v1542, %v1430
            %v1547 = vmul.f32 %v1540, %v1545
            %v1548 = vadd.f32 %v1546, %v1547
            %v1549 = vtanh.pop %v1548
            %v1550 = vmul.f32 %v1544, %v1549
            %s1551 = sadd.s32 %s435, 4
            %v1552 = vstv %s1551
            %vm1553 = vcmp.lt.s32.totalorder %v1552, %v771
            %v1554 = vsel %vm1553, %v1550, %v1429
            %v1555 = vsel %vm1553, %v1548, %v1430
            %v1556 = vsel %vm1553, %v1550, 0.0
            %v1557 = vpack.c.bf16 %v1556, %v1556
            %s1558 = scalar_lea.vmem %s417, 16
            %1559 = vst [vmem:[%s1558] sm:$0xf] %v1557
            %s1560 = scalar_lea.vmem [#allocation2], 160
            %v1561 = vld [vmem:[%s1560] sm:$0xff]
            %v1562 = vld [vmem:[%s1560 + $0x8] sm:$0xff]
            %v1563 = vld [vmem:[%s1560 + $0x10] sm:$0xff]
            %v1564 = vld [vmem:[%s1560 + $0x18] sm:$0xff]
            %v1565 = vpack.c.bf16 %v1554, %v1554
            %1566 = vmatprep.subr.bf16.mxu0 %v880
            %1567 = vmatpush1.bf16.msra.mxu0 %v879
            %1568 = vmatprep.subr.bf16.mxu0 %v884
            %1569 = vmatpush1.bf16.msra.mxu0 %v883
            %1570 = vmatprep.subr.bf16.mxu0 %v888
            %1571 = vmatpush1.bf16.msra.mxu0 %v887
            %1572 = vmatprep.subr.bf16.mxu0 %v892
            %1573 = vmatpush1.bf16.msra.mxu0 %v891
            %1574 = vmatprep.subr.bf16.mxu0 %v896
            %1575 = vmatpush1.bf16.msra.mxu0 %v895
            %1576 = vmatprep.subr.bf16.mxu0 %v900
            %1577 = vmatpush1.bf16.msra.mxu0 %v899
            %1578 = vmatprep.subr.bf16.mxu0 %v904
            %1579 = vmatpush1.bf16.msra.mxu0 %v903
            %1580 = vmatprep.subr.bf16.mxu0 %v908
            %1581 = vmatpush1.bf16.msra.mxu0 %v907
            %1582 = vmatprep.subr.bf16.mxu0 0
            %1583 = vmatpush1.bf16.msra.mxu0 0
            %1584 = vmatprep.subr.bf16.mxu0 0
            %1585 = vmatpush1.bf16.msra.mxu0 0
            %1586 = vmatprep.subr.bf16.mxu0 0
            %1587 = vmatpush1.bf16.msra.mxu0 0
            %1588 = vmatprep.subr.bf16.mxu0 0
            %1589 = vmatpush1.bf16.msra.mxu0 0
            %1590 = vmatprep.subr.bf16.mxu0 0
            %1591 = vmatpush1.bf16.msra.mxu0 0
            %1592 = vmatprep.subr.bf16.mxu0 0
            %1593 = vmatpush1.bf16.msra.mxu0 0
            %1594 = vmatprep.subr.bf16.mxu0 0
            %1595 = vmatpush1.bf16.msra.mxu0 0
            %1596 = vmatprep.subr.bf16.mxu0 0
            %1597 = vmatpush1.bf16.msra.mxu0 0
            %1598 = vmatprep.mubr.bf16.mxu0 0
            %1599 = vmatmul.mubr.bf16.gmra.mrb[0].mxu0 %v1565
            %v1600 = vpop.f32.mrb[0].mxu0
            %v1601 = vadd.f32 0.0, %v1600
            %v1602 = vpop.f32.mrb[0].mxu0
            %v1603 = vadd.f32 0.0, %v1602
            %v1604 = vpop.f32.mrb[0].mxu0
            %v1605 = vpop.f32.mrb[0].mxu0
            %1606 = vdwg.mxu0
            %1607 = vmatprep.subr.bf16.mxu0 %v882
            %1608 = vmatpush1.bf16.msra.mxu0 %v881
            %1609 = vmatprep.subr.bf16.mxu0 %v886
            %1610 = vmatpush1.bf16.msra.mxu0 %v885
            %1611 = vmatprep.subr.bf16.mxu0 %v890
            %1612 = vmatpush1.bf16.msra.mxu0 %v889
            %1613 = vmatprep.subr.bf16.mxu0 %v894
            %1614 = vmatpush1.bf16.msra.mxu0 %v893
            %1615 = vmatprep.subr.bf16.mxu0 %v898
            %1616 = vmatpush1.bf16.msra.mxu0 %v897
            %1617 = vmatprep.subr.bf16.mxu0 %v902
            %1618 = vmatpush1.bf16.msra.mxu0 %v901
            %1619 = vmatprep.subr.bf16.mxu0 %v906
            %1620 = vmatpush1.bf16.msra.mxu0 %v905
            %1621 = vmatprep.subr.bf16.mxu0 %v910
            %1622 = vmatpush1.bf16.msra.mxu0 %v909
            %1623 = vmatprep.subr.bf16.mxu0 0
            %1624 = vmatpush1.bf16.msra.mxu0 0
            %1625 = vmatprep.subr.bf16.mxu0 0
            %1626 = vmatpush1.bf16.msra.mxu0 0
            %1627 = vmatprep.subr.bf16.mxu0 0
            %1628 = vmatpush1.bf16.msra.mxu0 0
            %1629 = vmatprep.subr.bf16.mxu0 0
            %1630 = vmatpush1.bf16.msra.mxu0 0
            %1631 = vmatprep.subr.bf16.mxu0 0
            %1632 = vmatpush1.bf16.msra.mxu0 0
            %1633 = vmatprep.subr.bf16.mxu0 0
            %1634 = vmatpush1.bf16.msra.mxu0 0
            %1635 = vmatprep.subr.bf16.mxu0 0
            %1636 = vmatpush1.bf16.msra.mxu0 0
            %1637 = vmatprep.subr.bf16.mxu0 0
            %1638 = vmatpush1.bf16.msra.mxu0 0
            %1639 = vmatprep.mubr.bf16.mxu0 0
            %1640 = vmatmul.mubr.bf16.gmra.mrb[0].mxu0 %v1565
            %v1641 = vpop.f32.mrb[0].mxu0
            %v1642 = vadd.f32 0.0, %v1641
            %v1643 = vpop.f32.mrb[0].mxu0
            %v1644 = vadd.f32 0.0, %v1643
            %v1645 = vpop.f32.mrb[0].mxu0
            %v1646 = vpop.f32.mrb[0].mxu0
            %1647 = vdwg.mxu0
            %v1648 = vadd.f32 %v1561, %v1601
            %v1649 = vadd.f32 %v1562, %v1603
            %v1650 = vadd.f32 %v1563, %v1642
            %v1651 = vadd.f32 %v1564, %v1644
            %v1652 = vxor.u32 %v1648, 2147483648
            %v1653 = vxor.u32 %v1649, 2147483648
            %v1654 = vxor.u32 %v1650, 2147483648
            %v1655 = vmul.f32 %v1652, 1.442695
            %v1656 = vpow.pop %v1655
            %v1657 = vmul.f32 %v1653, 1.442695
            %v1658 = vpow.pop %v1657
            %v1659 = vmul.f32 %v1654, 1.442695
            %v1660 = vpow.pop %v1659
            %v1661 = vadd.f32 %v1656, 1.0
            %v1662 = vadd.f32 %v1658, 1.0
            %v1663 = vadd.f32 %v1660, 1.0
            %v1664 = vrcp.pop %v1661
            %v1665 = vmul.f32 1.0, %v1664
            %v1666 = vrcp.pop %v1662
            %v1667 = vmul.f32 1.0, %v1666
            %v1668 = vrcp.pop %v1663
            %v1669 = vmul.f32 1.0, %v1668
            %v1670 = vtanh.pop %v1651
            %v1671 = vmul.f32 %v1667, %v1555
            %v1672 = vmul.f32 %v1665, %v1670
            %v1673 = vadd.f32 %v1671, %v1672
            %v1674 = vtanh.pop %v1673
            %v1675 = vmul.f32 %v1669, %v1674
            %s1676 = sadd.s32 %s435, 5
            %v1677 = vstv %s1676
            %vm1678 = vcmp.lt.s32.totalorder %v1677, %v771
            %v1679 = vsel %vm1678, %v1675, %v1554
            %v1680 = vsel %vm1678, %v1673, %v1555
            %v1681 = vsel %vm1678, %v1675, 0.0
            %v1682 = vpack.c.bf16 %v1681, %v1681
            %s1683 = scalar_lea.vmem %s417, 20
            %1684 = vst [vmem:[%s1683] sm:$0xf] %v1682
            %s1685 = scalar_lea.vmem [#allocation2], 192
            %v1686 = vld [vmem:[%s1685] sm:$0xff]
            %v1687 = vld [vmem:[%s1685 + $0x8] sm:$0xff]
            %v1688 = vld [vmem:[%s1685 + $0x10] sm:$0xff]
            %v1689 = vld [vmem:[%s1685 + $0x18] sm:$0xff]
            %v1690 = vpack.c.bf16 %v1679, %v1679
            %1691 = vmatprep.subr.bf16.mxu0 %v880
            %1692 = vmatpush1.bf16.msra.mxu0 %v879
            %1693 = vmatprep.subr.bf16.mxu0 %v884
            %1694 = vmatpush1.bf16.msra.mxu0 %v883
            %1695 = vmatprep.subr.bf16.mxu0 %v888
            %1696 = vmatpush1.bf16.msra.mxu0 %v887
            %1697 = vmatprep.subr.bf16.mxu0 %v892
            %1698 = vmatpush1.bf16.msra.mxu0 %v891
            %1699 = vmatprep.subr.bf16.mxu0 %v896
            %1700 = vmatpush1.bf16.msra.mxu0 %v895
            %1701 = vmatprep.subr.bf16.mxu0 %v900
            %1702 = vmatpush1.bf16.msra.mxu0 %v899
            %1703 = vmatprep.subr.bf16.mxu0 %v904
            %1704 = vmatpush1.bf16.msra.mxu0 %v903
            %1705 = vmatprep.subr.bf16.mxu0 %v908
            %1706 = vmatpush1.bf16.msra.mxu0 %v907
            %1707 = vmatprep.subr.bf16.mxu0 0
            %1708 = vmatpush1.bf16.msra.mxu0 0
            %1709 = vmatprep.subr.bf16.mxu0 0
            %1710 = vmatpush1.bf16.msra.mxu0 0
            %1711 = vmatprep.subr.bf16.mxu0 0
            %1712 = vmatpush1.bf16.msra.mxu0 0
            %1713 = vmatprep.subr.bf16.mxu0 0
            %1714 = vmatpush1.bf16.msra.mxu0 0
            %1715 = vmatprep.subr.bf16.mxu0 0
            %1716 = vmatpush1.bf16.msra.mxu0 0
            %1717 = vmatprep.subr.bf16.mxu0 0
            %1718 = vmatpush1.bf16.msra.mxu0 0
            %1719 = vmatprep.subr.bf16.mxu0 0
            %1720 = vmatpush1.bf16.msra.mxu0 0
            %1721 = vmatprep.subr.bf16.mxu0 0
            %1722 = vmatpush1.bf16.msra.mxu0 0
            %1723 = vmatprep.mubr.bf16.mxu0 0
            %1724 = vmatmul.mubr.bf16.gmra.mrb[0].mxu0 %v1690
            %v1725 = vpop.f32.mrb[0].mxu0
            %v1726 = vadd.f32 0.0, %v1725
            %v1727 = vpop.f32.mrb[0].mxu0
            %v1728 = vadd.f32 0.0, %v1727
            %v1729 = vpop.f32.mrb[0].mxu0
            %v1730 = vpop.f32.mrb[0].mxu0
            %1731 = vdwg.mxu0
            %1732 = vmatprep.subr.bf16.mxu0 %v882
            %1733 = vmatpush1.bf16.msra.mxu0 %v881
            %1734 = vmatprep.subr.bf16.mxu0 %v886
            %1735 = vmatpush1.bf16.msra.mxu0 %v885
            %1736 = vmatprep.subr.bf16.mxu0 %v890
            %1737 = vmatpush1.bf16.msra.mxu0 %v889
            %1738 = vmatprep.subr.bf16.mxu0 %v894
            %1739 = vmatpush1.bf16.msra.mxu0 %v893
            %1740 = vmatprep.subr.bf16.mxu0 %v898
            %1741 = vmatpush1.bf16.msra.mxu0 %v897
            %1742 = vmatprep.subr.bf16.mxu0 %v902
            %1743 = vmatpush1.bf16.msra.mxu0 %v901
            %1744 = vmatprep.subr.bf16.mxu0 %v906
            %1745 = vmatpush1.bf16.msra.mxu0 %v905
            %1746 = vmatprep.subr.bf16.mxu0 %v910
            %1747 = vmatpush1.bf16.msra.mxu0 %v909
            %1748 = vmatprep.subr.bf16.mxu0 0
            %1749 = vmatpush1.bf16.msra.mxu0 0
            %1750 = vmatprep.subr.bf16.mxu0 0
            %1751 = vmatpush1.bf16.msra.mxu0 0
            %1752 = vmatprep.subr.bf16.mxu0 0
            %1753 = vmatpush1.bf16.msra.mxu0 0
            %1754 = vmatprep.subr.bf16.mxu0 0
            %1755 = vmatpush1.bf16.msra.mxu0 0
            %1756 = vmatprep.subr.bf16.mxu0 0
            %1757 = vmatpush1.bf16.msra.mxu0 0
            %1758 = vmatprep.subr.bf16.mxu0 0
            %1759 = vmatpush1.bf16.msra.mxu0 0
            %1760 = vmatprep.subr.bf16.mxu0 0
            %1761 = vmatpush1.bf16.msra.mxu0 0
            %1762 = vmatprep.subr.bf16.mxu0 0
            %1763 = vmatpush1.bf16.msra.mxu0 0
            %1764 = vmatprep.mubr.bf16.mxu0 0
            %1765 = vmatmul.mubr.bf16.gmra.mrb[0].mxu0 %v1690
            %v1766 = vpop.f32.mrb[0].mxu0
            %v1767 = vadd.f32 0.0, %v1766
            %v1768 = vpop.f32.mrb[0].mxu0
            %v1769 = vadd.f32 0.0, %v1768
            %v1770 = vpop.f32.mrb[0].mxu0
            %v1771 = vpop.f32.mrb[0].mxu0
            %1772 = vdwg.mxu0
            %v1773 = vadd.f32 %v1686, %v1726
            %v1774 = vadd.f32 %v1687, %v1728
            %v1775 = vadd.f32 %v1688, %v1767
            %v1776 = vadd.f32 %v1689, %v1769
            %v1777 = vxor.u32 %v1773, 2147483648
            %v1778 = vxor.u32 %v1774, 2147483648
            %v1779 = vxor.u32 %v1775, 2147483648
            %v1780 = vmul.f32 %v1777, 1.442695
            %v1781 = vpow.pop %v1780
            %v1782 = vmul.f32 %v1778, 1.442695
            %v1783 = vpow.pop %v1782
            %v1784 = vmul.f32 %v1779, 1.442695
            %v1785 = vpow.pop %v1784
            %v1786 = vadd.f32 %v1781, 1.0
            %v1787 = vadd.f32 %v1783, 1.0
            %v1788 = vadd.f32 %v1785, 1.0
            %v1789 = vrcp.pop %v1786
            %v1790 = vmul.f32 1.0, %v1789
            %v1791 = vrcp.pop %v1787
            %v1792 = vmul.f32 1.0, %v1791
            %v1793 = vrcp.pop %v1788
            %v1794 = vmul.f32 1.0, %v1793
            %v1795 = vtanh.pop %v1776
            %v1796 = vmul.f32 %v1792, %v1680
            %v1797 = vmul.f32 %v1790, %v1795
            %v1798 = vadd.f32 %v1796, %v1797
            %v1799 = vtanh.pop %v1798
            %v1800 = vmul.f32 %v1794, %v1799
            %s1801 = sadd.s32 %s435, 6
            %v1802 = vstv %s1801
            %vm1803 = vcmp.lt.s32.totalorder %v1802, %v771
            %v1804 = vsel %vm1803, %v1800, %v1679
            %v1805 = vsel %vm1803, %v1798, %v1680
            %v1806 = vsel %vm1803, %v1800, 0.0
            %v1807 = vpack.c.bf16 %v1806, %v1806
            %s1808 = scalar_lea.vmem %s417, 24
            %1809 = vst [vmem:[%s1808] sm:$0xf] %v1807
            %s1810 = scalar_lea.vmem [#allocation2], 224
            %v1811 = vld [vmem:[%s1810] sm:$0xff]
            %v1812 = vld [vmem:[%s1810 + $0x8] sm:$0xff]
            %v1813 = vld [vmem:[%s1810 + $0x10] sm:$0xff]
            %v1814 = vld [vmem:[%s1810 + $0x18] sm:$0xff]
            %v1815 = vpack.c.bf16 %v1804, %v1804
            %1816 = vmatprep.subr.bf16.mxu0 %v880
            %1817 = vmatpush1.bf16.msra.mxu0 %v879
            %1818 = vmatprep.subr.bf16.mxu0 %v884
            %1819 = vmatpush1.bf16.msra.mxu0 %v883
            %1820 = vmatprep.subr.bf16.mxu0 %v888
            %1821 = vmatpush1.bf16.msra.mxu0 %v887
            %1822 = vmatprep.subr.bf16.mxu0 %v892
            %1823 = vmatpush1.bf16.msra.mxu0 %v891
            %1824 = vmatprep.subr.bf16.mxu0 %v896
            %1825 = vmatpush1.bf16.msra.mxu0 %v895
            %1826 = vmatprep.subr.bf16.mxu0 %v900
            %1827 = vmatpush1.bf16.msra.mxu0 %v899
            %1828 = vmatprep.subr.bf16.mxu0 %v904
            %1829 = vmatpush1.bf16.msra.mxu0 %v903
            %1830 = vmatprep.subr.bf16.mxu0 %v908
            %1831 = vmatpush1.bf16.msra.mxu0 %v907
            %1832 = vmatprep.subr.bf16.mxu0 0
            %1833 = vmatpush1.bf16.msra.mxu0 0
            %1834 = vmatprep.subr.bf16.mxu0 0
            %1835 = vmatpush1.bf16.msra.mxu0 0
            %1836 = vmatprep.subr.bf16.mxu0 0
            %1837 = vmatpush1.bf16.msra.mxu0 0
            %1838 = vmatprep.subr.bf16.mxu0 0
            %1839 = vmatpush1.bf16.msra.mxu0 0
            %1840 = vmatprep.subr.bf16.mxu0 0
            %1841 = vmatpush1.bf16.msra.mxu0 0
            %1842 = vmatprep.subr.bf16.mxu0 0
            %1843 = vmatpush1.bf16.msra.mxu0 0
            %1844 = vmatprep.subr.bf16.mxu0 0
            %1845 = vmatpush1.bf16.msra.mxu0 0
            %1846 = vmatprep.subr.bf16.mxu0 0
            %1847 = vmatpush1.bf16.msra.mxu0 0
            %1848 = vmatprep.mubr.bf16.mxu0 0
            %1849 = vmatmul.mubr.bf16.gmra.mrb[0].mxu0 %v1815
            %v1850 = vpop.f32.mrb[0].mxu0
            %v1851 = vadd.f32 0.0, %v1850
            %v1852 = vpop.f32.mrb[0].mxu0
            %v1853 = vadd.f32 0.0, %v1852
            %v1854 = vpop.f32.mrb[0].mxu0
            %v1855 = vpop.f32.mrb[0].mxu0
            %1856 = vdwg.mxu0
            %1857 = vmatprep.subr.bf16.mxu0 %v882
            %1858 = vmatpush1.bf16.msra.mxu0 %v881
            %1859 = vmatprep.subr.bf16.mxu0 %v886
            %1860 = vmatpush1.bf16.msra.mxu0 %v885
            %1861 = vmatprep.subr.bf16.mxu0 %v890
            %1862 = vmatpush1.bf16.msra.mxu0 %v889
            %1863 = vmatprep.subr.bf16.mxu0 %v894
            %1864 = vmatpush1.bf16.msra.mxu0 %v893
            %1865 = vmatprep.subr.bf16.mxu0 %v898
            %1866 = vmatpush1.bf16.msra.mxu0 %v897
            %1867 = vmatprep.subr.bf16.mxu0 %v902
            %1868 = vmatpush1.bf16.msra.mxu0 %v901
            %1869 = vmatprep.subr.bf16.mxu0 %v906
            %1870 = vmatpush1.bf16.msra.mxu0 %v905
            %1871 = vmatprep.subr.bf16.mxu0 %v910
            %1872 = vmatpush1.bf16.msra.mxu0 %v909
            %1873 = vmatprep.subr.bf16.mxu0 0
            %1874 = vmatpush1.bf16.msra.mxu0 0
            %1875 = vmatprep.subr.bf16.mxu0 0
            %1876 = vmatpush1.bf16.msra.mxu0 0
            %1877 = vmatprep.subr.bf16.mxu0 0
            %1878 = vmatpush1.bf16.msra.mxu0 0
            %1879 = vmatprep.subr.bf16.mxu0 0
            %1880 = vmatpush1.bf16.msra.mxu0 0
            %1881 = vmatprep.subr.bf16.mxu0 0
            %1882 = vmatpush1.bf16.msra.mxu0 0
            %1883 = vmatprep.subr.bf16.mxu0 0
            %1884 = vmatpush1.bf16.msra.mxu0 0
            %1885 = vmatprep.subr.bf16.mxu0 0
            %1886 = vmatpush1.bf16.msra.mxu0 0
            %1887 = vmatprep.subr.bf16.mxu0 0
            %1888 = vmatpush1.bf16.msra.mxu0 0
            %1889 = vmatprep.mubr.bf16.mxu0 0
            %1890 = vmatmul.mubr.bf16.gmra.mrb[0].mxu0 %v1815
            %v1891 = vpop.f32.mrb[0].mxu0
            %v1892 = vadd.f32 0.0, %v1891
            %v1893 = vpop.f32.mrb[0].mxu0
            %v1894 = vadd.f32 0.0, %v1893
            %v1895 = vpop.f32.mrb[0].mxu0
            %v1896 = vpop.f32.mrb[0].mxu0
            %1897 = vdwg.mxu0
            %v1898 = vadd.f32 %v1811, %v1851
            %v1899 = vadd.f32 %v1812, %v1853
            %v1900 = vadd.f32 %v1813, %v1892
            %v1901 = vadd.f32 %v1814, %v1894
            %v1902 = vxor.u32 %v1898, 2147483648
            %v1903 = vxor.u32 %v1899, 2147483648
            %v1904 = vxor.u32 %v1900, 2147483648
            %v1905 = vmul.f32 %v1902, 1.442695
            %v1906 = vpow.pop %v1905
            %v1907 = vmul.f32 %v1903, 1.442695
            %v1908 = vpow.pop %v1907
            %v1909 = vmul.f32 %v1904, 1.442695
            %v1910 = vpow.pop %v1909
            %v1911 = vadd.f32 %v1906, 1.0
            %v1912 = vadd.f32 %v1908, 1.0
            %v1913 = vadd.f32 %v1910, 1.0
            %v1914 = vrcp.pop %v1911
            %v1915 = vmul.f32 1.0, %v1914
            %v1916 = vrcp.pop %v1912
            %v1917 = vmul.f32 1.0, %v1916
            %v1918 = vrcp.pop %v1913
            %v1919 = vmul.f32 1.0, %v1918
            %v1920 = vtanh.pop %v1901
            %v1921 = vmul.f32 %v1917, %v1805
            %v1922 = vmul.f32 %v1915, %v1920
            %v1923 = vadd.f32 %v1921, %v1922
            %v1924 = vtanh.pop %v1923
            %v1925 = vmul.f32 %v1919, %v1924
            %s1926 = sadd.s32 %s435, 7
            %v1927 = vstv %s1926
            %vm1928 = vcmp.lt.s32.totalorder %v1927, %v771
            %v1929 = vsel %vm1928, %v1925, %v1804
            %v1930 = vsel %vm1928, %v1923, %v1805
            %v1931 = vsel %vm1928, %v1925, 0.0
            %v1932 = vpack.c.bf16 %v1931, %v1931
            %s1933 = scalar_lea.vmem %s417, 28
            %1934 = vst [vmem:[%s1933] sm:$0xf] %v1932
            %1935 = vst [vmem:[#allocation3] sm:$0xff] %v1929
            %1936 = vst [vmem:[#allocation4] sm:$0xff] %v1930
          $region56: #{_sent_encoder_forward.1} parent=51 // pred_fallthru
            _
          %p1937 = scmp.eq.s32.totalorder %s27, 1
          // Predicated region
          $region57: #{_sent_encoder_forward.1} parent=51 // pred_check
            %p1938 = pneg %p1937
          $region58: #{_sent_encoder_forward.1} parent=51 // pred_check_branch
            %1940 = sbr.rel (%p1938) target = $region60
          $region59: #{_sent_encoder_forward.1} parent=51 // pred_region
            %v1941 = vld [vmem:[#allocation3] sm:$0xff]
            %v1942 = vld [vmem:[#allocation4] sm:$0xff]
            %s1943 = scalar_lea.vmem [#allocation2], 224
            %v1944 = vld [vmem:[%s1943] sm:$0xff]
            %v1945 = vld [vmem:[%s1943 + $0x8] sm:$0xff]
            %v1946 = vld [vmem:[%s1943 + $0x10] sm:$0xff]
            %v1947 = vld [vmem:[%s1943 + $0x18] sm:$0xff]
            %v1948 = vpack.c.bf16 %v1941, %v1941
            %v1981 = vunpack.c.l.b16 %v736
            %v1982 = vunpack.c.h.b16 %v736
            %v1983 = vunpack.c.l.b16 %v737
            %v1984 = vunpack.c.h.b16 %v737
            %v1985 = vunpack.c.l.b16 %v738
            %v1986 = vunpack.c.h.b16 %v738
            %v1987 = vunpack.c.l.b16 %v739
            %v1988 = vunpack.c.h.b16 %v739
            %v1989 = vunpack.c.l.b16 %v740
            %v1990 = vunpack.c.h.b16 %v740
            %v1991 = vunpack.c.l.b16 %v741
            %v1992 = vunpack.c.h.b16 %v741
            %v1993 = vunpack.c.l.b16 %v742
            %v1994 = vunpack.c.h.b16 %v742
            %v1995 = vunpack.c.l.b16 %v743
            %v1996 = vunpack.c.h.b16 %v743
            %v1997 = vunpack.c.l.b16 %v744
            %v1998 = vunpack.c.h.b16 %v744
            %v1999 = vunpack.c.l.b16 %v745
            %v2000 = vunpack.c.h.b16 %v745
            %v2001 = vunpack.c.l.b16 %v746
            %v2002 = vunpack.c.h.b16 %v746
            %v2003 = vunpack.c.l.b16 %v747
            %v2004 = vunpack.c.h.b16 %v747
            %v2005 = vunpack.c.l.b16 %v748
            %v2006 = vunpack.c.h.b16 %v748
            %v2007 = vunpack.c.l.b16 %v749
            %v2008 = vunpack.c.h.b16 %v749
            %v2009 = vunpack.c.l.b16 %v750
            %v2010 = vunpack.c.h.b16 %v750
            %v2011 = vunpack.c.l.b16 %v751
            %v2012 = vunpack.c.h.b16 %v751
            %v2013 = vunpack.c.l.b16 %v752
            %v2014 = vunpack.c.h.b16 %v752
            %v2015 = vunpack.c.l.b16 %v753
            %v2016 = vunpack.c.h.b16 %v753
            %v2017 = vunpack.c.l.b16 %v754
            %v2018 = vunpack.c.h.b16 %v754
            %v2019 = vunpack.c.l.b16 %v755
            %v2020 = vunpack.c.h.b16 %v755
            %v2021 = vunpack.c.l.b16 %v756
            %v2022 = vunpack.c.h.b16 %v756
            %v2023 = vunpack.c.l.b16 %v757
            %v2024 = vunpack.c.h.b16 %v757
            %v2025 = vunpack.c.l.b16 %v758
            %v2026 = vunpack.c.h.b16 %v758
            %v2027 = vunpack.c.l.b16 %v759
            %v2028 = vunpack.c.h.b16 %v759
            %v2029 = vunpack.c.l.b16 %v760
            %v2030 = vunpack.c.h.b16 %v760
            %v2031 = vunpack.c.l.b16 %v761
            %v2032 = vunpack.c.h.b16 %v761
            %v2033 = vunpack.c.l.b16 %v762
            %v2034 = vunpack.c.h.b16 %v762
            %v2035 = vunpack.c.l.b16 %v763
            %v2036 = vunpack.c.h.b16 %v763
            %v2037 = vunpack.c.l.b16 %v764
            %v2038 = vunpack.c.h.b16 %v764
            %v2039 = vunpack.c.l.b16 %v765
            %v2040 = vunpack.c.h.b16 %v765
            %v2041 = vunpack.c.l.b16 %v766
            %v2042 = vunpack.c.h.b16 %v766
            %v2043 = vunpack.c.l.b16 %v767
            %v2044 = vunpack.c.h.b16 %v767
            %v2045 = vpack.c.b16 %v1985, %v1981
            %v2046 = vpack.c.b16 %v1986, %v1982
            %v2047 = vpack.c.b16 %v1987, %v1983
            %v2048 = vpack.c.b16 %v1988, %v1984
            %v2049 = vpack.c.b16 %v1993, %v1989
            %v2050 = vpack.c.b16 %v1994, %v1990
            %v2051 = vpack.c.b16 %v1995, %v1991
            %v2052 = vpack.c.b16 %v1996, %v1992
            %v2053 = vpack.c.b16 %v2001, %v1997
            %v2054 = vpack.c.b16 %v2002, %v1998
            %v2055 = vpack.c.b16 %v2003, %v1999
            %v2056 = vpack.c.b16 %v2004, %v2000
            %v2057 = vpack.c.b16 %v2009, %v2005
            %v2058 = vpack.c.b16 %v2010, %v2006
            %v2059 = vpack.c.b16 %v2011, %v2007
            %v2060 = vpack.c.b16 %v2012, %v2008
            %v2061 = vpack.c.b16 %v2017, %v2013
            %v2062 = vpack.c.b16 %v2018, %v2014
            %v2063 = vpack.c.b16 %v2019, %v2015
            %v2064 = vpack.c.b16 %v2020, %v2016
            %v2065 = vpack.c.b16 %v2025, %v2021
            %v2066 = vpack.c.b16 %v2026, %v2022
            %v2067 = vpack.c.b16 %v2027, %v2023
            %v2068 = vpack.c.b16 %v2028, %v2024
            %v2069 = vpack.c.b16 %v2033, %v2029
            %v2070 = vpack.c.b16 %v2034, %v2030
            %v2071 = vpack.c.b16 %v2035, %v2031
            %v2072 = vpack.c.b16 %v2036, %v2032
            %v2073 = vpack.c.b16 %v2041, %v2037
            %v2074 = vpack.c.b16 %v2042, %v2038
            %v2075 = vpack.c.b16 %v2043, %v2039
            %v2076 = vpack.c.b16 %v2044, %v2040
            %2109 = vmatprep.subr.bf16.mxu0 %v2046
            %2110 = vmatpush1.bf16.msra.mxu0 %v2045
            %2111 = vmatprep.subr.bf16.mxu0 %v2050
            %2112 = vmatpush1.bf16.msra.mxu0 %v2049
            %2113 = vmatprep.subr.bf16.mxu0 %v2054
            %2114 = vmatpush1.bf16.msra.mxu0 %v2053
            %2115 = vmatprep.subr.bf16.mxu0 %v2058
            %2116 = vmatpush1.bf16.msra.mxu0 %v2057
            %2117 = vmatprep.subr.bf16.mxu0 %v2062
            %2118 = vmatpush1.bf16.msra.mxu0 %v2061
            %2119 = vmatprep.subr.bf16.mxu0 %v2066
            %2120 = vmatpush1.bf16.msra.mxu0 %v2065
            %2121 = vmatprep.subr.bf16.mxu0 %v2070
            %2122 = vmatpush1.bf16.msra.mxu0 %v2069
            %2123 = vmatprep.subr.bf16.mxu0 %v2074
            %2124 = vmatpush1.bf16.msra.mxu0 %v2073
            %2125 = vmatprep.subr.bf16.mxu0 0
            %2126 = vmatpush1.bf16.msra.mxu0 0
            %2127 = vmatprep.subr.bf16.mxu0 0
            %2128 = vmatpush1.bf16.msra.mxu0 0
            %2129 = vmatprep.subr.bf16.mxu0 0
            %2130 = vmatpush1.bf16.msra.mxu0 0
            %2131 = vmatprep.subr.bf16.mxu0 0
            %2132 = vmatpush1.bf16.msra.mxu0 0
            %2133 = vmatprep.subr.bf16.mxu0 0
            %2134 = vmatpush1.bf16.msra.mxu0 0
            %2135 = vmatprep.subr.bf16.mxu0 0
            %2136 = vmatpush1.bf16.msra.mxu0 0
            %2137 = vmatprep.subr.bf16.mxu0 0
            %2138 = vmatpush1.bf16.msra.mxu0 0
            %2139 = vmatprep.subr.bf16.mxu0 0
            %2140 = vmatpush1.bf16.msra.mxu0 0
            %2141 = vmatprep.mubr.bf16.mxu0 0
            %2142 = vmatmul.mubr.bf16.gmra.mrb[0].mxu0 %v1948
            %v2143 = vpop.f32.mrb[0].mxu0
            %v2144 = vadd.f32 0.0, %v2143
            %v2145 = vpop.f32.mrb[0].mxu0
            %v2146 = vadd.f32 0.0, %v2145
            %v2147 = vpop.f32.mrb[0].mxu0
            %v2148 = vpop.f32.mrb[0].mxu0
            %2149 = vdwg.mxu0
            %2150 = vmatprep.subr.bf16.mxu0 %v2048
            %2151 = vmatpush1.bf16.msra.mxu0 %v2047
            %2152 = vmatprep.subr.bf16.mxu0 %v2052
            %2153 = vmatpush1.bf16.msra.mxu0 %v2051
            %2154 = vmatprep.subr.bf16.mxu0 %v2056
            %2155 = vmatpush1.bf16.msra.mxu0 %v2055
            %2156 = vmatprep.subr.bf16.mxu0 %v2060
            %2157 = vmatpush1.bf16.msra.mxu0 %v2059
            %2158 = vmatprep.subr.bf16.mxu0 %v2064
            %2159 = vmatpush1.bf16.msra.mxu0 %v2063
            %2160 = vmatprep.subr.bf16.mxu0 %v2068
            %2161 = vmatpush1.bf16.msra.mxu0 %v2067
            %2162 = vmatprep.subr.bf16.mxu0 %v2072
            %2163 = vmatpush1.bf16.msra.mxu0 %v2071
            %2164 = vmatprep.subr.bf16.mxu0 %v2076
            %2165 = vmatpush1.bf16.msra.mxu0 %v2075
            %2166 = vmatprep.subr.bf16.mxu0 0
            %2167 = vmatpush1.bf16.msra.mxu0 0
            %2168 = vmatprep.subr.bf16.mxu0 0
            %2169 = vmatpush1.bf16.msra.mxu0 0
            %2170 = vmatprep.subr.bf16.mxu0 0
            %2171 = vmatpush1.bf16.msra.mxu0 0
            %2172 = vmatprep.subr.bf16.mxu0 0
            %2173 = vmatpush1.bf16.msra.mxu0 0
            %2174 = vmatprep.subr.bf16.mxu0 0
            %2175 = vmatpush1.bf16.msra.mxu0 0
            %2176 = vmatprep.subr.bf16.mxu0 0
            %2177 = vmatpush1.bf16.msra.mxu0 0
            %2178 = vmatprep.subr.bf16.mxu0 0
            %2179 = vmatpush1.bf16.msra.mxu0 0
            %2180 = vmatprep.subr.bf16.mxu0 0
            %2181 = vmatpush1.bf16.msra.mxu0 0
            %2182 = vmatprep.mubr.bf16.mxu0 0
            %2183 = vmatmul.mubr.bf16.gmra.mrb[0].mxu0 %v1948
            %v2184 = vpop.f32.mrb[0].mxu0
            %v2185 = vadd.f32 0.0, %v2184
            %v2186 = vpop.f32.mrb[0].mxu0
            %v2187 = vadd.f32 0.0, %v2186
            %v2188 = vpop.f32.mrb[0].mxu0
            %v2189 = vpop.f32.mrb[0].mxu0
            %2190 = vdwg.mxu0
            %v2191 = vadd.f32 %v1944, %v2144
            %v2192 = vadd.f32 %v1945, %v2146
            %v2193 = vadd.f32 %v1946, %v2185
            %v2194 = vadd.f32 %v1947, %v2187
            %v2195 = vxor.u32 %v2191, 2147483648
            %v2196 = vxor.u32 %v2192, 2147483648
            %v2197 = vxor.u32 %v2193, 2147483648
            %v2198 = vmul.f32 %v2195, 1.442695
            %v2199 = vpow.pop %v2198
            %v2200 = vmul.f32 %v2196, 1.442695
            %v2201 = vpow.pop %v2200
            %v2202 = vmul.f32 %v2197, 1.442695
            %v2203 = vpow.pop %v2202
            %v2204 = vadd.f32 %v2199, 1.0
            %v2205 = vadd.f32 %v2201, 1.0
            %v2206 = vadd.f32 %v2203, 1.0
            %v2207 = vrcp.pop %v2204
            %v2208 = vmul.f32 1.0, %v2207
            %v2209 = vrcp.pop %v2205
            %v2210 = vmul.f32 1.0, %v2209
            %v2211 = vrcp.pop %v2206
            %v2212 = vmul.f32 1.0, %v2211
            %v2213 = vtanh.pop %v2194
            %v2214 = vmul.f32 %v2210, %v1942
            %v2215 = vmul.f32 %v2208, %v2213
            %v2216 = vadd.f32 %v2214, %v2215
            %v2217 = vtanh.pop %v2216
            %v2218 = vmul.f32 %v2212, %v2217
            %s2219 = sadd.s32 %s435, 7
            %v2220 = vstv %s2219
            %vm2221 = vcmp.lt.s32.totalorder %v2220, %v771
            %v2222 = vsel %vm2221, %v2218, %v1941
            %v2223 = vsel %vm2221, %v2216, %v1942
            %v2224 = vsel %vm2221, %v2218, 0.0
            %v2225 = vpack.c.bf16 %v2224, %v2224
            %s2226 = scalar_lea.vmem %s417, 28
            %2227 = vst [vmem:[%s2226] sm:$0xf] %v2225
            %s2228 = scalar_lea.vmem [#allocation2], 192
            %v2229 = vld [vmem:[%s2228] sm:$0xff]
            %v2230 = vld [vmem:[%s2228 + $0x8] sm:$0xff]
            %v2231 = vld [vmem:[%s2228 + $0x10] sm:$0xff]
            %v2232 = vld [vmem:[%s2228 + $0x18] sm:$0xff]
            %v2233 = vpack.c.bf16 %v2222, %v2222
            %2234 = vmatprep.subr.bf16.mxu0 %v2046
            %2235 = vmatpush1.bf16.msra.mxu0 %v2045
            %2236 = vmatprep.subr.bf16.mxu0 %v2050
            %2237 = vmatpush1.bf16.msra.mxu0 %v2049
            %2238 = vmatprep.subr.bf16.mxu0 %v2054
            %2239 = vmatpush1.bf16.msra.mxu0 %v2053
            %2240 = vmatprep.subr.bf16.mxu0 %v2058
            %2241 = vmatpush1.bf16.msra.mxu0 %v2057
            %2242 = vmatprep.subr.bf16.mxu0 %v2062
            %2243 = vmatpush1.bf16.msra.mxu0 %v2061
            %2244 = vmatprep.subr.bf16.mxu0 %v2066
            %2245 = vmatpush1.bf16.msra.mxu0 %v2065
            %2246 = vmatprep.subr.bf16.mxu0 %v2070
            %2247 = vmatpush1.bf16.msra.mxu0 %v2069
            %2248 = vmatprep.subr.bf16.mxu0 %v2074
            %2249 = vmatpush1.bf16.msra.mxu0 %v2073
            %2250 = vmatprep.subr.bf16.mxu0 0
            %2251 = vmatpush1.bf16.msra.mxu0 0
            %2252 = vmatprep.subr.bf16.mxu0 0
            %2253 = vmatpush1.bf16.msra.mxu0 0
            %2254 = vmatprep.subr.bf16.mxu0 0
            %2255 = vmatpush1.bf16.msra.mxu0 0
            %2256 = vmatprep.subr.bf16.mxu0 0
            %2257 = vmatpush1.bf16.msra.mxu0 0
            %2258 = vmatprep.subr.bf16.mxu0 0
            %2259 = vmatpush1.bf16.msra.mxu0 0
            %2260 = vmatprep.subr.bf16.mxu0 0
            %2261 = vmatpush1.bf16.msra.mxu0 0
            %2262 = vmatprep.subr.bf16.mxu0 0
            %2263 = vmatpush1.bf16.msra.mxu0 0
            %2264 = vmatprep.subr.bf16.mxu0 0
            %2265 = vmatpush1.bf16.msra.mxu0 0
            %2266 = vmatprep.mubr.bf16.mxu0 0
            %2267 = vmatmul.mubr.bf16.gmra.mrb[0].mxu0 %v2233
            %v2268 = vpop.f32.mrb[0].mxu0
            %v2269 = vadd.f32 0.0, %v2268
            %v2270 = vpop.f32.mrb[0].mxu0
            %v2271 = vadd.f32 0.0, %v2270
            %v2272 = vpop.f32.mrb[0].mxu0
            %v2273 = vpop.f32.mrb[0].mxu0
            %2274 = vdwg.mxu0
            %2275 = vmatprep.subr.bf16.mxu0 %v2048
            %2276 = vmatpush1.bf16.msra.mxu0 %v2047
            %2277 = vmatprep.subr.bf16.mxu0 %v2052
            %2278 = vmatpush1.bf16.msra.mxu0 %v2051
            %2279 = vmatprep.subr.bf16.mxu0 %v2056
            %2280 = vmatpush1.bf16.msra.mxu0 %v2055
            %2281 = vmatprep.subr.bf16.mxu0 %v2060
            %2282 = vmatpush1.bf16.msra.mxu0 %v2059
            %2283 = vmatprep.subr.bf16.mxu0 %v2064
            %2284 = vmatpush1.bf16.msra.mxu0 %v2063
            %2285 = vmatprep.subr.bf16.mxu0 %v2068
            %2286 = vmatpush1.bf16.msra.mxu0 %v2067
            %2287 = vmatprep.subr.bf16.mxu0 %v2072
            %2288 = vmatpush1.bf16.msra.mxu0 %v2071
            %2289 = vmatprep.subr.bf16.mxu0 %v2076
            %2290 = vmatpush1.bf16.msra.mxu0 %v2075
            %2291 = vmatprep.subr.bf16.mxu0 0
            %2292 = vmatpush1.bf16.msra.mxu0 0
            %2293 = vmatprep.subr.bf16.mxu0 0
            %2294 = vmatpush1.bf16.msra.mxu0 0
            %2295 = vmatprep.subr.bf16.mxu0 0
            %2296 = vmatpush1.bf16.msra.mxu0 0
            %2297 = vmatprep.subr.bf16.mxu0 0
            %2298 = vmatpush1.bf16.msra.mxu0 0
            %2299 = vmatprep.subr.bf16.mxu0 0
            %2300 = vmatpush1.bf16.msra.mxu0 0
            %2301 = vmatprep.subr.bf16.mxu0 0
            %2302 = vmatpush1.bf16.msra.mxu0 0
            %2303 = vmatprep.subr.bf16.mxu0 0
            %2304 = vmatpush1.bf16.msra.mxu0 0
            %2305 = vmatprep.subr.bf16.mxu0 0
            %2306 = vmatpush1.bf16.msra.mxu0 0
            %2307 = vmatprep.mubr.bf16.mxu0 0
            %2308 = vmatmul.mubr.bf16.gmra.mrb[0].mxu0 %v2233
            %v2309 = vpop.f32.mrb[0].mxu0
            %v2310 = vadd.f32 0.0, %v2309
            %v2311 = vpop.f32.mrb[0].mxu0
            %v2312 = vadd.f32 0.0, %v2311
            %v2313 = vpop.f32.mrb[0].mxu0
            %v2314 = vpop.f32.mrb[0].mxu0
            %2315 = vdwg.mxu0
            %v2316 = vadd.f32 %v2229, %v2269
            %v2317 = vadd.f32 %v2230, %v2271
            %v2318 = vadd.f32 %v2231, %v2310
            %v2319 = vadd.f32 %v2232, %v2312
            %v2320 = vxor.u32 %v2316, 2147483648
            %v2321 = vxor.u32 %v2317, 2147483648
            %v2322 = vxor.u32 %v2318, 2147483648
            %v2323 = vmul.f32 %v2320, 1.442695
            %v2324 = vpow.pop %v2323
            %v2325 = vmul.f32 %v2321, 1.442695
            %v2326 = vpow.pop %v2325
            %v2327 = vmul.f32 %v2322, 1.442695
            %v2328 = vpow.pop %v2327
            %v2329 = vadd.f32 %v2324, 1.0
            %v2330 = vadd.f32 %v2326, 1.0
            %v2331 = vadd.f32 %v2328, 1.0
            %v2332 = vrcp.pop %v2329
            %v2333 = vmul.f32 1.0, %v2332
            %v2334 = vrcp.pop %v2330
            %v2335 = vmul.f32 1.0, %v2334
            %v2336 = vrcp.pop %v2331
            %v2337 = vmul.f32 1.0, %v2336
            %v2338 = vtanh.pop %v2319
            %v2339 = vmul.f32 %v2335, %v2223
            %v2340 = vmul.f32 %v2333, %v2338
            %v2341 = vadd.f32 %v2339, %v2340
            %v2342 = vtanh.pop %v2341
            %v2343 = vmul.f32 %v2337, %v2342
            %s2344 = sadd.s32 %s435, 6
            %v2345 = vstv %s2344
            %vm2346 = vcmp.lt.s32.totalorder %v2345, %v771
            %v2347 = vsel %vm2346, %v2343, %v2222
            %v2348 = vsel %vm2346, %v2341, %v2223
            %v2349 = vsel %vm2346, %v2343, 0.0
            %v2350 = vpack.c.bf16 %v2349, %v2349
            %s2351 = scalar_lea.vmem %s417, 24
            %2352 = vst [vmem:[%s2351] sm:$0xf] %v2350
            %s2353 = scalar_lea.vmem [#allocation2], 160
            %v2354 = vld [vmem:[%s2353] sm:$0xff]
            %v2355 = vld [vmem:[%s2353 + $0x8] sm:$0xff]
            %v2356 = vld [vmem:[%s2353 + $0x10] sm:$0xff]
            %v2357 = vld [vmem:[%s2353 + $0x18] sm:$0xff]
            %v2358 = vpack.c.bf16 %v2347, %v2347
            %2359 = vmatprep.subr.bf16.mxu0 %v2046
            %2360 = vmatpush1.bf16.msra.mxu0 %v2045
            %2361 = vmatprep.subr.bf16.mxu0 %v2050
            %2362 = vmatpush1.bf16.msra.mxu0 %v2049
            %2363 = vmatprep.subr.bf16.mxu0 %v2054
            %2364 = vmatpush1.bf16.msra.mxu0 %v2053
            %2365 = vmatprep.subr.bf16.mxu0 %v2058
            %2366 = vmatpush1.bf16.msra.mxu0 %v2057
            %2367 = vmatprep.subr.bf16.mxu0 %v2062
            %2368 = vmatpush1.bf16.msra.mxu0 %v2061
            %2369 = vmatprep.subr.bf16.mxu0 %v2066
            %2370 = vmatpush1.bf16.msra.mxu0 %v2065
            %2371 = vmatprep.subr.bf16.mxu0 %v2070
            %2372 = vmatpush1.bf16.msra.mxu0 %v2069
            %2373 = vmatprep.subr.bf16.mxu0 %v2074
            %2374 = vmatpush1.bf16.msra.mxu0 %v2073
            %2375 = vmatprep.subr.bf16.mxu0 0
            %2376 = vmatpush1.bf16.msra.mxu0 0
            %2377 = vmatprep.subr.bf16.mxu0 0
            %2378 = vmatpush1.bf16.msra.mxu0 0
            %2379 = vmatprep.subr.bf16.mxu0 0
            %2380 = vmatpush1.bf16.msra.mxu0 0
            %2381 = vmatprep.subr.bf16.mxu0 0
            %2382 = vmatpush1.bf16.msra.mxu0 0
            %2383 = vmatprep.subr.bf16.mxu0 0
            %2384 = vmatpush1.bf16.msra.mxu0 0
            %2385 = vmatprep.subr.bf16.mxu0 0
            %2386 = vmatpush1.bf16.msra.mxu0 0
            %2387 = vmatprep.subr.bf16.mxu0 0
            %2388 = vmatpush1.bf16.msra.mxu0 0
            %2389 = vmatprep.subr.bf16.mxu0 0
            %2390 = vmatpush1.bf16.msra.mxu0 0
            %2391 = vmatprep.mubr.bf16.mxu0 0
            %2392 = vmatmul.mubr.bf16.gmra.mrb[0].mxu0 %v2358
            %v2393 = vpop.f32.mrb[0].mxu0
            %v2394 = vadd.f32 0.0, %v2393
            %v2395 = vpop.f32.mrb[0].mxu0
            %v2396 = vadd.f32 0.0, %v2395
            %v2397 = vpop.f32.mrb[0].mxu0
            %v2398 = vpop.f32.mrb[0].mxu0
            %2399 = vdwg.mxu0
            %2400 = vmatprep.subr.bf16.mxu0 %v2048
            %2401 = vmatpush1.bf16.msra.mxu0 %v2047
            %2402 = vmatprep.subr.bf16.mxu0 %v2052
            %2403 = vmatpush1.bf16.msra.mxu0 %v2051
            %2404 = vmatprep.subr.bf16.mxu0 %v2056
            %2405 = vmatpush1.bf16.msra.mxu0 %v2055
            %2406 = vmatprep.subr.bf16.mxu0 %v2060
            %2407 = vmatpush1.bf16.msra.mxu0 %v2059
            %2408 = vmatprep.subr.bf16.mxu0 %v2064
            %2409 = vmatpush1.bf16.msra.mxu0 %v2063
            %2410 = vmatprep.subr.bf16.mxu0 %v2068
            %2411 = vmatpush1.bf16.msra.mxu0 %v2067
            %2412 = vmatprep.subr.bf16.mxu0 %v2072
            %2413 = vmatpush1.bf16.msra.mxu0 %v2071
            %2414 = vmatprep.subr.bf16.mxu0 %v2076
            %2415 = vmatpush1.bf16.msra.mxu0 %v2075
            %2416 = vmatprep.subr.bf16.mxu0 0
            %2417 = vmatpush1.bf16.msra.mxu0 0
            %2418 = vmatprep.subr.bf16.mxu0 0
            %2419 = vmatpush1.bf16.msra.mxu0 0
            %2420 = vmatprep.subr.bf16.mxu0 0
            %2421 = vmatpush1.bf16.msra.mxu0 0
            %2422 = vmatprep.subr.bf16.mxu0 0
            %2423 = vmatpush1.bf16.msra.mxu0 0
            %2424 = vmatprep.subr.bf16.mxu0 0
            %2425 = vmatpush1.bf16.msra.mxu0 0
            %2426 = vmatprep.subr.bf16.mxu0 0
            %2427 = vmatpush1.bf16.msra.mxu0 0
            %2428 = vmatprep.subr.bf16.mxu0 0
            %2429 = vmatpush1.bf16.msra.mxu0 0
            %2430 = vmatprep.subr.bf16.mxu0 0
            %2431 = vmatpush1.bf16.msra.mxu0 0
            %2432 = vmatprep.mubr.bf16.mxu0 0
            %2433 = vmatmul.mubr.bf16.gmra.mrb[0].mxu0 %v2358
            %v2434 = vpop.f32.mrb[0].mxu0
            %v2435 = vadd.f32 0.0, %v2434
            %v2436 = vpop.f32.mrb[0].mxu0
            %v2437 = vadd.f32 0.0, %v2436
            %v2438 = vpop.f32.mrb[0].mxu0
            %v2439 = vpop.f32.mrb[0].mxu0
            %2440 = vdwg.mxu0
            %v2441 = vadd.f32 %v2354, %v2394
            %v2442 = vadd.f32 %v2355, %v2396
            %v2443 = vadd.f32 %v2356, %v2435
            %v2444 = vadd.f32 %v2357, %v2437
            %v2445 = vxor.u32 %v2441, 2147483648
            %v2446 = vxor.u32 %v2442, 2147483648
            %v2447 = vxor.u32 %v2443, 2147483648
            %v2448 = vmul.f32 %v2445, 1.442695
            %v2449 = vpow.pop %v2448
            %v2450 = vmul.f32 %v2446, 1.442695
            %v2451 = vpow.pop %v2450
            %v2452 = vmul.f32 %v2447, 1.442695
            %v2453 = vpow.pop %v2452
            %v2454 = vadd.f32 %v2449, 1.0
            %v2455 = vadd.f32 %v2451, 1.0
            %v2456 = vadd.f32 %v2453, 1.0
            %v2457 = vrcp.pop %v2454
            %v2458 = vmul.f32 1.0, %v2457
            %v2459 = vrcp.pop %v2455
            %v2460 = vmul.f32 1.0, %v2459
            %v2461 = vrcp.pop %v2456
            %v2462 = vmul.f32 1.0, %v2461
            %v2463 = vtanh.pop %v2444
            %v2464 = vmul.f32 %v2460, %v2348
            %v2465 = vmul.f32 %v2458, %v2463
            %v2466 = vadd.f32 %v2464, %v2465
            %v2467 = vtanh.pop %v2466
            %v2468 = vmul.f32 %v2462, %v2467
            %s2469 = sadd.s32 %s435, 5
            %v2470 = vstv %s2469
            %vm2471 = vcmp.lt.s32.totalorder %v2470, %v771
            %v2472 = vsel %vm2471, %v2468, %v2347
            %v2473 = vsel %vm2471, %v2466, %v2348
            %v2474 = vsel %vm2471, %v2468, 0.0
            %v2475 = vpack.c.bf16 %v2474, %v2474
            %s2476 = scalar_lea.vmem %s417, 20
            %2477 = vst [vmem:[%s2476] sm:$0xf] %v2475
            %s2478 = scalar_lea.vmem [#allocation2], 128
            %v2479 = vld [vmem:[%s2478] sm:$0xff]
            %v2480 = vld [vmem:[%s2478 + $0x8] sm:$0xff]
            %v2481 = vld [vmem:[%s2478 + $0x10] sm:$0xff]
            %v2482 = vld [vmem:[%s2478 + $0x18] sm:$0xff]
            %v2483 = vpack.c.bf16 %v2472, %v2472
            %2484 = vmatprep.subr.bf16.mxu0 %v2046
            %2485 = vmatpush1.bf16.msra.mxu0 %v2045
            %2486 = vmatprep.subr.bf16.mxu0 %v2050
            %2487 = vmatpush1.bf16.msra.mxu0 %v2049
            %2488 = vmatprep.subr.bf16.mxu0 %v2054
            %2489 = vmatpush1.bf16.msra.mxu0 %v2053
            %2490 = vmatprep.subr.bf16.mxu0 %v2058
            %2491 = vmatpush1.bf16.msra.mxu0 %v2057
            %2492 = vmatprep.subr.bf16.mxu0 %v2062
            %2493 = vmatpush1.bf16.msra.mxu0 %v2061
            %2494 = vmatprep.subr.bf16.mxu0 %v2066
            %2495 = vmatpush1.bf16.msra.mxu0 %v2065
            %2496 = vmatprep.subr.bf16.mxu0 %v2070
            %2497 = vmatpush1.bf16.msra.mxu0 %v2069
            %2498 = vmatprep.subr.bf16.mxu0 %v2074
            %2499 = vmatpush1.bf16.msra.mxu0 %v2073
            %2500 = vmatprep.subr.bf16.mxu0 0
            %2501 = vmatpush1.bf16.msra.mxu0 0
            %2502 = vmatprep.subr.bf16.mxu0 0
            %2503 = vmatpush1.bf16.msra.mxu0 0
            %2504 = vmatprep.subr.bf16.mxu0 0
            %2505 = vmatpush1.bf16.msra.mxu0 0
            %2506 = vmatprep.subr.bf16.mxu0 0
            %2507 = vmatpush1.bf16.msra.mxu0 0
            %2508 = vmatprep.subr.bf16.mxu0 0
            %2509 = vmatpush1.bf16.msra.mxu0 0
            %2510 = vmatprep.subr.bf16.mxu0 0
            %2511 = vmatpush1.bf16.msra.mxu0 0
            %2512 = vmatprep.subr.bf16.mxu0 0
            %2513 = vmatpush1.bf16.msra.mxu0 0
            %2514 = vmatprep.subr.bf16.mxu0 0
            %2515 = vmatpush1.bf16.msra.mxu0 0
            %2516 = vmatprep.mubr.bf16.mxu0 0
            %2517 = vmatmul.mubr.bf16.gmra.mrb[0].mxu0 %v2483
            %v2518 = vpop.f32.mrb[0].mxu0
            %v2519 = vadd.f32 0.0, %v2518
            %v2520 = vpop.f32.mrb[0].mxu0
            %v2521 = vadd.f32 0.0, %v2520
            %v2522 = vpop.f32.mrb[0].mxu0
            %v2523 = vpop.f32.mrb[0].mxu0
            %2524 = vdwg.mxu0
            %2525 = vmatprep.subr.bf16.mxu0 %v2048
            %2526 = vmatpush1.bf16.msra.mxu0 %v2047
            %2527 = vmatprep.subr.bf16.mxu0 %v2052
            %2528 = vmatpush1.bf16.msra.mxu0 %v2051
            %2529 = vmatprep.subr.bf16.mxu0 %v2056
            %2530 = vmatpush1.bf16.msra.mxu0 %v2055
            %2531 = vmatprep.subr.bf16.mxu0 %v2060
            %2532 = vmatpush1.bf16.msra.mxu0 %v2059
            %2533 = vmatprep.subr.bf16.mxu0 %v2064
            %2534 = vmatpush1.bf16.msra.mxu0 %v2063
            %2535 = vmatprep.subr.bf16.mxu0 %v2068
            %2536 = vmatpush1.bf16.msra.mxu0 %v2067
            %2537 = vmatprep.subr.bf16.mxu0 %v2072
            %2538 = vmatpush1.bf16.msra.mxu0 %v2071
            %2539 = vmatprep.subr.bf16.mxu0 %v2076
            %2540 = vmatpush1.bf16.msra.mxu0 %v2075
            %2541 = vmatprep.subr.bf16.mxu0 0
            %2542 = vmatpush1.bf16.msra.mxu0 0
            %2543 = vmatprep.subr.bf16.mxu0 0
            %2544 = vmatpush1.bf16.msra.mxu0 0
            %2545 = vmatprep.subr.bf16.mxu0 0
            %2546 = vmatpush1.bf16.msra.mxu0 0
            %2547 = vmatprep.subr.bf16.mxu0 0
            %2548 = vmatpush1.bf16.msra.mxu0 0
            %2549 = vmatprep.subr.bf16.mxu0 0
            %2550 = vmatpush1.bf16.msra.mxu0 0
            %2551 = vmatprep.subr.bf16.mxu0 0
            %2552 = vmatpush1.bf16.msra.mxu0 0
            %2553 = vmatprep.subr.bf16.mxu0 0
            %2554 = vmatpush1.bf16.msra.mxu0 0
            %2555 = vmatprep.subr.bf16.mxu0 0
            %2556 = vmatpush1.bf16.msra.mxu0 0
            %2557 = vmatprep.mubr.bf16.mxu0 0
            %2558 = vmatmul.mubr.bf16.gmra.mrb[0].mxu0 %v2483
            %v2559 = vpop.f32.mrb[0].mxu0
            %v2560 = vadd.f32 0.0, %v2559
            %v2561 = vpop.f32.mrb[0].mxu0
            %v2562 = vadd.f32 0.0, %v2561
            %v2563 = vpop.f32.mrb[0].mxu0
            %v2564 = vpop.f32.mrb[0].mxu0
            %2565 = vdwg.mxu0
            %v2566 = vadd.f32 %v2479, %v2519
            %v2567 = vadd.f32 %v2480, %v2521
            %v2568 = vadd.f32 %v2481, %v2560
            %v2569 = vadd.f32 %v2482, %v2562
            %v2570 = vxor.u32 %v2566, 2147483648
            %v2571 = vxor.u32 %v2567, 2147483648
            %v2572 = vxor.u32 %v2568, 2147483648
            %v2573 = vmul.f32 %v2570, 1.442695
            %v2574 = vpow.pop %v2573
            %v2575 = vmul.f32 %v2571, 1.442695
            %v2576 = vpow.pop %v2575
            %v2577 = vmul.f32 %v2572, 1.442695
            %v2578 = vpow.pop %v2577
            %v2579 = vadd.f32 %v2574, 1.0
            %v2580 = vadd.f32 %v2576, 1.0
            %v2581 = vadd.f32 %v2578, 1.0
            %v2582 = vrcp.pop %v2579
            %v2583 = vmul.f32 1.0, %v2582
            %v2584 = vrcp.pop %v2580
            %v2585 = vmul.f32 1.0, %v2584
            %v2586 = vrcp.pop %v2581
            %v2587 = vmul.f32 1.0, %v2586
            %v2588 = vtanh.pop %v2569
            %v2589 = vmul.f32 %v2585, %v2473
            %v2590 = vmul.f32 %v2583, %v2588
            %v2591 = vadd.f32 %v2589, %v2590
            %v2592 = vtanh.pop %v2591
            %v2593 = vmul.f32 %v2587, %v2592
            %s2594 = sadd.s32 %s435, 4
            %v2595 = vstv %s2594
            %vm2596 = vcmp.lt.s32.totalorder %v2595, %v771
            %v2597 = vsel %vm2596, %v2593, %v2472
            %v2598 = vsel %vm2596, %v2591, %v2473
            %v2599 = vsel %vm2596, %v2593, 0.0
            %v2600 = vpack.c.bf16 %v2599, %v2599
            %s2601 = scalar_lea.vmem %s417, 16
            %2602 = vst [vmem:[%s2601] sm:$0xf] %v2600
            %s2603 = scalar_lea.vmem [#allocation2], 96
            %v2604 = vld [vmem:[%s2603] sm:$0xff]
            %v2605 = vld [vmem:[%s2603 + $0x8] sm:$0xff]
            %v2606 = vld [vmem:[%s2603 + $0x10] sm:$0xff]
            %v2607 = vld [vmem:[%s2603 + $0x18] sm:$0xff]
            %v2608 = vpack.c.bf16 %v2597, %v2597
            %2609 = vmatprep.subr.bf16.mxu0 %v2046
            %2610 = vmatpush1.bf16.msra.mxu0 %v2045
            %2611 = vmatprep.subr.bf16.mxu0 %v2050
            %2612 = vmatpush1.bf16.msra.mxu0 %v2049
            %2613 = vmatprep.subr.bf16.mxu0 %v2054
            %2614 = vmatpush1.bf16.msra.mxu0 %v2053
            %2615 = vmatprep.subr.bf16.mxu0 %v2058
            %2616 = vmatpush1.bf16.msra.mxu0 %v2057
            %2617 = vmatprep.subr.bf16.mxu0 %v2062
            %2618 = vmatpush1.bf16.msra.mxu0 %v2061
            %2619 = vmatprep.subr.bf16.mxu0 %v2066
            %2620 = vmatpush1.bf16.msra.mxu0 %v2065
            %2621 = vmatprep.subr.bf16.mxu0 %v2070
            %2622 = vmatpush1.bf16.msra.mxu0 %v2069
            %2623 = vmatprep.subr.bf16.mxu0 %v2074
            %2624 = vmatpush1.bf16.msra.mxu0 %v2073
            %2625 = vmatprep.subr.bf16.mxu0 0
            %2626 = vmatpush1.bf16.msra.mxu0 0
            %2627 = vmatprep.subr.bf16.mxu0 0
            %2628 = vmatpush1.bf16.msra.mxu0 0
            %2629 = vmatprep.subr.bf16.mxu0 0
            %2630 = vmatpush1.bf16.msra.mxu0 0
            %2631 = vmatprep.subr.bf16.mxu0 0
            %2632 = vmatpush1.bf16.msra.mxu0 0
            %2633 = vmatprep.subr.bf16.mxu0 0
            %2634 = vmatpush1.bf16.msra.mxu0 0
            %2635 = vmatprep.subr.bf16.mxu0 0
            %2636 = vmatpush1.bf16.msra.mxu0 0
            %2637 = vmatprep.subr.bf16.mxu0 0
            %2638 = vmatpush1.bf16.msra.mxu0 0
            %2639 = vmatprep.subr.bf16.mxu0 0
            %2640 = vmatpush1.bf16.msra.mxu0 0
            %2641 = vmatprep.mubr.bf16.mxu0 0
            %2642 = vmatmul.mubr.bf16.gmra.mrb[0].mxu0 %v2608
            %v2643 = vpop.f32.mrb[0].mxu0
            %v2644 = vadd.f32 0.0, %v2643
            %v2645 = vpop.f32.mrb[0].mxu0
            %v2646 = vadd.f32 0.0, %v2645
            %v2647 = vpop.f32.mrb[0].mxu0
            %v2648 = vpop.f32.mrb[0].mxu0
            %2649 = vdwg.mxu0
            %2650 = vmatprep.subr.bf16.mxu0 %v2048
            %2651 = vmatpush1.bf16.msra.mxu0 %v2047
            %2652 = vmatprep.subr.bf16.mxu0 %v2052
            %2653 = vmatpush1.bf16.msra.mxu0 %v2051
            %2654 = vmatprep.subr.bf16.mxu0 %v2056
            %2655 = vmatpush1.bf16.msra.mxu0 %v2055
            %2656 = vmatprep.subr.bf16.mxu0 %v2060
            %2657 = vmatpush1.bf16.msra.mxu0 %v2059
            %2658 = vmatprep.subr.bf16.mxu0 %v2064
            %2659 = vmatpush1.bf16.msra.mxu0 %v2063
            %2660 = vmatprep.subr.bf16.mxu0 %v2068
            %2661 = vmatpush1.bf16.msra.mxu0 %v2067
            %2662 = vmatprep.subr.bf16.mxu0 %v2072
            %2663 = vmatpush1.bf16.msra.mxu0 %v2071
            %2664 = vmatprep.subr.bf16.mxu0 %v2076
            %2665 = vmatpush1.bf16.msra.mxu0 %v2075
            %2666 = vmatprep.subr.bf16.mxu0 0
            %2667 = vmatpush1.bf16.msra.mxu0 0
            %2668 = vmatprep.subr.bf16.mxu0 0
            %2669 = vmatpush1.bf16.msra.mxu0 0
            %2670 = vmatprep.subr.bf16.mxu0 0
            %2671 = vmatpush1.bf16.msra.mxu0 0
            %2672 = vmatprep.subr.bf16.mxu0 0
            %2673 = vmatpush1.bf16.msra.mxu0 0
            %2674 = vmatprep.subr.bf16.mxu0 0
            %2675 = vmatpush1.bf16.msra.mxu0 0
            %2676 = vmatprep.subr.bf16.mxu0 0
            %2677 = vmatpush1.bf16.msra.mxu0 0
            %2678 = vmatprep.subr.bf16.mxu0 0
            %2679 = vmatpush1.bf16.msra.mxu0 0
            %2680 = vmatprep.subr.bf16.mxu0 0
            %2681 = vmatpush1.bf16.msra.mxu0 0
            %2682 = vmatprep.mubr.bf16.mxu0 0
            %2683 = vmatmul.mubr.bf16.gmra.mrb[0].mxu0 %v2608
            %v2684 = vpop.f32.mrb[0].mxu0
            %v2685 = vadd.f32 0.0, %v2684
            %v2686 = vpop.f32.mrb[0].mxu0
            %v2687 = vadd.f32 0.0, %v2686
            %v2688 = vpop.f32.mrb[0].mxu0
            %v2689 = vpop.f32.mrb[0].mxu0
            %2690 = vdwg.mxu0
            %v2691 = vadd.f32 %v2604, %v2644
            %v2692 = vadd.f32 %v2605, %v2646
            %v2693 = vadd.f32 %v2606, %v2685
            %v2694 = vadd.f32 %v2607, %v2687
            %v2695 = vxor.u32 %v2691, 2147483648
            %v2696 = vxor.u32 %v2692, 2147483648
            %v2697 = vxor.u32 %v2693, 2147483648
            %v2698 = vmul.f32 %v2695, 1.442695
            %v2699 = vpow.pop %v2698
            %v2700 = vmul.f32 %v2696, 1.442695
            %v2701 = vpow.pop %v2700
            %v2702 = vmul.f32 %v2697, 1.442695
            %v2703 = vpow.pop %v2702
            %v2704 = vadd.f32 %v2699, 1.0
            %v2705 = vadd.f32 %v2701, 1.0
            %v2706 = vadd.f32 %v2703, 1.0
            %v2707 = vrcp.pop %v2704
            %v2708 = vmul.f32 1.0, %v2707
            %v2709 = vrcp.pop %v2705
            %v2710 = vmul.f32 1.0, %v2709
            %v2711 = vrcp.pop %v2706
            %v2712 = vmul.f32 1.0, %v2711
            %v2713 = vtanh.pop %v2694
            %v2714 = vmul.f32 %v2710, %v2598
            %v2715 = vmul.f32 %v2708, %v2713
            %v2716 = vadd.f32 %v2714, %v2715
            %v2717 = vtanh.pop %v2716
            %v2718 = vmul.f32 %v2712, %v2717
            %s2719 = sadd.s32 %s435, 3
            %v2720 = vstv %s2719
            %vm2721 = vcmp.lt.s32.totalorder %v2720, %v771
            %v2722 = vsel %vm2721, %v2718, %v2597
            %v2723 = vsel %vm2721, %v2716, %v2598
            %v2724 = vsel %vm2721, %v2718, 0.0
            %v2725 = vpack.c.bf16 %v2724, %v2724
            %s2726 = scalar_lea.vmem %s417, 12
            %2727 = vst [vmem:[%s2726] sm:$0xf] %v2725
            %s2728 = scalar_lea.vmem [#allocation2], 64
            %v2729 = vld [vmem:[%s2728] sm:$0xff]
            %v2730 = vld [vmem:[%s2728 + $0x8] sm:$0xff]
            %v2731 = vld [vmem:[%s2728 + $0x10] sm:$0xff]
            %v2732 = vld [vmem:[%s2728 + $0x18] sm:$0xff]
            %v2733 = vpack.c.bf16 %v2722, %v2722
            %2734 = vmatprep.subr.bf16.mxu0 %v2046
            %2735 = vmatpush1.bf16.msra.mxu0 %v2045
            %2736 = vmatprep.subr.bf16.mxu0 %v2050
            %2737 = vmatpush1.bf16.msra.mxu0 %v2049
            %2738 = vmatprep.subr.bf16.mxu0 %v2054
            %2739 = vmatpush1.bf16.msra.mxu0 %v2053
            %2740 = vmatprep.subr.bf16.mxu0 %v2058
            %2741 = vmatpush1.bf16.msra.mxu0 %v2057
            %2742 = vmatprep.subr.bf16.mxu0 %v2062
            %2743 = vmatpush1.bf16.msra.mxu0 %v2061
            %2744 = vmatprep.subr.bf16.mxu0 %v2066
            %2745 = vmatpush1.bf16.msra.mxu0 %v2065
            %2746 = vmatprep.subr.bf16.mxu0 %v2070
            %2747 = vmatpush1.bf16.msra.mxu0 %v2069
            %2748 = vmatprep.subr.bf16.mxu0 %v2074
            %2749 = vmatpush1.bf16.msra.mxu0 %v2073
            %2750 = vmatprep.subr.bf16.mxu0 0
            %2751 = vmatpush1.bf16.msra.mxu0 0
            %2752 = vmatprep.subr.bf16.mxu0 0
            %2753 = vmatpush1.bf16.msra.mxu0 0
            %2754 = vmatprep.subr.bf16.mxu0 0
            %2755 = vmatpush1.bf16.msra.mxu0 0
            %2756 = vmatprep.subr.bf16.mxu0 0
            %2757 = vmatpush1.bf16.msra.mxu0 0
            %2758 = vmatprep.subr.bf16.mxu0 0
            %2759 = vmatpush1.bf16.msra.mxu0 0
            %2760 = vmatprep.subr.bf16.mxu0 0
            %2761 = vmatpush1.bf16.msra.mxu0 0
            %2762 = vmatprep.subr.bf16.mxu0 0
            %2763 = vmatpush1.bf16.msra.mxu0 0
            %2764 = vmatprep.subr.bf16.mxu0 0
            %2765 = vmatpush1.bf16.msra.mxu0 0
            %2766 = vmatprep.mubr.bf16.mxu0 0
            %2767 = vmatmul.mubr.bf16.gmra.mrb[0].mxu0 %v2733
            %v2768 = vpop.f32.mrb[0].mxu0
            %v2769 = vadd.f32 0.0, %v2768
            %v2770 = vpop.f32.mrb[0].mxu0
            %v2771 = vadd.f32 0.0, %v2770
            %v2772 = vpop.f32.mrb[0].mxu0
            %v2773 = vpop.f32.mrb[0].mxu0
            %2774 = vdwg.mxu0
            %2775 = vmatprep.subr.bf16.mxu0 %v2048
            %2776 = vmatpush1.bf16.msra.mxu0 %v2047
            %2777 = vmatprep.subr.bf16.mxu0 %v2052
            %2778 = vmatpush1.bf16.msra.mxu0 %v2051
            %2779 = vmatprep.subr.bf16.mxu0 %v2056
            %2780 = vmatpush1.bf16.msra.mxu0 %v2055
            %2781 = vmatprep.subr.bf16.mxu0 %v2060
            %2782 = vmatpush1.bf16.msra.mxu0 %v2059
            %2783 = vmatprep.subr.bf16.mxu0 %v2064
            %2784 = vmatpush1.bf16.msra.mxu0 %v2063
            %2785 = vmatprep.subr.bf16.mxu0 %v2068
            %2786 = vmatpush1.bf16.msra.mxu0 %v2067
            %2787 = vmatprep.subr.bf16.mxu0 %v2072
            %2788 = vmatpush1.bf16.msra.mxu0 %v2071
            %2789 = vmatprep.subr.bf16.mxu0 %v2076
            %2790 = vmatpush1.bf16.msra.mxu0 %v2075
            %2791 = vmatprep.subr.bf16.mxu0 0
            %2792 = vmatpush1.bf16.msra.mxu0 0
            %2793 = vmatprep.subr.bf16.mxu0 0
            %2794 = vmatpush1.bf16.msra.mxu0 0
            %2795 = vmatprep.subr.bf16.mxu0 0
            %2796 = vmatpush1.bf16.msra.mxu0 0
            %2797 = vmatprep.subr.bf16.mxu0 0
            %2798 = vmatpush1.bf16.msra.mxu0 0
            %2799 = vmatprep.subr.bf16.mxu0 0
            %2800 = vmatpush1.bf16.msra.mxu0 0
            %2801 = vmatprep.subr.bf16.mxu0 0
            %2802 = vmatpush1.bf16.msra.mxu0 0
            %2803 = vmatprep.subr.bf16.mxu0 0
            %2804 = vmatpush1.bf16.msra.mxu0 0
            %2805 = vmatprep.subr.bf16.mxu0 0
            %2806 = vmatpush1.bf16.msra.mxu0 0
            %2807 = vmatprep.mubr.bf16.mxu0 0
            %2808 = vmatmul.mubr.bf16.gmra.mrb[0].mxu0 %v2733
            %v2809 = vpop.f32.mrb[0].mxu0
            %v2810 = vadd.f32 0.0, %v2809
            %v2811 = vpop.f32.mrb[0].mxu0
            %v2812 = vadd.f32 0.0, %v2811
            %v2813 = vpop.f32.mrb[0].mxu0
            %v2814 = vpop.f32.mrb[0].mxu0
            %2815 = vdwg.mxu0
            %v2816 = vadd.f32 %v2729, %v2769
            %v2817 = vadd.f32 %v2730, %v2771
            %v2818 = vadd.f32 %v2731, %v2810
            %v2819 = vadd.f32 %v2732, %v2812
            %v2820 = vxor.u32 %v2816, 2147483648
            %v2821 = vxor.u32 %v2817, 2147483648
            %v2822 = vxor.u32 %v2818, 2147483648
            %v2823 = vmul.f32 %v2820, 1.442695
            %v2824 = vpow.pop %v2823
            %v2825 = vmul.f32 %v2821, 1.442695
            %v2826 = vpow.pop %v2825
            %v2827 = vmul.f32 %v2822, 1.442695
            %v2828 = vpow.pop %v2827
            %v2829 = vadd.f32 %v2824, 1.0
            %v2830 = vadd.f32 %v2826, 1.0
            %v2831 = vadd.f32 %v2828, 1.0
            %v2832 = vrcp.pop %v2829
            %v2833 = vmul.f32 1.0, %v2832
            %v2834 = vrcp.pop %v2830
            %v2835 = vmul.f32 1.0, %v2834
            %v2836 = vrcp.pop %v2831
            %v2837 = vmul.f32 1.0, %v2836
            %v2838 = vtanh.pop %v2819
            %v2839 = vmul.f32 %v2835, %v2723
            %v2840 = vmul.f32 %v2833, %v2838
            %v2841 = vadd.f32 %v2839, %v2840
            %v2842 = vtanh.pop %v2841
            %v2843 = vmul.f32 %v2837, %v2842
            %s2844 = sadd.s32 %s435, 2
            %v2845 = vstv %s2844
            %vm2846 = vcmp.lt.s32.totalorder %v2845, %v771
            %v2847 = vsel %vm2846, %v2843, %v2722
            %v2848 = vsel %vm2846, %v2841, %v2723
            %v2849 = vsel %vm2846, %v2843, 0.0
            %v2850 = vpack.c.bf16 %v2849, %v2849
            %s2851 = scalar_lea.vmem %s417, 8
            %2852 = vst [vmem:[%s2851] sm:$0xf] %v2850
            %s2853 = scalar_lea.vmem [#allocation2], 32
            %v2854 = vld [vmem:[%s2853] sm:$0xff]
            %v2855 = vld [vmem:[%s2853 + $0x8] sm:$0xff]
            %v2856 = vld [vmem:[%s2853 + $0x10] sm:$0xff]
            %v2857 = vld [vmem:[%s2853 + $0x18] sm:$0xff]
            %v2858 = vpack.c.bf16 %v2847, %v2847
            %2859 = vmatprep.subr.bf16.mxu0 %v2046
            %2860 = vmatpush1.bf16.msra.mxu0 %v2045
            %2861 = vmatprep.subr.bf16.mxu0 %v2050
            %2862 = vmatpush1.bf16.msra.mxu0 %v2049
            %2863 = vmatprep.subr.bf16.mxu0 %v2054
            %2864 = vmatpush1.bf16.msra.mxu0 %v2053
            %2865 = vmatprep.subr.bf16.mxu0 %v2058
            %2866 = vmatpush1.bf16.msra.mxu0 %v2057
            %2867 = vmatprep.subr.bf16.mxu0 %v2062
            %2868 = vmatpush1.bf16.msra.mxu0 %v2061
            %2869 = vmatprep.subr.bf16.mxu0 %v2066
            %2870 = vmatpush1.bf16.msra.mxu0 %v2065
            %2871 = vmatprep.subr.bf16.mxu0 %v2070
            %2872 = vmatpush1.bf16.msra.mxu0 %v2069
            %2873 = vmatprep.subr.bf16.mxu0 %v2074
            %2874 = vmatpush1.bf16.msra.mxu0 %v2073
            %2875 = vmatprep.subr.bf16.mxu0 0
            %2876 = vmatpush1.bf16.msra.mxu0 0
            %2877 = vmatprep.subr.bf16.mxu0 0
            %2878 = vmatpush1.bf16.msra.mxu0 0
            %2879 = vmatprep.subr.bf16.mxu0 0
            %2880 = vmatpush1.bf16.msra.mxu0 0
            %2881 = vmatprep.subr.bf16.mxu0 0
            %2882 = vmatpush1.bf16.msra.mxu0 0
            %2883 = vmatprep.subr.bf16.mxu0 0
            %2884 = vmatpush1.bf16.msra.mxu0 0
            %2885 = vmatprep.subr.bf16.mxu0 0
            %2886 = vmatpush1.bf16.msra.mxu0 0
            %2887 = vmatprep.subr.bf16.mxu0 0
            %2888 = vmatpush1.bf16.msra.mxu0 0
            %2889 = vmatprep.subr.bf16.mxu0 0
            %2890 = vmatpush1.bf16.msra.mxu0 0
            %2891 = vmatprep.mubr.bf16.mxu0 0
            %2892 = vmatmul.mubr.bf16.gmra.mrb[0].mxu0 %v2858
            %v2893 = vpop.f32.mrb[0].mxu0
            %v2894 = vadd.f32 0.0, %v2893
            %v2895 = vpop.f32.mrb[0].mxu0
            %v2896 = vadd.f32 0.0, %v2895
            %v2897 = vpop.f32.mrb[0].mxu0
            %v2898 = vpop.f32.mrb[0].mxu0
            %2899 = vdwg.mxu0
            %2900 = vmatprep.subr.bf16.mxu0 %v2048
            %2901 = vmatpush1.bf16.msra.mxu0 %v2047
            %2902 = vmatprep.subr.bf16.mxu0 %v2052
            %2903 = vmatpush1.bf16.msra.mxu0 %v2051
            %2904 = vmatprep.subr.bf16.mxu0 %v2056
            %2905 = vmatpush1.bf16.msra.mxu0 %v2055
            %2906 = vmatprep.subr.bf16.mxu0 %v2060
            %2907 = vmatpush1.bf16.msra.mxu0 %v2059
            %2908 = vmatprep.subr.bf16.mxu0 %v2064
            %2909 = vmatpush1.bf16.msra.mxu0 %v2063
            %2910 = vmatprep.subr.bf16.mxu0 %v2068
            %2911 = vmatpush1.bf16.msra.mxu0 %v2067
            %2912 = vmatprep.subr.bf16.mxu0 %v2072
            %2913 = vmatpush1.bf16.msra.mxu0 %v2071
            %2914 = vmatprep.subr.bf16.mxu0 %v2076
            %2915 = vmatpush1.bf16.msra.mxu0 %v2075
            %2916 = vmatprep.subr.bf16.mxu0 0
            %2917 = vmatpush1.bf16.msra.mxu0 0
            %2918 = vmatprep.subr.bf16.mxu0 0
            %2919 = vmatpush1.bf16.msra.mxu0 0
            %2920 = vmatprep.subr.bf16.mxu0 0
            %2921 = vmatpush1.bf16.msra.mxu0 0
            %2922 = vmatprep.subr.bf16.mxu0 0
            %2923 = vmatpush1.bf16.msra.mxu0 0
            %2924 = vmatprep.subr.bf16.mxu0 0
            %2925 = vmatpush1.bf16.msra.mxu0 0
            %2926 = vmatprep.subr.bf16.mxu0 0
            %2927 = vmatpush1.bf16.msra.mxu0 0
            %2928 = vmatprep.subr.bf16.mxu0 0
            %2929 = vmatpush1.bf16.msra.mxu0 0
            %2930 = vmatprep.subr.bf16.mxu0 0
            %2931 = vmatpush1.bf16.msra.mxu0 0
            %2932 = vmatprep.mubr.bf16.mxu0 0
            %2933 = vmatmul.mubr.bf16.gmra.mrb[0].mxu0 %v2858
            %v2934 = vpop.f32.mrb[0].mxu0
            %v2935 = vadd.f32 0.0, %v2934
            %v2936 = vpop.f32.mrb[0].mxu0
            %v2937 = vadd.f32 0.0, %v2936
            %v2938 = vpop.f32.mrb[0].mxu0
            %v2939 = vpop.f32.mrb[0].mxu0
            %2940 = vdwg.mxu0
            %v2941 = vadd.f32 %v2854, %v2894
            %v2942 = vadd.f32 %v2855, %v2896
            %v2943 = vadd.f32 %v2856, %v2935
            %v2944 = vadd.f32 %v2857, %v2937
            %v2945 = vxor.u32 %v2941, 2147483648
            %v2946 = vxor.u32 %v2942, 2147483648
            %v2947 = vxor.u32 %v2943, 2147483648
            %v2948 = vmul.f32 %v2945, 1.442695
            %v2949 = vpow.pop %v2948
            %v2950 = vmul.f32 %v2946, 1.442695
            %v2951 = vpow.pop %v2950
            %v2952 = vmul.f32 %v2947, 1.442695
            %v2953 = vpow.pop %v2952
            %v2954 = vadd.f32 %v2949, 1.0
            %v2955 = vadd.f32 %v2951, 1.0
            %v2956 = vadd.f32 %v2953, 1.0
            %v2957 = vrcp.pop %v2954
            %v2958 = vmul.f32 1.0, %v2957
            %v2959 = vrcp.pop %v2955
            %v2960 = vmul.f32 1.0, %v2959
            %v2961 = vrcp.pop %v2956
            %v2962 = vmul.f32 1.0, %v2961
            %v2963 = vtanh.pop %v2944
            %v2964 = vmul.f32 %v2960, %v2848
            %v2965 = vmul.f32 %v2958, %v2963
            %v2966 = vadd.f32 %v2964, %v2965
            %v2967 = vtanh.pop %v2966
            %v2968 = vmul.f32 %v2962, %v2967
            %s2969 = sadd.s32 %s435, 1
            %v2970 = vstv %s2969
            %vm2971 = vcmp.lt.s32.totalorder %v2970, %v771
            %v2972 = vsel %vm2971, %v2968, %v2847
            %v2973 = vsel %vm2971, %v2966, %v2848
            %v2974 = vsel %vm2971, %v2968, 0.0
            %v2975 = vpack.c.bf16 %v2974, %v2974
            %s2976 = scalar_lea.vmem %s417, 4
            %2977 = vst [vmem:[%s2976] sm:$0xf] %v2975
            %v2978 = vld [vmem:[#allocation2] sm:$0xff]
            %v2979 = vld [vmem:[#allocation2 + $0x8] sm:$0xff]
            %v2980 = vld [vmem:[#allocation2 + $0x10] sm:$0xff]
            %v2981 = vld [vmem:[#allocation2 + $0x18] sm:$0xff]
            %v2982 = vpack.c.bf16 %v2972, %v2972
            %2983 = vmatprep.subr.bf16.mxu0 %v2046
            %2984 = vmatpush1.bf16.msra.mxu0 %v2045
            %2985 = vmatprep.subr.bf16.mxu0 %v2050
            %2986 = vmatpush1.bf16.msra.mxu0 %v2049
            %2987 = vmatprep.subr.bf16.mxu0 %v2054
            %2988 = vmatpush1.bf16.msra.mxu0 %v2053
            %2989 = vmatprep.subr.bf16.mxu0 %v2058
            %2990 = vmatpush1.bf16.msra.mxu0 %v2057
            %2991 = vmatprep.subr.bf16.mxu0 %v2062
            %2992 = vmatpush1.bf16.msra.mxu0 %v2061
            %2993 = vmatprep.subr.bf16.mxu0 %v2066
            %2994 = vmatpush1.bf16.msra.mxu0 %v2065
            %2995 = vmatprep.subr.bf16.mxu0 %v2070
            %2996 = vmatpush1.bf16.msra.mxu0 %v2069
            %2997 = vmatprep.subr.bf16.mxu0 %v2074
            %2998 = vmatpush1.bf16.msra.mxu0 %v2073
            %2999 = vmatprep.subr.bf16.mxu0 0
            %3000 = vmatpush1.bf16.msra.mxu0 0
            %3001 = vmatprep.subr.bf16.mxu0 0
            %3002 = vmatpush1.bf16.msra.mxu0 0
            %3003 = vmatprep.subr.bf16.mxu0 0
            %3004 = vmatpush1.bf16.msra.mxu0 0
            %3005 = vmatprep.subr.bf16.mxu0 0
            %3006 = vmatpush1.bf16.msra.mxu0 0
            %3007 = vmatprep.subr.bf16.mxu0 0
            %3008 = vmatpush1.bf16.msra.mxu0 0
            %3009 = vmatprep.subr.bf16.mxu0 0
            %3010 = vmatpush1.bf16.msra.mxu0 0
            %3011 = vmatprep.subr.bf16.mxu0 0
            %3012 = vmatpush1.bf16.msra.mxu0 0
            %3013 = vmatprep.subr.bf16.mxu0 0
            %3014 = vmatpush1.bf16.msra.mxu0 0
            %3015 = vmatprep.mubr.bf16.mxu0 0
            %3016 = vmatmul.mubr.bf16.gmra.mrb[0].mxu0 %v2982
            %v3017 = vpop.f32.mrb[0].mxu0
            %v3018 = vadd.f32 0.0, %v3017
            %v3019 = vpop.f32.mrb[0].mxu0
            %v3020 = vadd.f32 0.0, %v3019
            %v3021 = vpop.f32.mrb[0].mxu0
            %v3022 = vpop.f32.mrb[0].mxu0
            %3023 = vdwg.mxu0
            %3024 = vmatprep.subr.bf16.mxu0 %v2048
            %3025 = vmatpush1.bf16.msra.mxu0 %v2047
            %3026 = vmatprep.subr.bf16.mxu0 %v2052
            %3027 = vmatpush1.bf16.msra.mxu0 %v2051
            %3028 = vmatprep.subr.bf16.mxu0 %v2056
            %3029 = vmatpush1.bf16.msra.mxu0 %v2055
            %3030 = vmatprep.subr.bf16.mxu0 %v2060
            %3031 = vmatpush1.bf16.msra.mxu0 %v2059
            %3032 = vmatprep.subr.bf16.mxu0 %v2064
            %3033 = vmatpush1.bf16.msra.mxu0 %v2063
            %3034 = vmatprep.subr.bf16.mxu0 %v2068
            %3035 = vmatpush1.bf16.msra.mxu0 %v2067
            %3036 = vmatprep.subr.bf16.mxu0 %v2072
            %3037 = vmatpush1.bf16.msra.mxu0 %v2071
            %3038 = vmatprep.subr.bf16.mxu0 %v2076
            %3039 = vmatpush1.bf16.msra.mxu0 %v2075
            %3040 = vmatprep.subr.bf16.mxu0 0
            %3041 = vmatpush1.bf16.msra.mxu0 0
            %3042 = vmatprep.subr.bf16.mxu0 0
            %3043 = vmatpush1.bf16.msra.mxu0 0
            %3044 = vmatprep.subr.bf16.mxu0 0
            %3045 = vmatpush1.bf16.msra.mxu0 0
            %3046 = vmatprep.subr.bf16.mxu0 0
            %3047 = vmatpush1.bf16.msra.mxu0 0
            %3048 = vmatprep.subr.bf16.mxu0 0
            %3049 = vmatpush1.bf16.msra.mxu0 0
            %3050 = vmatprep.subr.bf16.mxu0 0
            %3051 = vmatpush1.bf16.msra.mxu0 0
            %3052 = vmatprep.subr.bf16.mxu0 0
            %3053 = vmatpush1.bf16.msra.mxu0 0
            %3054 = vmatprep.subr.bf16.mxu0 0
            %3055 = vmatpush1.bf16.msra.mxu0 0
            %3056 = vmatprep.mubr.bf16.mxu0 0
            %3057 = vmatmul.mubr.bf16.gmra.mrb[0].mxu0 %v2982
            %v3058 = vpop.f32.mrb[0].mxu0
            %v3059 = vadd.f32 0.0, %v3058
            %v3060 = vpop.f32.mrb[0].mxu0
            %v3061 = vadd.f32 0.0, %v3060
            %v3062 = vpop.f32.mrb[0].mxu0
            %v3063 = vpop.f32.mrb[0].mxu0
            %3064 = vdwg.mxu0
            %v3065 = vadd.f32 %v2978, %v3018
            %v3066 = vadd.f32 %v2979, %v3020
            %v3067 = vadd.f32 %v2980, %v3059
            %v3068 = vadd.f32 %v2981, %v3061
            %v3069 = vxor.u32 %v3065, 2147483648
            %v3070 = vxor.u32 %v3066, 2147483648
            %v3071 = vxor.u32 %v3067, 2147483648
            %v3072 = vmul.f32 %v3069, 1.442695
            %v3073 = vpow.pop %v3072
            %v3074 = vmul.f32 %v3070, 1.442695
            %v3075 = vpow.pop %v3074
            %v3076 = vmul.f32 %v3071, 1.442695
            %v3077 = vpow.pop %v3076
            %v3078 = vadd.f32 %v3073, 1.0
            %v3079 = vadd.f32 %v3075, 1.0
            %v3080 = vadd.f32 %v3077, 1.0
            %v3081 = vrcp.pop %v3078
            %v3082 = vmul.f32 1.0, %v3081
            %v3083 = vrcp.pop %v3079
            %v3084 = vmul.f32 1.0, %v3083
            %v3085 = vrcp.pop %v3080
            %v3086 = vmul.f32 1.0, %v3085
            %v3087 = vtanh.pop %v3068
            %v3088 = vmul.f32 %v3084, %v2973
            %v3089 = vmul.f32 %v3082, %v3087
            %v3090 = vadd.f32 %v3088, %v3089
            %v3091 = vtanh.pop %v3090
            %v3092 = vmul.f32 %v3086, %v3091
            %v3093 = vstv %s435
            %vm3094 = vcmp.lt.s32.totalorder %v3093, %v771
            %v3095 = vsel %vm3094, %v3092, %v2972
            %v3096 = vsel %vm3094, %v3090, %v2973
            %v3097 = vsel %vm3094, %v3092, 0.0
            %v3098 = vpack.c.bf16 %v3097, %v3097
            %3099 = vst [vmem:[%s417] sm:$0xf] %v3098
            %3100 = vst [vmem:[#allocation3] sm:$0xff] %v3095
            %3101 = vst [vmem:[#allocation4] sm:$0xff] %v3096
          $region60: #{_sent_encoder_forward.1} parent=51 // pred_fallthru
            _
        $region52: #{_sent_encoder_forward.1} parent=39 // pred_fallthru
          _
        %p3102 = scmp.ge.s32.totalorder %s435, %s436
        // Predicated region
        $region61: #{_sent_encoder_forward.1} parent=39 // pred_check
          %p3103 = pneg %p3102
        $region62: #{_sent_encoder_forward.1} parent=39 // pred_check_branch
          %3105 = sbr.rel (%p3103) target = $region64
        $region63: #{_sent_encoder_forward.1} parent=39 // pred_region
          %3106 = vst [vmem:[%s417] sm:$0xf] 0
          %3107 = vst [vmem:[%s417 + $0x4] sm:$0xf] 0
          %3108 = vst [vmem:[%s417 + $0x8] sm:$0xf] 0
          %3109 = vst [vmem:[%s417 + $0xc] sm:$0xf] 0
          %3110 = vst [vmem:[%s417 + $0x10] sm:$0xf] 0
          %3111 = vst [vmem:[%s417 + $0x14] sm:$0xf] 0
          %3112 = vst [vmem:[%s417 + $0x18] sm:$0xf] 0
          %3113 = vst [vmem:[%s417 + $0x1c] sm:$0xf] 0
        $region64: #{_sent_encoder_forward.1} parent=39 // pred_fallthru
          _
        %v3114 = vld [vmem:[#allocation3] sm:$0xff]
        %3115 = vst [vmem:[%s428] sm:$0xff] %v3114
        %v3116 = vld [vmem:[#allocation4] sm:$0xff]
        %s3117 = scalar_lea.vmem %s428, 8
        %3118 = vst [vmem:[%s3117] sm:$0xff] %v3116
        %s3119 = ssub.s32 1, %s27
        %s3120 = smul.u32 %s3119, %s28
        %s3121 = ssub.s32 0, %s28
        %s3122 = smul.u32 %s27, %s3121
        %s3123 = sadd.s32 %s3120, %s3122
        %s3124 = smul.u32 8, %s3123
        %p3125 = scmp.lt.s32.totalorder %s27, 1
        %s3126 = scalar_select %p3125, %s27, 1
        %p3127 = scmp.lt.s32.totalorder %s3124, 7
        %s3128 = scalar_select %p3127, %s3124, 7
        %s3129 = smul.addr %s3126, 8
        %s3130 = sadd.s32 %s3128, %s3129
        %s3131 = smul.addr %s3130, 4
        %s3132 = scalar_lea.vmem %s6, %s3131
        %p3133 = scmp.lt.s32.totalorder %s27, 1
        %s3134 = scalar_select %p3133, %s27, 1
        %s3135 = smul.addr %s3134, 2
        %s3136 = smul.addr %s3135, 8
        %s3137 = scalar_lea.vmem %s7, %s3136
        // Predicated region
        $region65: #{_sent_encoder_forward.1} parent=39 // pred_check
          %p3138 = pneg %p200
        $region66: #{_sent_encoder_forward.1} parent=39 // pred_check_branch
          %3140 = sbr.rel (%p3138) target = $region68
        $region67: #{_sent_encoder_forward.1} parent=39 // pred_region
          %s3141 = ssub.s32 1, %s27
          %s3142 = smul.u32 %s3141, %s28
          %s3143 = ssub.s32 0, %s28
          %s3144 = smul.u32 %s27, %s3143
          %s3145 = sadd.s32 %s3142, %s3144
          %s3146 = smul.u32 8, %s3145
        $region68: #{_sent_encoder_forward.1} parent=39 // pred_fallthru
          _
        // Predicated region
        $region69: #{_sent_encoder_forward.1} parent=39 // pred_check
          %p3147 = pneg %p226
        $region70: #{_sent_encoder_forward.1} parent=39 // pred_check_branch
          %3149 = sbr.rel (%p3147) target = $region72
        $region71: #{_sent_encoder_forward.1} parent=39 // pred_region
          _
        $region72: #{_sent_encoder_forward.1} parent=39 // pred_fallthru
          _
      $region40: #{_sent_encoder_forward.1} parent=5 // pred_fallthru
        _
      %p3150 = scmp.le.s32.totalorder 2, %s18
      // Predicated region
      $region73: #{_sent_encoder_forward.1} parent=5 // pred_check
        %p3151 = pneg %p3150
      $region74: #{_sent_encoder_forward.1} parent=5 // pred_check_branch
        %3153 = sbr.rel (%p3151) target = $region76
      $region75: #{_sent_encoder_forward.1} parent=5 // pred_region
        %s3154 = ssub.s32 %s18, 2
        // Predicated region
        $region77: #{_sent_encoder_forward.1} parent=75 // pred_check
          %p3155 = pneg %p206
        $region78: #{_sent_encoder_forward.1} parent=75 // pred_check_branch
          %3157 = sbr.rel (%p3155) target = $region80
        $region79: #{_sent_encoder_forward.1} parent=75 // pred_region
          %s3158 = ssub.s32 1, %s29
          %s3159 = smul.u32 %s3158, %s30
          %s3160 = ssub.s32 0, %s30
          %s3161 = smul.u32 %s29, %s3160
          %s3162 = sadd.s32 %s3159, %s3161
          %s3163 = smul.u32 8, %s3162
          %p3164 = scmp.lt.s32.totalorder %s29, 1
          %s3165 = scalar_select %p3164, %s29, 1
          %p3166 = scmp.lt.s32.totalorder %s3163, 7
          %s3167 = scalar_select %p3166, %s3163, 7
          %s3168 = smul.addr %s3165, 8
          %s3169 = sadd.s32 %s3167, %s3168
          %s3170 = smul.addr %s3169, 4
          %s3171 = scalar_lea.vmem %s6, %s3170
        $region80: #{_sent_encoder_forward.1} parent=75 // pred_fallthru
          _
        // Predicated region
        $region81: #{_sent_encoder_forward.1} parent=75 // pred_check
          %p3172 = pneg %p232
        $region82: #{_sent_encoder_forward.1} parent=75 // pred_check_branch
          %3174 = sbr.rel (%p3172) target = $region84
        $region83: #{_sent_encoder_forward.1} parent=75 // pred_region
          %p3175 = scmp.lt.s32.totalorder %s29, 1
          %s3176 = scalar_select %p3175, %s29, 1
          %s3177 = smul.addr %s3176, 2
          %s3178 = smul.addr %s3177, 8
          %s3179 = scalar_lea.vmem %s7, %s3178
        $region84: #{_sent_encoder_forward.1} parent=75 // pred_fallthru
          _
      $region76: #{_sent_encoder_forward.1} parent=5 // pred_fallthru
        _
    $region6: #{_sent_encoder_forward.1} parent=1 // loop_footer
      %s22 = sadd.s32 1, %s18
    $region7: #{_sent_encoder_forward.1} parent=1 // loop_footer_branch
      %17 = sbr.rel target = $region3
    $region8: #{_sent_encoder_forward.1} parent=1 // loop_exit
      _
    %3180 = vsyncpa [#allocation8], 1
    %s3181 = scalar_lea.sflag [#allocation8], 1
    %3182 = vsyncpa %s3181, 1

</llo_original>
